<compile_context>
chip_gen: v7x
topology: tpu7x:2x2x1
jax: 0.10.0
libtpu: 0.0.40
codegen_flags: <defaults>
</compile_context>

<pallas_src>
import functools

import numpy as np
import jax
import jax.numpy as jnp
from jax import lax
from jax.experimental import pallas as pl


# ---------------------------------------------------------------------------
# Parameter preparation (hoisted out of the forward pass)
# ---------------------------------------------------------------------------
def _conv_weight_to_matrix(w_oihw, dtype=jnp.bfloat16):
    """OIHW -> (kh*kw*Cin, Cout), matching the in-kernel patch ordering."""
    cout, cin, kh, kw = w_oihw.shape
    return jnp.transpose(w_oihw, (2, 3, 1, 0)).reshape(kh * kw * cin, cout).astype(dtype)


def _make_parity_selectors(ow):
    """0/1 matrices that split an output row into the lane-folded layout."""
    xn = ow // 2 + 1
    s0 = np.zeros((xn, ow), np.float32)   # picks column 2x-1 (left halo at x=0)
    s1 = np.zeros((xn, ow), np.float32)   # picks column 2x   (right halo at x=ow//2)
    for x in range(xn):
        if x >= 1:
            s0[x, 2 * x - 1] = 1.0
        if x < ow // 2:
            s1[x, 2 * x] = 1.0
    return jnp.asarray(s0, jnp.bfloat16), jnp.asarray(s1, jnp.bfloat16)


def prepare_params(params, image_size):
    """One-time weight relayout so the forward pass does no XLA glue on weights."""
    prep = {
        "main_w": [],
        "main_b": [],
        "sel": [],
        "wc1": _conv_weight_to_matrix(params["conv1_w"]),
        "wc2": _conv_weight_to_matrix(params["conv2_w"]),
    }
    repeat_num = len(params["main"])
    for w, b in params["main"]:
        prep["main_w"].append(_conv_weight_to_matrix(w))
        prep["main_b"].append(b.reshape(1, 1, -1).astype(jnp.float32))
    for l in range(repeat_num - 1):
        ow = image_size // (2 ** (l + 1))
        prep["sel"].append(_make_parity_selectors(ow))
    return prep


# ---------------------------------------------------------------------------
# The single fused Pallas kernel
# ---------------------------------------------------------------------------
def _fused_disc_kernel(*refs, batch, layer_dims):
    """Entire DiscriminatorY forward on VMEM-resident data.

    layer_dims: tuple of (cin, cout, oh, ow) for each stride-2 stage.
    refs: f0, (w, b) * R, (s0, s1) * (R-1), wc1, wc2, out_src, out_cls
    """
    R = len(layer_dims)
    B = batch

    pos = 0
    f_ref = refs[pos]; pos += 1
    main_refs = []
    for _ in range(R):
        main_refs.append((refs[pos], refs[pos + 1])); pos += 2
    sel_refs = []
    for _ in range(R - 1):
        sel_refs.append((refs[pos], refs[pos + 1])); pos += 2
    wc1_ref = refs[pos]; wc2_ref = refs[pos + 1]; pos += 2
    src_ref = refs[pos]; cls_ref = refs[pos + 1]

    # F holds the current activation in the halo-padded, lane-folded layout:
    #   F[b, 1+h, x, pw*C + c] = A[b, h, 2x + pw - 1, c]
    F = f_ref[...]                                        # bf16
    act = None
    for l, (cin, cout, oh, ow) in enumerate(layer_dims):
        w = main_refs[l][0][...]                          # (16*cin, cout) bf16
        b = main_refs[l][1][...]                          # (1, 1, cout)   f32
        hp = F.shape[1]                                   # 2*oh + 2
        # Row parity via a leading-dim reshape (no strided access needed).
        frs = F.reshape(B, hp // 2, 2, F.shape[2], 2 * cin)
        pieces = []
        for i in range(4):            # kernel row offset
            for jj in range(2):       # kernel col offset pair (j = 2*jj + pw)
                blk = frs[:, i // 2:i // 2 + oh, i % 2, jj:jj + ow, :]
                pieces.append(blk.reshape(B * oh, ow, 2 * cin))
        patch = jnp.concatenate(pieces, axis=-1)          # (B*oh, ow, 16*cin) bf16
        g = B * oh
        wb = jnp.broadcast_to(w[None], (g,) + w.shape)
        acc = jnp.einsum("gwk,gkn->gwn", patch, wb,
                         preferred_element_type=jnp.float32)   # MXU, f32 accum
        acc = acc + b
        acc = jnp.where(acc >= 0.0, acc, 0.01 * acc)      # LeakyReLU(0.01) in f32
        act = acc.astype(jnp.bfloat16)                    # (B*oh, ow, cout)

        if l < R - 1:
            # Refold for the next stride-2 stage.  Even/odd column split is done
            # with two 0/1 selection matmuls (exact in bf16) -> MXU, no strided
            # slicing on the vector path.
            s0 = sel_refs[l][0][...]
            s1 = sel_refs[l][1][...]
            xn = ow // 2 + 1
            s0b = jnp.broadcast_to(s0[None], (g, xn, ow))
            s1b = jnp.broadcast_to(s1[None], (g, xn, ow))
            h0 = jnp.einsum("gxw,gwc->gxc", s0b, act,
                            preferred_element_type=jnp.float32)
            h1 = jnp.einsum("gxw,gwc->gxc", s1b, act,
                            preferred_element_type=jnp.float32)
            body = jnp.concatenate([h0, h1], axis=-1).astype(jnp.bfloat16)
            body = body.reshape(B, oh, xn, 2 * cout)
            zrow = jnp.zeros((B, 1, xn, 2 * cout), jnp.bfloat16)
            F = jnp.concatenate([zrow, body, zrow], axis=1)

    # ---- PatchGAN heads, sharing the VMEM-resident h3 ----------------------
    cin3, oh3, ow3 = layer_dims[-1][1], layer_dims[-1][2], layer_dims[-1][3]
    h3 = act.reshape(B, oh3, ow3, cin3)                   # (B, oh3, ow3, c)
    zc = jnp.zeros((B, oh3, 1, cin3), jnp.bfloat16)
    zr = jnp.zeros((B, 1, ow3 + 2, cin3), jnp.bfloat16)
    h3p = jnp.concatenate(
        [zr, jnp.concatenate([zc, h3, zc], axis=2), zr], axis=1)

    # conv1: 3x3, stride 1, pad 1, no bias, no activation.
    pieces = []
    for i in range(3):
        for j in range(3):
            blk = h3p[:, i:i + oh3, j:j + ow3, :]
            pieces.append(blk.reshape(B * oh3, ow3, cin3))
    p1 = jnp.concatenate(pieces, axis=-1)                 # (B*oh3, ow3, 9*cin3)
    wc1 = wc1_ref[...]
    wc1b = jnp.broadcast_to(wc1[None], (B * oh3,) + wc1.shape)
    src_ref[...] = jnp.einsum("gwk,gkn->gwn", p1, wc1b,
                              preferred_element_type=jnp.float32)

    # conv2: (oh3 x ow3) kernel, VALID, no bias -> (B, c_dim).
    pieces = []
    for i in range(oh3):
        for j in range(ow3):
            pieces.append(h3[:, i, j, :])                 # (B, cin3)
    p2 = jnp.concatenate(pieces, axis=-1)                 # (B, oh3*ow3*cin3)
    cls_ref[...] = jnp.dot(p2, wc2_ref[...],
                           preferred_element_type=jnp.float32)


# ---------------------------------------------------------------------------
# Forward wrapper
# ---------------------------------------------------------------------------
def _fold_input(x_nchw):
    """NCHW image -> halo-padded, lane-folded layout expected by the kernel."""
    x = jnp.transpose(x_nchw, (0, 2, 3, 1))                       # NHWC
    xp = jnp.pad(x, ((0, 0), (1, 1), (1, 1), (0, 0)))
    f0 = jnp.concatenate([xp[:, :, 0::2, :], xp[:, :, 1::2, :]], axis=-1)
    return f0.astype(jnp.bfloat16)


@jax.jit
def discriminator_y_forward(x_nchw, prep):
    B, c0, H, W = x_nchw.shape
    layer_dims = []
    h_cur, w_cur, c_cur = H, W, c0
    for wl in prep["main_w"]:
        cout = wl.shape[1]
        layer_dims.append((c_cur, cout, h_cur // 2, w_cur // 2))
        h_cur, w_cur, c_cur = h_cur // 2, w_cur // 2, cout
    oh3, ow3 = h_cur, w_cur
    c_dim = prep["wc2"].shape[1]

    kernel = functools.partial(_fused_disc_kernel, batch=B,
                               layer_dims=tuple(layer_dims))

    inputs = [_fold_input(x_nchw)]
    for wl, bl in zip(prep["main_w"], prep["main_b"]):
        inputs += [wl, bl]
    for s0, s1 in prep["sel"]:
        inputs += [s0, s1]
    inputs += [prep["wc1"], prep["wc2"]]

    out_shapes = (
        jax.ShapeDtypeStruct((B * oh3, ow3, 1), jnp.float32),     # conv1, rows=(b,oh)
        jax.ShapeDtypeStruct((B, c_dim), jnp.float32),            # conv2
    )
    # Single launch; total VMEM footprint (activations + weights) < ~2 MiB for
    # this config, so a single un-gridded block is the right shape.  For
    # production StarGAN sizes this would become an M-tiled, double-buffered
    # grid with the M axis marked "parallel".
    src3, out_cls = pl.pallas_call(kernel, out_shape=out_shapes)(*inputs)

    out_src = src3.reshape(B, oh3, ow3)[:, None, :, :]            # NCHW (B,1,oh,ow)
    return out_src, out_cls


# ---------------------------------------------------------------------------
# Pure-JAX f32 reference (correctness check only)
# ---------------------------------------------------------------------------
def ref_forward(x, params):
    dn = ("NCHW", "OIHW", "NCHW")
    h = x
    for w, b in params["main"]:
        h = lax.conv_general_dilated(h, w, (2, 2), [(1, 1), (1, 1)],
                                     dimension_numbers=dn)
        h = h + b.reshape(1, -1, 1, 1)
        h = jnp.where(h >= 0, h, 0.01 * h)
    out_src = lax.conv_general_dilated(h, params["conv1_w"], (1, 1),
                                       [(1, 1), (1, 1)], dimension_numbers=dn)
    out_cls = lax.conv_general_dilated(h, params["conv2_w"], (1, 1), "VALID",
                                       dimension_numbers=dn)
    return out_src, out_cls.reshape(out_cls.shape[0], out_cls.shape[1])


# ---------------------------------------------------------------------------
# Deterministic synthetic parameters (no checkpoint)
# ---------------------------------------------------------------------------
def make_params(key, image_size=16, conv_dim=8, c_dim=5, repeat_num=3):
    keys = jax.random.split(key, 2 * repeat_num + 2)
    params = {"main": []}
    in_ch, out_ch = 3, conv_dim
    for i in range(repeat_num):
        w = 0.05 * jax.random.normal(keys[2 * i], (out_ch, in_ch, 4, 4), jnp.float32)
        b = 0.05 * jax.random.normal(keys[2 * i + 1], (out_ch,), jnp.float32)
        params["main"].append((w, b))
        in_ch, out_ch = out_ch, out_ch * 2
    curr_dim = in_ch
    ksize = image_size // (2 ** repeat_num)
    params["conv1_w"] = 0.05 * jax.random.normal(keys[-2], (1, curr_dim, 3, 3), jnp.float32)
    params["conv2_w"] = 0.05 * jax.random.normal(keys[-1], (c_dim, curr_dim, ksize, ksize),
                                                 jnp.float32)
    return params


if __name__ == "__main__":
    image_size, conv_dim, c_dim, repeat_num, batch = 16, 8, 5, 3, 2

    key = jax.random.PRNGKey(0)
    k_params, k_x = jax.random.split(key)
    params = make_params(k_params, image_size, conv_dim, c_dim, repeat_num)
    prep = prepare_params(params, image_size)
    x = jax.random.normal(k_x, (batch, 3, image_size, image_size), jnp.float32)

    out_src, out_cls = discriminator_y_forward(x, prep)
    out_src = jax.block_until_ready(out_src)
    out_cls = jax.block_until_ready(out_cls)

    spatial = image_size // (2 ** repeat_num)
    assert out_src.shape == (batch, 1, spatial, spatial), out_src.shape
    assert out_cls.shape == (batch, c_dim), out_cls.shape

    ref_src, ref_cls = ref_forward(x, params)
    # bf16 matmul operands (f32 accumulation) vs. a pure-f32 reference.
    assert jnp.allclose(out_src, ref_src, rtol=3e-2, atol=3e-2), (
        float(jnp.max(jnp.abs(out_src - ref_src))))
    assert jnp.allclose(out_cls, ref_cls, rtol=3e-2, atol=3e-2), (
        float(jnp.max(jnp.abs(out_cls - ref_cls))))

    print("KERNEL_OK")
</pallas_src>

<mosaic_0001>
module attributes {stable_mosaic.version = 11 : i64} {
  func.func @_fused_disc_kernel(%arg0: memref<2x18x9x6xbf16, #tpu.memory_space<vmem>>, %arg1: memref<48x8xbf16, #tpu.memory_space<vmem>>, %arg2: memref<1x1x8xf32, #tpu.memory_space<vmem>>, %arg3: memref<128x16xbf16, #tpu.memory_space<vmem>>, %arg4: memref<1x1x16xf32, #tpu.memory_space<vmem>>, %arg5: memref<256x32xbf16, #tpu.memory_space<vmem>>, %arg6: memref<1x1x32xf32, #tpu.memory_space<vmem>>, %arg7: memref<5x8xbf16, #tpu.memory_space<vmem>>, %arg8: memref<5x8xbf16, #tpu.memory_space<vmem>>, %arg9: memref<3x4xbf16, #tpu.memory_space<vmem>>, %arg10: memref<3x4xbf16, #tpu.memory_space<vmem>>, %arg11: memref<288x1xbf16, #tpu.memory_space<vmem>>, %arg12: memref<128x5xbf16, #tpu.memory_space<vmem>>, %arg13: memref<4x2x1xf32, #tpu.memory_space<vmem>>, %arg14: memref<2x5xf32, #tpu.memory_space<vmem>>) attributes {dimension_semantics = [], scalar_prefetch = 0 : i64, scratch_operands = 0 : i64, tpu.core_type = #tpu.core_type<tc>} {
    %c0 = arith.constant 0 : index
    %c0_0 = arith.constant 0 : index
    %c0_1 = arith.constant 0 : index
    %c0_2 = arith.constant 0 : index
    %0 = vector.load %arg0[%c0, %c0_0, %c0_1, %c0_2] : memref<2x18x9x6xbf16, #tpu.memory_space<vmem>>, vector<2x18x9x6xbf16>
    %c0_3 = arith.constant 0 : index
    %c0_4 = arith.constant 0 : index
    %1 = vector.load %arg1[%c0_3, %c0_4] : memref<48x8xbf16, #tpu.memory_space<vmem>>, vector<48x8xbf16>
    %c0_5 = arith.constant 0 : index
    %c0_6 = arith.constant 0 : index
    %c0_7 = arith.constant 0 : index
    %2 = vector.load %arg2[%c0_5, %c0_6, %c0_7] : memref<1x1x8xf32, #tpu.memory_space<vmem>>, vector<1x1x8xf32>
    %3 = vector.shape_cast %0 : vector<2x18x9x6xbf16> to vector<2x9x2x9x6xbf16>
    %4 = vector.extract_strided_slice %3 {offsets = [0, 0, 0, 0, 0], sizes = [2, 8, 1, 8, 6], strides = [1, 1, 1, 1, 1]} : vector<2x9x2x9x6xbf16> to vector<2x8x1x8x6xbf16>
    %5 = vector.shape_cast %4 : vector<2x8x1x8x6xbf16> to vector<2x8x8x6xbf16>
    %6 = vector.shape_cast %5 : vector<2x8x8x6xbf16> to vector<16x8x6xbf16>
    %7 = vector.extract_strided_slice %3 {offsets = [0, 0, 0, 1, 0], sizes = [2, 8, 1, 8, 6], strides = [1, 1, 1, 1, 1]} : vector<2x9x2x9x6xbf16> to vector<2x8x1x8x6xbf16>
    %8 = vector.shape_cast %7 : vector<2x8x1x8x6xbf16> to vector<2x8x8x6xbf16>
    %9 = vector.shape_cast %8 : vector<2x8x8x6xbf16> to vector<16x8x6xbf16>
    %10 = vector.extract_strided_slice %3 {offsets = [0, 0, 1, 0, 0], sizes = [2, 8, 1, 8, 6], strides = [1, 1, 1, 1, 1]} : vector<2x9x2x9x6xbf16> to vector<2x8x1x8x6xbf16>
    %11 = vector.shape_cast %10 : vector<2x8x1x8x6xbf16> to vector<2x8x8x6xbf16>
    %12 = vector.shape_cast %11 : vector<2x8x8x6xbf16> to vector<16x8x6xbf16>
    %13 = vector.extract_strided_slice %3 {offsets = [0, 0, 1, 1, 0], sizes = [2, 8, 1, 8, 6], strides = [1, 1, 1, 1, 1]} : vector<2x9x2x9x6xbf16> to vector<2x8x1x8x6xbf16>
    %14 = vector.shape_cast %13 : vector<2x8x1x8x6xbf16> to vector<2x8x8x6xbf16>
    %15 = vector.shape_cast %14 : vector<2x8x8x6xbf16> to vector<16x8x6xbf16>
    %16 = vector.extract_strided_slice %3 {offsets = [0, 1, 0, 0, 0], sizes = [2, 8, 1, 8, 6], strides = [1, 1, 1, 1, 1]} : vector<2x9x2x9x6xbf16> to vector<2x8x1x8x6xbf16>
    %17 = vector.shape_cast %16 : vector<2x8x1x8x6xbf16> to vector<2x8x8x6xbf16>
    %18 = vector.shape_cast %17 : vector<2x8x8x6xbf16> to vector<16x8x6xbf16>
    %19 = vector.extract_strided_slice %3 {offsets = [0, 1, 0, 1, 0], sizes = [2, 8, 1, 8, 6], strides = [1, 1, 1, 1, 1]} : vector<2x9x2x9x6xbf16> to vector<2x8x1x8x6xbf16>
    %20 = vector.shape_cast %19 : vector<2x8x1x8x6xbf16> to vector<2x8x8x6xbf16>
    %21 = vector.shape_cast %20 : vector<2x8x8x6xbf16> to vector<16x8x6xbf16>
    %22 = vector.extract_strided_slice %3 {offsets = [0, 1, 1, 0, 0], sizes = [2, 8, 1, 8, 6], strides = [1, 1, 1, 1, 1]} : vector<2x9x2x9x6xbf16> to vector<2x8x1x8x6xbf16>
    %23 = vector.shape_cast %22 : vector<2x8x1x8x6xbf16> to vector<2x8x8x6xbf16>
    %24 = vector.shape_cast %23 : vector<2x8x8x6xbf16> to vector<16x8x6xbf16>
    %25 = vector.extract_strided_slice %3 {offsets = [0, 1, 1, 1, 0], sizes = [2, 8, 1, 8, 6], strides = [1, 1, 1, 1, 1]} : vector<2x9x2x9x6xbf16> to vector<2x8x1x8x6xbf16>
    %26 = vector.shape_cast %25 : vector<2x8x1x8x6xbf16> to vector<2x8x8x6xbf16>
    %27 = vector.shape_cast %26 : vector<2x8x8x6xbf16> to vector<16x8x6xbf16>
    %28 = tpu.concatenate %6, %9, %12, %15, %18, %21, %24, %27 in 2 : vector<16x8x6xbf16>, vector<16x8x6xbf16>, vector<16x8x6xbf16>, vector<16x8x6xbf16>, vector<16x8x6xbf16>, vector<16x8x6xbf16>, vector<16x8x6xbf16>, vector<16x8x6xbf16> -> vector<16x8x48xbf16>
    %29 = vector.shape_cast %1 : vector<48x8xbf16> to vector<1x48x8xbf16>
    %30 = vector.shape_cast %29 : vector<1x48x8xbf16> to vector<1x48x8xbf16>
    %31 = vector.broadcast %30 : vector<1x48x8xbf16> to vector<16x48x8xbf16>
    "tpu.trace_start"() <{level = 10 : i32, message = "gwk,gkn->gwn"}> : () -> ()
    %cst = arith.constant dense<0.000000e+00> : vector<16x8x8xf32>
    %32 = tpu.matmul %28, %31, %cst {dimension_numbers = #tpu.dot_dimension_numbers<[2], [1], [1], [2], [0, 0, 0, 1, 1, 2], [0], [0]>} : vector<16x8x48xbf16>, vector<16x48x8xbf16>, vector<16x8x8xf32> -> vector<16x8x8xf32>
    "tpu.trace_stop"() : () -> ()
    %33 = vector.broadcast %2 : vector<1x1x8xf32> to vector<16x8x8xf32>
    %34 = arith.addf %32, %33 : vector<16x8x8xf32>
    %cst_8 = arith.constant 0.000000e+00 : f32
    %35 = vector.broadcast %cst_8 : f32 to vector<16x8x8xf32>
    %36 = arith.cmpf oge, %34, %35 : vector<16x8x8xf32>
    %cst_9 = arith.constant 0.00999999977 : f32
    %37 = vector.broadcast %cst_9 : f32 to vector<16x8x8xf32>
    %38 = arith.mulf %37, %34 : vector<16x8x8xf32>
    %39 = arith.select %36, %34, %38 : vector<16x8x8xi1>, vector<16x8x8xf32>
    %40 = arith.truncf %39 : vector<16x8x8xf32> to vector<16x8x8xbf16>
    %c0_10 = arith.constant 0 : index
    %c0_11 = arith.constant 0 : index
    %41 = vector.load %arg7[%c0_10, %c0_11] : memref<5x8xbf16, #tpu.memory_space<vmem>>, vector<5x8xbf16>
    %c0_12 = arith.constant 0 : index
    %c0_13 = arith.constant 0 : index
    %42 = vector.load %arg8[%c0_12, %c0_13] : memref<5x8xbf16, #tpu.memory_space<vmem>>, vector<5x8xbf16>
    %43 = vector.shape_cast %41 : vector<5x8xbf16> to vector<1x5x8xbf16>
    %44 = vector.shape_cast %43 : vector<1x5x8xbf16> to vector<1x5x8xbf16>
    %45 = vector.broadcast %44 : vector<1x5x8xbf16> to vector<16x5x8xbf16>
    %46 = vector.shape_cast %42 : vector<5x8xbf16> to vector<1x5x8xbf16>
    %47 = vector.shape_cast %46 : vector<1x5x8xbf16> to vector<1x5x8xbf16>
    %48 = vector.broadcast %47 : vector<1x5x8xbf16> to vector<16x5x8xbf16>
    "tpu.trace_start"() <{level = 10 : i32, message = "gxw,gwc->gxc"}> : () -> ()
    %cst_14 = arith.constant dense<0.000000e+00> : vector<16x5x8xf32>
    %49 = tpu.matmul %45, %40, %cst_14 {dimension_numbers = #tpu.dot_dimension_numbers<[2], [1], [1], [2], [0, 0, 0, 1, 1, 2], [0], [0]>} : vector<16x5x8xbf16>, vector<16x8x8xbf16>, vector<16x5x8xf32> -> vector<16x5x8xf32>
    %cst_15 = arith.constant dense<0.000000e+00> : vector<16x5x8xf32>
    %50 = tpu.matmul %48, %40, %cst_15 {dimension_numbers = #tpu.dot_dimension_numbers<[2], [1], [1], [2], [0, 0, 0, 1, 1, 2], [0], [0]>} : vector<16x5x8xbf16>, vector<16x8x8xbf16>, vector<16x5x8xf32> -> vector<16x5x8xf32>
    "tpu.trace_stop"() : () -> ()
    %51 = tpu.concatenate %49, %50 in 2 : vector<16x5x8xf32>, vector<16x5x8xf32> -> vector<16x5x16xf32>
    %52 = arith.truncf %51 : vector<16x5x16xf32> to vector<16x5x16xbf16>
    %53 = vector.shape_cast %52 : vector<16x5x16xbf16> to vector<2x8x5x16xbf16>
    %cst_16 = arith.constant 0.000000e+00 : bf16
    %54 = vector.broadcast %cst_16 : bf16 to vector<2x1x5x16xbf16>
    %55 = tpu.concatenate %54, %53, %54 in 1 : vector<2x1x5x16xbf16>, vector<2x8x5x16xbf16>, vector<2x1x5x16xbf16> -> vector<2x10x5x16xbf16>
    %c0_17 = arith.constant 0 : index
    %c0_18 = arith.constant 0 : index
    %56 = vector.load %arg3[%c0_17, %c0_18] : memref<128x16xbf16, #tpu.memory_space<vmem>>, vector<128x16xbf16>
    %c0_19 = arith.constant 0 : index
    %c0_20 = arith.constant 0 : index
    %c0_21 = arith.constant 0 : index
    %57 = vector.load %arg4[%c0_19, %c0_20, %c0_21] : memref<1x1x16xf32, #tpu.memory_space<vmem>>, vector<1x1x16xf32>
    %58 = vector.shape_cast %55 : vector<2x10x5x16xbf16> to vector<2x5x2x5x16xbf16>
    %59 = vector.extract_strided_slice %58 {offsets = [0, 0, 0, 0, 0], sizes = [2, 4, 1, 4, 16], strides = [1, 1, 1, 1, 1]} : vector<2x5x2x5x16xbf16> to vector<2x4x1x4x16xbf16>
    %60 = vector.shape_cast %59 : vector<2x4x1x4x16xbf16> to vector<2x4x4x16xbf16>
    %61 = vector.shape_cast %60 : vector<2x4x4x16xbf16> to vector<8x4x16xbf16>
    %62 = vector.extract_strided_slice %58 {offsets = [0, 0, 0, 1, 0], sizes = [2, 4, 1, 4, 16], strides = [1, 1, 1, 1, 1]} : vector<2x5x2x5x16xbf16> to vector<2x4x1x4x16xbf16>
    %63 = vector.shape_cast %62 : vector<2x4x1x4x16xbf16> to vector<2x4x4x16xbf16>
    %64 = vector.shape_cast %63 : vector<2x4x4x16xbf16> to vector<8x4x16xbf16>
    %65 = vector.extract_strided_slice %58 {offsets = [0, 0, 1, 0, 0], sizes = [2, 4, 1, 4, 16], strides = [1, 1, 1, 1, 1]} : vector<2x5x2x5x16xbf16> to vector<2x4x1x4x16xbf16>
    %66 = vector.shape_cast %65 : vector<2x4x1x4x16xbf16> to vector<2x4x4x16xbf16>
    %67 = vector.shape_cast %66 : vector<2x4x4x16xbf16> to vector<8x4x16xbf16>
    %68 = vector.extract_strided_slice %58 {offsets = [0, 0, 1, 1, 0], sizes = [2, 4, 1, 4, 16], strides = [1, 1, 1, 1, 1]} : vector<2x5x2x5x16xbf16> to vector<2x4x1x4x16xbf16>
    %69 = vector.shape_cast %68 : vector<2x4x1x4x16xbf16> to vector<2x4x4x16xbf16>
    %70 = vector.shape_cast %69 : vector<2x4x4x16xbf16> to vector<8x4x16xbf16>
    %71 = vector.extract_strided_slice %58 {offsets = [0, 1, 0, 0, 0], sizes = [2, 4, 1, 4, 16], strides = [1, 1, 1, 1, 1]} : vector<2x5x2x5x16xbf16> to vector<2x4x1x4x16xbf16>
    %72 = vector.shape_cast %71 : vector<2x4x1x4x16xbf16> to vector<2x4x4x16xbf16>
    %73 = vector.shape_cast %72 : vector<2x4x4x16xbf16> to vector<8x4x16xbf16>
    %74 = vector.extract_strided_slice %58 {offsets = [0, 1, 0, 1, 0], sizes = [2, 4, 1, 4, 16], strides = [1, 1, 1, 1, 1]} : vector<2x5x2x5x16xbf16> to vector<2x4x1x4x16xbf16>
    %75 = vector.shape_cast %74 : vector<2x4x1x4x16xbf16> to vector<2x4x4x16xbf16>
    %76 = vector.shape_cast %75 : vector<2x4x4x16xbf16> to vector<8x4x16xbf16>
    %77 = vector.extract_strided_slice %58 {offsets = [0, 1, 1, 0, 0], sizes = [2, 4, 1, 4, 16], strides = [1, 1, 1, 1, 1]} : vector<2x5x2x5x16xbf16> to vector<2x4x1x4x16xbf16>
    %78 = vector.shape_cast %77 : vector<2x4x1x4x16xbf16> to vector<2x4x4x16xbf16>
    %79 = vector.shape_cast %78 : vector<2x4x4x16xbf16> to vector<8x4x16xbf16>
    %80 = vector.extract_strided_slice %58 {offsets = [0, 1, 1, 1, 0], sizes = [2, 4, 1, 4, 16], strides = [1, 1, 1, 1, 1]} : vector<2x5x2x5x16xbf16> to vector<2x4x1x4x16xbf16>
    %81 = vector.shape_cast %80 : vector<2x4x1x4x16xbf16> to vector<2x4x4x16xbf16>
    %82 = vector.shape_cast %81 : vector<2x4x4x16xbf16> to vector<8x4x16xbf16>
    %83 = tpu.concatenate %61, %64, %67, %70, %73, %76, %79, %82 in 2 : vector<8x4x16xbf16>, vector<8x4x16xbf16>, vector<8x4x16xbf16>, vector<8x4x16xbf16>, vector<8x4x16xbf16>, vector<8x4x16xbf16>, vector<8x4x16xbf16>, vector<8x4x16xbf16> -> vector<8x4x128xbf16>
    %84 = vector.shape_cast %56 : vector<128x16xbf16> to vector<1x128x16xbf16>
    %85 = vector.shape_cast %84 : vector<1x128x16xbf16> to vector<1x128x16xbf16>
    %86 = vector.broadcast %85 : vector<1x128x16xbf16> to vector<8x128x16xbf16>
    "tpu.trace_start"() <{level = 10 : i32, message = "gwk,gkn->gwn"}> : () -> ()
    %cst_22 = arith.constant dense<0.000000e+00> : vector<8x4x16xf32>
    %87 = tpu.matmul %83, %86, %cst_22 {dimension_numbers = #tpu.dot_dimension_numbers<[2], [1], [1], [2], [0, 0, 0, 1, 1, 2], [0], [0]>} : vector<8x4x128xbf16>, vector<8x128x16xbf16>, vector<8x4x16xf32> -> vector<8x4x16xf32>
    "tpu.trace_stop"() : () -> ()
    %88 = vector.broadcast %57 : vector<1x1x16xf32> to vector<8x4x16xf32>
    %89 = arith.addf %87, %88 : vector<8x4x16xf32>
    %cst_23 = arith.constant 0.000000e+00 : f32
    %90 = vector.broadcast %cst_23 : f32 to vector<8x4x16xf32>
    %91 = arith.cmpf oge, %89, %90 : vector<8x4x16xf32>
    %cst_24 = arith.constant 0.00999999977 : f32
    %92 = vector.broadcast %cst_24 : f32 to vector<8x4x16xf32>
    %93 = arith.mulf %92, %89 : vector<8x4x16xf32>
    %94 = arith.select %91, %89, %93 : vector<8x4x16xi1>, vector<8x4x16xf32>
    %95 = arith.truncf %94 : vector<8x4x16xf32> to vector<8x4x16xbf16>
    %c0_25 = arith.constant 0 : index
    %c0_26 = arith.constant 0 : index
    %96 = vector.load %arg9[%c0_25, %c0_26] : memref<3x4xbf16, #tpu.memory_space<vmem>>, vector<3x4xbf16>
    %c0_27 = arith.constant 0 : index
    %c0_28 = arith.constant 0 : index
    %97 = vector.load %arg10[%c0_27, %c0_28] : memref<3x4xbf16, #tpu.memory_space<vmem>>, vector<3x4xbf16>
    %98 = vector.shape_cast %96 : vector<3x4xbf16> to vector<1x3x4xbf16>
    %99 = vector.shape_cast %98 : vector<1x3x4xbf16> to vector<1x3x4xbf16>
    %100 = vector.broadcast %99 : vector<1x3x4xbf16> to vector<8x3x4xbf16>
    %101 = vector.shape_cast %97 : vector<3x4xbf16> to vector<1x3x4xbf16>
    %102 = vector.shape_cast %101 : vector<1x3x4xbf16> to vector<1x3x4xbf16>
    %103 = vector.broadcast %102 : vector<1x3x4xbf16> to vector<8x3x4xbf16>
    "tpu.trace_start"() <{level = 10 : i32, message = "gxw,gwc->gxc"}> : () -> ()
    %cst_29 = arith.constant dense<0.000000e+00> : vector<8x3x16xf32>
    %104 = tpu.matmul %100, %95, %cst_29 {dimension_numbers = #tpu.dot_dimension_numbers<[2], [1], [1], [2], [0, 0, 0, 1, 1, 2], [0], [0]>} : vector<8x3x4xbf16>, vector<8x4x16xbf16>, vector<8x3x16xf32> -> vector<8x3x16xf32>
    %cst_30 = arith.constant dense<0.000000e+00> : vector<8x3x16xf32>
    %105 = tpu.matmul %103, %95, %cst_30 {dimension_numbers = #tpu.dot_dimension_numbers<[2], [1], [1], [2], [0, 0, 0, 1, 1, 2], [0], [0]>} : vector<8x3x4xbf16>, vector<8x4x16xbf16>, vector<8x3x16xf32> -> vector<8x3x16xf32>
    "tpu.trace_stop"() : () -> ()
    %106 = tpu.concatenate %104, %105 in 2 : vector<8x3x16xf32>, vector<8x3x16xf32> -> vector<8x3x32xf32>
    %107 = arith.truncf %106 : vector<8x3x32xf32> to vector<8x3x32xbf16>
    %108 = vector.shape_cast %107 : vector<8x3x32xbf16> to vector<2x4x3x32xbf16>
    %cst_31 = arith.constant 0.000000e+00 : bf16
    %109 = vector.broadcast %cst_31 : bf16 to vector<2x1x3x32xbf16>
    %110 = tpu.concatenate %109, %108, %109 in 1 : vector<2x1x3x32xbf16>, vector<2x4x3x32xbf16>, vector<2x1x3x32xbf16> -> vector<2x6x3x32xbf16>
    %c0_32 = arith.constant 0 : index
    %c0_33 = arith.constant 0 : index
    %111 = vector.load %arg5[%c0_32, %c0_33] : memref<256x32xbf16, #tpu.memory_space<vmem>>, vector<256x32xbf16>
    %c0_34 = arith.constant 0 : index
    %c0_35 = arith.constant 0 : index
    %c0_36 = arith.constant 0 : index
    %112 = vector.load %arg6[%c0_34, %c0_35, %c0_36] : memref<1x1x32xf32, #tpu.memory_space<vmem>>, vector<1x1x32xf32>
    %113 = vector.shape_cast %110 : vector<2x6x3x32xbf16> to vector<2x3x2x3x32xbf16>
    %114 = vector.extract_strided_slice %113 {offsets = [0, 0, 0, 0, 0], sizes = [2, 2, 1, 2, 32], strides = [1, 1, 1, 1, 1]} : vector<2x3x2x3x32xbf16> to vector<2x2x1x2x32xbf16>
    %115 = vector.shape_cast %114 : vector<2x2x1x2x32xbf16> to vector<2x2x2x32xbf16>
    %116 = vector.shape_cast %115 : vector<2x2x2x32xbf16> to vector<4x2x32xbf16>
    %117 = vector.extract_strided_slice %113 {offsets = [0, 0, 0, 1, 0], sizes = [2, 2, 1, 2, 32], strides = [1, 1, 1, 1, 1]} : vector<2x3x2x3x32xbf16> to vector<2x2x1x2x32xbf16>
    %118 = vector.shape_cast %117 : vector<2x2x1x2x32xbf16> to vector<2x2x2x32xbf16>
    %119 = vector.shape_cast %118 : vector<2x2x2x32xbf16> to vector<4x2x32xbf16>
    %120 = vector.extract_strided_slice %113 {offsets = [0, 0, 1, 0, 0], sizes = [2, 2, 1, 2, 32], strides = [1, 1, 1, 1, 1]} : vector<2x3x2x3x32xbf16> to vector<2x2x1x2x32xbf16>
    %121 = vector.shape_cast %120 : vector<2x2x1x2x32xbf16> to vector<2x2x2x32xbf16>
    %122 = vector.shape_cast %121 : vector<2x2x2x32xbf16> to vector<4x2x32xbf16>
    %123 = vector.extract_strided_slice %113 {offsets = [0, 0, 1, 1, 0], sizes = [2, 2, 1, 2, 32], strides = [1, 1, 1, 1, 1]} : vector<2x3x2x3x32xbf16> to vector<2x2x1x2x32xbf16>
    %124 = vector.shape_cast %123 : vector<2x2x1x2x32xbf16> to vector<2x2x2x32xbf16>
    %125 = vector.shape_cast %124 : vector<2x2x2x32xbf16> to vector<4x2x32xbf16>
    %126 = vector.extract_strided_slice %113 {offsets = [0, 1, 0, 0, 0], sizes = [2, 2, 1, 2, 32], strides = [1, 1, 1, 1, 1]} : vector<2x3x2x3x32xbf16> to vector<2x2x1x2x32xbf16>
    %127 = vector.shape_cast %126 : vector<2x2x1x2x32xbf16> to vector<2x2x2x32xbf16>
    %128 = vector.shape_cast %127 : vector<2x2x2x32xbf16> to vector<4x2x32xbf16>
    %129 = vector.extract_strided_slice %113 {offsets = [0, 1, 0, 1, 0], sizes = [2, 2, 1, 2, 32], strides = [1, 1, 1, 1, 1]} : vector<2x3x2x3x32xbf16> to vector<2x2x1x2x32xbf16>
    %130 = vector.shape_cast %129 : vector<2x2x1x2x32xbf16> to vector<2x2x2x32xbf16>
    %131 = vector.shape_cast %130 : vector<2x2x2x32xbf16> to vector<4x2x32xbf16>
    %132 = vector.extract_strided_slice %113 {offsets = [0, 1, 1, 0, 0], sizes = [2, 2, 1, 2, 32], strides = [1, 1, 1, 1, 1]} : vector<2x3x2x3x32xbf16> to vector<2x2x1x2x32xbf16>
    %133 = vector.shape_cast %132 : vector<2x2x1x2x32xbf16> to vector<2x2x2x32xbf16>
    %134 = vector.shape_cast %133 : vector<2x2x2x32xbf16> to vector<4x2x32xbf16>
    %135 = vector.extract_strided_slice %113 {offsets = [0, 1, 1, 1, 0], sizes = [2, 2, 1, 2, 32], strides = [1, 1, 1, 1, 1]} : vector<2x3x2x3x32xbf16> to vector<2x2x1x2x32xbf16>
    %136 = vector.shape_cast %135 : vector<2x2x1x2x32xbf16> to vector<2x2x2x32xbf16>
    %137 = vector.shape_cast %136 : vector<2x2x2x32xbf16> to vector<4x2x32xbf16>
    %138 = tpu.concatenate %116, %119, %122, %125, %128, %131, %134, %137 in 2 : vector<4x2x32xbf16>, vector<4x2x32xbf16>, vector<4x2x32xbf16>, vector<4x2x32xbf16>, vector<4x2x32xbf16>, vector<4x2x32xbf16>, vector<4x2x32xbf16>, vector<4x2x32xbf16> -> vector<4x2x256xbf16>
    %139 = vector.shape_cast %111 : vector<256x32xbf16> to vector<1x256x32xbf16>
    %140 = vector.shape_cast %139 : vector<1x256x32xbf16> to vector<1x256x32xbf16>
    %141 = vector.broadcast %140 : vector<1x256x32xbf16> to vector<4x256x32xbf16>
    "tpu.trace_start"() <{level = 10 : i32, message = "gwk,gkn->gwn"}> : () -> ()
    %cst_37 = arith.constant dense<0.000000e+00> : vector<4x2x32xf32>
    %142 = tpu.matmul %138, %141, %cst_37 {dimension_numbers = #tpu.dot_dimension_numbers<[2], [1], [1], [2], [0, 0, 0, 1, 1, 2], [0], [0]>} : vector<4x2x256xbf16>, vector<4x256x32xbf16>, vector<4x2x32xf32> -> vector<4x2x32xf32>
    "tpu.trace_stop"() : () -> ()
    %143 = vector.broadcast %112 : vector<1x1x32xf32> to vector<4x2x32xf32>
    %144 = arith.addf %142, %143 : vector<4x2x32xf32>
    %cst_38 = arith.constant 0.000000e+00 : f32
    %145 = vector.broadcast %cst_38 : f32 to vector<4x2x32xf32>
    %146 = arith.cmpf oge, %144, %145 : vector<4x2x32xf32>
    %cst_39 = arith.constant 0.00999999977 : f32
    %147 = vector.broadcast %cst_39 : f32 to vector<4x2x32xf32>
    %148 = arith.mulf %147, %144 : vector<4x2x32xf32>
    %149 = arith.select %146, %144, %148 : vector<4x2x32xi1>, vector<4x2x32xf32>
    %150 = arith.truncf %149 : vector<4x2x32xf32> to vector<4x2x32xbf16>
    %151 = vector.shape_cast %150 : vector<4x2x32xbf16> to vector<2x2x2x32xbf16>
    %cst_40 = arith.constant 0.000000e+00 : bf16
    %152 = vector.broadcast %cst_40 : bf16 to vector<2x2x1x32xbf16>
    %cst_41 = arith.constant 0.000000e+00 : bf16
    %153 = vector.broadcast %cst_41 : bf16 to vector<2x1x4x32xbf16>
    %154 = tpu.concatenate %152, %151, %152 in 2 : vector<2x2x1x32xbf16>, vector<2x2x2x32xbf16>, vector<2x2x1x32xbf16> -> vector<2x2x4x32xbf16>
    %155 = tpu.concatenate %153, %154, %153 in 1 : vector<2x1x4x32xbf16>, vector<2x2x4x32xbf16>, vector<2x1x4x32xbf16> -> vector<2x4x4x32xbf16>
    %156 = vector.extract_strided_slice %155 {offsets = [0, 0, 0, 0], sizes = [2, 2, 2, 32], strides = [1, 1, 1, 1]} : vector<2x4x4x32xbf16> to vector<2x2x2x32xbf16>
    %157 = vector.shape_cast %156 : vector<2x2x2x32xbf16> to vector<4x2x32xbf16>
    %158 = vector.extract_strided_slice %155 {offsets = [0, 0, 1, 0], sizes = [2, 2, 2, 32], strides = [1, 1, 1, 1]} : vector<2x4x4x32xbf16> to vector<2x2x2x32xbf16>
    %159 = vector.shape_cast %158 : vector<2x2x2x32xbf16> to vector<4x2x32xbf16>
    %160 = vector.extract_strided_slice %155 {offsets = [0, 0, 2, 0], sizes = [2, 2, 2, 32], strides = [1, 1, 1, 1]} : vector<2x4x4x32xbf16> to vector<2x2x2x32xbf16>
    %161 = vector.shape_cast %160 : vector<2x2x2x32xbf16> to vector<4x2x32xbf16>
    %162 = vector.extract_strided_slice %155 {offsets = [0, 1, 0, 0], sizes = [2, 2, 2, 32], strides = [1, 1, 1, 1]} : vector<2x4x4x32xbf16> to vector<2x2x2x32xbf16>
    %163 = vector.shape_cast %162 : vector<2x2x2x32xbf16> to vector<4x2x32xbf16>
    %164 = vector.extract_strided_slice %155 {offsets = [0, 1, 1, 0], sizes = [2, 2, 2, 32], strides = [1, 1, 1, 1]} : vector<2x4x4x32xbf16> to vector<2x2x2x32xbf16>
    %165 = vector.shape_cast %164 : vector<2x2x2x32xbf16> to vector<4x2x32xbf16>
    %166 = vector.extract_strided_slice %155 {offsets = [0, 1, 2, 0], sizes = [2, 2, 2, 32], strides = [1, 1, 1, 1]} : vector<2x4x4x32xbf16> to vector<2x2x2x32xbf16>
    %167 = vector.shape_cast %166 : vector<2x2x2x32xbf16> to vector<4x2x32xbf16>
    %168 = vector.extract_strided_slice %155 {offsets = [0, 2, 0, 0], sizes = [2, 2, 2, 32], strides = [1, 1, 1, 1]} : vector<2x4x4x32xbf16> to vector<2x2x2x32xbf16>
    %169 = vector.shape_cast %168 : vector<2x2x2x32xbf16> to vector<4x2x32xbf16>
    %170 = vector.extract_strided_slice %155 {offsets = [0, 2, 1, 0], sizes = [2, 2, 2, 32], strides = [1, 1, 1, 1]} : vector<2x4x4x32xbf16> to vector<2x2x2x32xbf16>
    %171 = vector.shape_cast %170 : vector<2x2x2x32xbf16> to vector<4x2x32xbf16>
    %172 = vector.extract_strided_slice %155 {offsets = [0, 2, 2, 0], sizes = [2, 2, 2, 32], strides = [1, 1, 1, 1]} : vector<2x4x4x32xbf16> to vector<2x2x2x32xbf16>
    %173 = vector.shape_cast %172 : vector<2x2x2x32xbf16> to vector<4x2x32xbf16>
    %174 = tpu.concatenate %157, %159, %161, %163, %165, %167, %169, %171, %173 in 2 : vector<4x2x32xbf16>, vector<4x2x32xbf16>, vector<4x2x32xbf16>, vector<4x2x32xbf16>, vector<4x2x32xbf16>, vector<4x2x32xbf16>, vector<4x2x32xbf16>, vector<4x2x32xbf16>, vector<4x2x32xbf16> -> vector<4x2x288xbf16>
    %c0_42 = arith.constant 0 : index
    %c0_43 = arith.constant 0 : index
    %175 = vector.load %arg11[%c0_42, %c0_43] : memref<288x1xbf16, #tpu.memory_space<vmem>>, vector<288x1xbf16>
    %176 = vector.shape_cast %175 : vector<288x1xbf16> to vector<1x288x1xbf16>
    %177 = vector.shape_cast %176 : vector<1x288x1xbf16> to vector<1x288x1xbf16>
    %178 = vector.broadcast %177 : vector<1x288x1xbf16> to vector<4x288x1xbf16>
    "tpu.trace_start"() <{level = 10 : i32, message = "gwk,gkn->gwn"}> : () -> ()
    %cst_44 = arith.constant dense<0.000000e+00> : vector<4x2x1xf32>
    %179 = tpu.matmul %174, %178, %cst_44 {dimension_numbers = #tpu.dot_dimension_numbers<[2], [1], [1], [2], [0, 0, 0, 1, 1, 2], [0], [0]>} : vector<4x2x288xbf16>, vector<4x288x1xbf16>, vector<4x2x1xf32> -> vector<4x2x1xf32>
    "tpu.trace_stop"() : () -> ()
    %c0_45 = arith.constant 0 : index
    %c0_46 = arith.constant 0 : index
    %c0_47 = arith.constant 0 : index
    %180 = vector.load %arg13[%c0_45, %c0_46, %c0_47] : memref<4x2x1xf32, #tpu.memory_space<vmem>>, vector<4x2x1xf32>
    tpu.vector_store %arg13[%c0_45, %c0_46, %c0_47], %179 {strides = array<i32>} : memref<4x2x1xf32, #tpu.memory_space<vmem>>, vector<4x2x1xf32>,
    %181 = vector.extract_strided_slice %151 {offsets = [0, 0, 0, 0], sizes = [2, 1, 1, 32], strides = [1, 1, 1, 1]} : vector<2x2x2x32xbf16> to vector<2x1x1x32xbf16>
    %182 = vector.shape_cast %181 : vector<2x1x1x32xbf16> to vector<2x32xbf16>
    %183 = vector.extract_strided_slice %151 {offsets = [0, 0, 1, 0], sizes = [2, 1, 1, 32], strides = [1, 1, 1, 1]} : vector<2x2x2x32xbf16> to vector<2x1x1x32xbf16>
    %184 = vector.shape_cast %183 : vector<2x1x1x32xbf16> to vector<2x32xbf16>
    %185 = vector.extract_strided_slice %151 {offsets = [0, 1, 0, 0], sizes = [2, 1, 1, 32], strides = [1, 1, 1, 1]} : vector<2x2x2x32xbf16> to vector<2x1x1x32xbf16>
    %186 = vector.shape_cast %185 : vector<2x1x1x32xbf16> to vector<2x32xbf16>
    %187 = vector.extract_strided_slice %151 {offsets = [0, 1, 1, 0], sizes = [2, 1, 1, 32], strides = [1, 1, 1, 1]} : vector<2x2x2x32xbf16> to vector<2x1x1x32xbf16>
    %188 = vector.shape_cast %187 : vector<2x1x1x32xbf16> to vector<2x32xbf16>
    %189 = tpu.concatenate %182, %184, %186, %188 in 1 : vector<2x32xbf16>, vector<2x32xbf16>, vector<2x32xbf16>, vector<2x32xbf16> -> vector<2x128xbf16>
    %c0_48 = arith.constant 0 : index
    %c0_49 = arith.constant 0 : index
    %190 = vector.load %arg12[%c0_48, %c0_49] : memref<128x5xbf16, #tpu.memory_space<vmem>>, vector<128x5xbf16>
    %cst_50 = arith.constant dense<0.000000e+00> : vector<2x5xf32>
    %191 = tpu.matmul %189, %190, %cst_50 {dimension_numbers = #tpu.dot_dimension_numbers<[1], [0], [0], [1], [0, 0, 1, 1], [], []>} : vector<2x128xbf16>, vector<128x5xbf16>, vector<2x5xf32> -> vector<2x5xf32>
    %c0_51 = arith.constant 0 : index
    %c0_52 = arith.constant 0 : index
    %192 = vector.load %arg14[%c0_51, %c0_52] : memref<2x5xf32, #tpu.memory_space<vmem>>, vector<2x5xf32>
    tpu.vector_store %arg14[%c0_51, %c0_52], %191 {strides = array<i32>} : memref<2x5xf32, #tpu.memory_space<vmem>>, vector<2x5xf32>,
    return
  }
}

</mosaic_0001>

<llo_original>
// kernel: discriminator_y_forward.1
$region0: #{discriminator_y_forward.1}
  #allocation0 [shape = 'u32[]', space=smem, size = 0x4, offset = 0x4, fixed_abs, tag = 'smem constant byte address 0x4 - core index']
  #allocation1 [shape = 'u32[144,128]{1,0:T(1,128)}', space=vmem, size = 0x12000, scoped, tag = 'internal scratch']
  %s0 = inlined_call_operand.vmem [shape: bf16[2,18,9,6], index: 0, kind: input, shape index: {}]
  %s1 = inlined_call_operand.vmem [shape: bf16[48,8], index: 1, kind: input, shape index: {}]
  %s2 = inlined_call_operand.vmem [shape: f32[1,1,8], index: 2, kind: input, shape index: {}]
  %s3 = inlined_call_operand.vmem [shape: bf16[128,16], index: 3, kind: input, shape index: {}]
  %s4 = inlined_call_operand.vmem [shape: f32[1,1,16], index: 4, kind: input, shape index: {}]
  %s5 = inlined_call_operand.vmem [shape: bf16[256,32], index: 5, kind: input, shape index: {}]
  %s6 = inlined_call_operand.vmem [shape: f32[1,1,32], index: 6, kind: input, shape index: {}]
  %s7 = inlined_call_operand.vmem [shape: bf16[5,8], index: 7, kind: input, shape index: {}]
  %s8 = inlined_call_operand.vmem [shape: bf16[5,8], index: 8, kind: input, shape index: {}]
  %s9 = inlined_call_operand.vmem [shape: bf16[3,4], index: 9, kind: input, shape index: {}]
  %s10 = inlined_call_operand.vmem [shape: bf16[3,4], index: 10, kind: input, shape index: {}]
  %s11 = inlined_call_operand.vmem [shape: bf16[288,1], index: 11, kind: input, shape index: {}]
  %s12 = inlined_call_operand.vmem [shape: bf16[128,5], index: 12, kind: input, shape index: {}]
  %s13 = inlined_call_operand.vmem [shape: f32[4,2,1], index: 13, kind: output, shape index: {0}]
  %s14 = inlined_call_operand.hbm [shape: f32[2,5], index: 14, kind: output, shape index: {1}]
  %15 = xla_tuple %s13, %s14
  %s16 = sld [smem:[#allocation0]]
  $region70: #{discriminator_y_forward.1} parent=0
    _
  %s18 = ssub.s32 1, %s16
  %s19 = scalar_select 0, %s18, %s16
  $region1: #{discriminator_y_forward.1} parent=0
    #allocation2 [shape = 'u8[1024]{0}', space=vmem, size = 0x400, scoped, tag = 'output window, operand 1, single buffered']
    #allocation3 [shape = 's32[1]{0}', space=sflag, size = 0x4, scoped, tag = 'scoped memory for discriminator_y_forward.1']
    %20 = vsyncpa [#allocation3], 0
    // Predicated region
    $region2: #{discriminator_y_forward.1} parent=1 // pred_check
      _
    $region3: #{discriminator_y_forward.1} parent=1 // pred_check_branch
      %22 = sbr.rel (0) target = $region5
    $region4: #{discriminator_y_forward.1} parent=1 // pred_region
      _
    $region5: #{discriminator_y_forward.1} parent=1 // pred_fallthru
      _
    // Predicated region
    $region6: #{discriminator_y_forward.1} parent=1 // pred_check
      _
    $region7: #{discriminator_y_forward.1} parent=1 // pred_check_branch
      %24 = sbr.rel (0) target = $region9
    $region8: #{discriminator_y_forward.1} parent=1 // pred_region
      _
    $region9: #{discriminator_y_forward.1} parent=1 // pred_fallthru
      _
    // Predicated region
    $region10: #{discriminator_y_forward.1} parent=1 // pred_check
      _
    $region11: #{discriminator_y_forward.1} parent=1 // pred_check_branch
      %26 = sbr.rel (0) target = $region13
    $region12: #{discriminator_y_forward.1} parent=1 // pred_region
      _
    $region13: #{discriminator_y_forward.1} parent=1 // pred_fallthru
      _
    // Predicated region
    $region14: #{discriminator_y_forward.1} parent=1 // pred_check
      _
    $region15: #{discriminator_y_forward.1} parent=1 // pred_check_branch
      %28 = sbr.rel (0) target = $region17
    $region16: #{discriminator_y_forward.1} parent=1 // pred_region
      _
    $region17: #{discriminator_y_forward.1} parent=1 // pred_fallthru
      _
    // Predicated region
    $region18: #{discriminator_y_forward.1} parent=1 // pred_check
      _
    $region19: #{discriminator_y_forward.1} parent=1 // pred_check_branch
      %30 = sbr.rel (0) target = $region21
    $region20: #{discriminator_y_forward.1} parent=1 // pred_region
      _
    $region21: #{discriminator_y_forward.1} parent=1 // pred_fallthru
      _
    // Predicated region
    $region22: #{discriminator_y_forward.1} parent=1 // pred_check
      _
    $region23: #{discriminator_y_forward.1} parent=1 // pred_check_branch
      %32 = sbr.rel (0) target = $region25
    $region24: #{discriminator_y_forward.1} parent=1 // pred_region
      _
    $region25: #{discriminator_y_forward.1} parent=1 // pred_fallthru
      _
    // Predicated region
    $region26: #{discriminator_y_forward.1} parent=1 // pred_check
      _
    $region27: #{discriminator_y_forward.1} parent=1 // pred_check_branch
      %34 = sbr.rel (0) target = $region29
    $region28: #{discriminator_y_forward.1} parent=1 // pred_region
      _
    $region29: #{discriminator_y_forward.1} parent=1 // pred_fallthru
      _
    // Predicated region
    $region30: #{discriminator_y_forward.1} parent=1 // pred_check
      _
    $region31: #{discriminator_y_forward.1} parent=1 // pred_check_branch
      %36 = sbr.rel (0) target = $region33
    $region32: #{discriminator_y_forward.1} parent=1 // pred_region
      _
    $region33: #{discriminator_y_forward.1} parent=1 // pred_fallthru
      _
    // Predicated region
    $region34: #{discriminator_y_forward.1} parent=1 // pred_check
      _
    $region35: #{discriminator_y_forward.1} parent=1 // pred_check_branch
      %38 = sbr.rel (0) target = $region37
    $region36: #{discriminator_y_forward.1} parent=1 // pred_region
      _
    $region37: #{discriminator_y_forward.1} parent=1 // pred_fallthru
      _
    // Predicated region
    $region38: #{discriminator_y_forward.1} parent=1 // pred_check
      _
    $region39: #{discriminator_y_forward.1} parent=1 // pred_check_branch
      %40 = sbr.rel (0) target = $region41
    $region40: #{discriminator_y_forward.1} parent=1 // pred_region
      _
    $region41: #{discriminator_y_forward.1} parent=1 // pred_fallthru
      _
    // Predicated region
    $region42: #{discriminator_y_forward.1} parent=1 // pred_check
      _
    $region43: #{discriminator_y_forward.1} parent=1 // pred_check_branch
      %42 = sbr.rel (0) target = $region45
    $region44: #{discriminator_y_forward.1} parent=1 // pred_region
      _
    $region45: #{discriminator_y_forward.1} parent=1 // pred_fallthru
      _
    // Predicated region
    $region46: #{discriminator_y_forward.1} parent=1 // pred_check
      _
    $region47: #{discriminator_y_forward.1} parent=1 // pred_check_branch
      %44 = sbr.rel (0) target = $region49
    $region48: #{discriminator_y_forward.1} parent=1 // pred_region
      _
    $region49: #{discriminator_y_forward.1} parent=1 // pred_fallthru
      _
    // Predicated region
    $region50: #{discriminator_y_forward.1} parent=1 // pred_check
      _
    $region51: #{discriminator_y_forward.1} parent=1 // pred_check_branch
      %46 = sbr.rel (0) target = $region53
    $region52: #{discriminator_y_forward.1} parent=1 // pred_region
      _
    $region53: #{discriminator_y_forward.1} parent=1 // pred_fallthru
      _
    %v48 = vld [vmem:[%s0] sm:$0xf]
    %v49 = vld [vmem:[%s0 + $0x4] sm:$0x1]
    %v50 = vld [vmem:[%s0 + $0x8] sm:$0xf]
    %v51 = vld [vmem:[%s0 + $0xc] sm:$0x1]
    %v52 = vld [vmem:[%s0 + $0x10] sm:$0xf]
    %v53 = vld [vmem:[%s0 + $0x14] sm:$0x1]
    %v54 = vld [vmem:[%s0 + $0x18] sm:$0xf]
    %v55 = vld [vmem:[%s0 + $0x1c] sm:$0x1]
    %v56 = vld [vmem:[%s0 + $0x20] sm:$0xf]
    %v57 = vld [vmem:[%s0 + $0x24] sm:$0x1]
    %v58 = vld [vmem:[%s0 + $0x28] sm:$0xf]
    %v59 = vld [vmem:[%s0 + $0x2c] sm:$0x1]
    %v60 = vld [vmem:[%s0 + $0x30] sm:$0xf]
    %v61 = vld [vmem:[%s0 + $0x34] sm:$0x1]
    %v62 = vld [vmem:[%s0 + $0x38] sm:$0xf]
    %v63 = vld [vmem:[%s0 + $0x3c] sm:$0x1]
    %v64 = vld [vmem:[%s0 + $0x40] sm:$0xf]
    %v65 = vld [vmem:[%s0 + $0x44] sm:$0x1]
    %v66 = vld [vmem:[%s0 + $0x48] sm:$0xf]
    %v67 = vld [vmem:[%s0 + $0x4c] sm:$0x1]
    %v68 = vld [vmem:[%s0 + $0x50] sm:$0xf]
    %v69 = vld [vmem:[%s0 + $0x54] sm:$0x1]
    %v70 = vld [vmem:[%s0 + $0x58] sm:$0xf]
    %v71 = vld [vmem:[%s0 + $0x5c] sm:$0x1]
    %v72 = vld [vmem:[%s0 + $0x60] sm:$0xf]
    %v73 = vld [vmem:[%s0 + $0x64] sm:$0x1]
    %v74 = vld [vmem:[%s0 + $0x68] sm:$0xf]
    %v75 = vld [vmem:[%s0 + $0x6c] sm:$0x1]
    %v76 = vld [vmem:[%s0 + $0x70] sm:$0xf]
    %v77 = vld [vmem:[%s0 + $0x74] sm:$0x1]
    %v78 = vld [vmem:[%s0 + $0x78] sm:$0xf]
    %v79 = vld [vmem:[%s0 + $0x7c] sm:$0x1]
    %v80 = vld [vmem:[%s0 + $0x80] sm:$0xf]
    %v81 = vld [vmem:[%s0 + $0x84] sm:$0x1]
    %v82 = vld [vmem:[%s0 + $0x88] sm:$0xf]
    %v83 = vld [vmem:[%s0 + $0x8c] sm:$0x1]
    %v84 = vld [vmem:[%s0 + $0x90] sm:$0xf]
    %v85 = vld [vmem:[%s0 + $0x94] sm:$0x1]
    %v86 = vld [vmem:[%s0 + $0x98] sm:$0xf]
    %v87 = vld [vmem:[%s0 + $0x9c] sm:$0x1]
    %v88 = vld [vmem:[%s0 + $0xa0] sm:$0xf]
    %v89 = vld [vmem:[%s0 + $0xa4] sm:$0x1]
    %v90 = vld [vmem:[%s0 + $0xa8] sm:$0xf]
    %v91 = vld [vmem:[%s0 + $0xac] sm:$0x1]
    %v92 = vld [vmem:[%s0 + $0xb0] sm:$0xf]
    %v93 = vld [vmem:[%s0 + $0xb4] sm:$0x1]
    %v94 = vld [vmem:[%s0 + $0xb8] sm:$0xf]
    %v95 = vld [vmem:[%s0 + $0xbc] sm:$0x1]
    %v96 = vld [vmem:[%s0 + $0xc0] sm:$0xf]
    %v97 = vld [vmem:[%s0 + $0xc4] sm:$0x1]
    %v98 = vld [vmem:[%s0 + $0xc8] sm:$0xf]
    %v99 = vld [vmem:[%s0 + $0xcc] sm:$0x1]
    %v100 = vld [vmem:[%s0 + $0xd0] sm:$0xf]
    %v101 = vld [vmem:[%s0 + $0xd4] sm:$0x1]
    %v102 = vld [vmem:[%s0 + $0xd8] sm:$0xf]
    %v103 = vld [vmem:[%s0 + $0xdc] sm:$0x1]
    %v104 = vld [vmem:[%s0 + $0xe0] sm:$0xf]
    %v105 = vld [vmem:[%s0 + $0xe4] sm:$0x1]
    %v106 = vld [vmem:[%s0 + $0xe8] sm:$0xf]
    %v107 = vld [vmem:[%s0 + $0xec] sm:$0x1]
    %v108 = vld [vmem:[%s0 + $0xf0] sm:$0xf]
    %v109 = vld [vmem:[%s0 + $0xf4] sm:$0x1]
    %v110 = vld [vmem:[%s0 + $0xf8] sm:$0xf]
    %v111 = vld [vmem:[%s0 + $0xfc] sm:$0x1]
    %v112 = vld [vmem:[%s0 + $0x100] sm:$0xf]
    %v113 = vld [vmem:[%s0 + $0x104] sm:$0x1]
    %v114 = vld [vmem:[%s0 + $0x108] sm:$0xf]
    %v115 = vld [vmem:[%s0 + $0x10c] sm:$0x1]
    %v116 = vld [vmem:[%s0 + $0x110] sm:$0xf]
    %v117 = vld [vmem:[%s0 + $0x114] sm:$0x1]
    %v118 = vld [vmem:[%s0 + $0x118] sm:$0xf]
    %v119 = vld [vmem:[%s0 + $0x11c] sm:$0x1]
    %v120 = vld [vmem:[%s1] sm:$0xf]
    %v121 = vld [vmem:[%s1 + $0x4] sm:$0xf]
    %v122 = vld [vmem:[%s1 + $0x8] sm:$0xf]
    %v123 = vld [vmem:[%s1 + $0xc] sm:$0xf]
    %v124 = vld [vmem:[%s1 + $0x10] sm:$0xf]
    %v125 = vld [vmem:[%s1 + $0x14] sm:$0xf]
    %v126 = vld [vmem:[%s2] sm:$0x1]
    %v159 = vunpack.c.l.b16 %v48
    %v160 = vunpack.c.l.b16 %v49
    %v161 = vunpack.c.l.b16 %v52
    %v162 = vunpack.c.l.b16 %v53
    %v163 = vunpack.c.l.b16 %v56
    %v164 = vunpack.c.l.b16 %v57
    %v165 = vunpack.c.l.b16 %v60
    %v166 = vunpack.c.l.b16 %v61
    %v167 = vunpack.c.l.b16 %v64
    %v168 = vunpack.c.l.b16 %v65
    %v169 = vunpack.c.l.b16 %v68
    %v170 = vunpack.c.l.b16 %v69
    %v171 = vunpack.c.l.b16 %v72
    %v172 = vunpack.c.l.b16 %v73
    %v173 = vunpack.c.l.b16 %v76
    %v174 = vunpack.c.l.b16 %v77
    %v175 = vunpack.c.l.b16 %v84
    %v176 = vunpack.c.l.b16 %v85
    %v177 = vunpack.c.l.b16 %v88
    %v178 = vunpack.c.l.b16 %v89
    %v179 = vunpack.c.l.b16 %v92
    %v180 = vunpack.c.l.b16 %v93
    %v181 = vunpack.c.l.b16 %v96
    %v182 = vunpack.c.l.b16 %v97
    %v183 = vunpack.c.l.b16 %v100
    %v184 = vunpack.c.l.b16 %v101
    %v185 = vunpack.c.l.b16 %v104
    %v186 = vunpack.c.l.b16 %v105
    %v187 = vunpack.c.l.b16 %v108
    %v188 = vunpack.c.l.b16 %v109
    %v189 = vunpack.c.l.b16 %v112
    %v190 = vunpack.c.l.b16 %v113
    %v191 = vpack.c.b16 %v160, %v159
    %v192 = vpack.c.b16 %v162, %v161
    %v193 = vpack.c.b16 %v164, %v163
    %v194 = vpack.c.b16 %v166, %v165
    %v195 = vpack.c.b16 %v168, %v167
    %v196 = vpack.c.b16 %v170, %v169
    %v197 = vpack.c.b16 %v172, %v171
    %v198 = vpack.c.b16 %v174, %v173
    %v199 = vpack.c.b16 %v176, %v175
    %v200 = vpack.c.b16 %v178, %v177
    %v201 = vpack.c.b16 %v180, %v179
    %v202 = vpack.c.b16 %v182, %v181
    %v203 = vpack.c.b16 %v184, %v183
    %v204 = vpack.c.b16 %v186, %v185
    %v205 = vpack.c.b16 %v188, %v187
    %v206 = vpack.c.b16 %v190, %v189
    %v208 = vshrl.u32 %v191, 16
    %v210 = vshll.u32 %v191, 16
    %v212 = vrot.slane %v210, 1
    %v213 = vor.u32 %v208, %v212
    %v215 = vshrl.u32 %v192, 16
    %v217 = vshll.u32 %v192, 16
    %v219 = vrot.slane %v217, 1
    %v220 = vor.u32 %v215, %v219
    %v222 = vshrl.u32 %v193, 16
    %v224 = vshll.u32 %v193, 16
    %v226 = vrot.slane %v224, 1
    %v227 = vor.u32 %v222, %v226
    %v229 = vshrl.u32 %v194, 16
    %v231 = vshll.u32 %v194, 16
    %v233 = vrot.slane %v231, 1
    %v234 = vor.u32 %v229, %v233
    %v236 = vshrl.u32 %v195, 16
    %v238 = vshll.u32 %v195, 16
    %v240 = vrot.slane %v238, 1
    %v241 = vor.u32 %v236, %v240
    %v243 = vshrl.u32 %v196, 16
    %v245 = vshll.u32 %v196, 16
    %v247 = vrot.slane %v245, 1
    %v248 = vor.u32 %v243, %v247
    %v250 = vshrl.u32 %v197, 16
    %v252 = vshll.u32 %v197, 16
    %v254 = vrot.slane %v252, 1
    %v255 = vor.u32 %v250, %v254
    %v257 = vshrl.u32 %v198, 16
    %v259 = vshll.u32 %v198, 16
    %v261 = vrot.slane %v259, 1
    %v262 = vor.u32 %v257, %v261
    %v264 = vshrl.u32 %v199, 16
    %v266 = vshll.u32 %v199, 16
    %v268 = vrot.slane %v266, 1
    %v269 = vor.u32 %v264, %v268
    %v271 = vshrl.u32 %v200, 16
    %v273 = vshll.u32 %v200, 16
    %v275 = vrot.slane %v273, 1
    %v276 = vor.u32 %v271, %v275
    %v278 = vshrl.u32 %v201, 16
    %v280 = vshll.u32 %v201, 16
    %v282 = vrot.slane %v280, 1
    %v283 = vor.u32 %v278, %v282
    %v285 = vshrl.u32 %v202, 16
    %v287 = vshll.u32 %v202, 16
    %v289 = vrot.slane %v287, 1
    %v290 = vor.u32 %v285, %v289
    %v292 = vshrl.u32 %v203, 16
    %v294 = vshll.u32 %v203, 16
    %v296 = vrot.slane %v294, 1
    %v297 = vor.u32 %v292, %v296
    %v299 = vshrl.u32 %v204, 16
    %v301 = vshll.u32 %v204, 16
    %v303 = vrot.slane %v301, 1
    %v304 = vor.u32 %v299, %v303
    %v306 = vshrl.u32 %v205, 16
    %v308 = vshll.u32 %v205, 16
    %v310 = vrot.slane %v308, 1
    %v311 = vor.u32 %v306, %v310
    %v313 = vshrl.u32 %v206, 16
    %v315 = vshll.u32 %v206, 16
    %v317 = vrot.slane %v315, 1
    %v318 = vor.u32 %v313, %v317
    %319 = vrot.lane.b32.xlu0 %v213, 6
    %v320 = vpop.permute.xlu0 %319
    %321 = vrot.lane.b32.xlu0 %v220, 6
    %v322 = vpop.permute.xlu0 %321
    %323 = vrot.lane.b32.xlu0 %v227, 6
    %v324 = vpop.permute.xlu0 %323
    %325 = vrot.lane.b32.xlu0 %v234, 6
    %v326 = vpop.permute.xlu0 %325
    %327 = vrot.lane.b32.xlu0 %v241, 6
    %v328 = vpop.permute.xlu0 %327
    %329 = vrot.lane.b32.xlu0 %v248, 6
    %v330 = vpop.permute.xlu0 %329
    %331 = vrot.lane.b32.xlu0 %v255, 6
    %v332 = vpop.permute.xlu0 %331
    %333 = vrot.lane.b32.xlu0 %v262, 6
    %v334 = vpop.permute.xlu0 %333
    %335 = vrot.lane.b32.xlu0 %v269, 6
    %v336 = vpop.permute.xlu0 %335
    %337 = vrot.lane.b32.xlu0 %v276, 6
    %v338 = vpop.permute.xlu0 %337
    %339 = vrot.lane.b32.xlu0 %v283, 6
    %v340 = vpop.permute.xlu0 %339
    %341 = vrot.lane.b32.xlu0 %v290, 6
    %v342 = vpop.permute.xlu0 %341
    %343 = vrot.lane.b32.xlu0 %v297, 6
    %v344 = vpop.permute.xlu0 %343
    %345 = vrot.lane.b32.xlu0 %v304, 6
    %v346 = vpop.permute.xlu0 %345
    %347 = vrot.lane.b32.xlu0 %v311, 6
    %v348 = vpop.permute.xlu0 %347
    %349 = vrot.lane.b32.xlu0 %v318, 6
    %v350 = vpop.permute.xlu0 %349
    %v367 = vunpack.c.l.b16 %v50
    %v368 = vunpack.c.l.b16 %v54
    %v369 = vunpack.c.l.b16 %v58
    %v370 = vunpack.c.l.b16 %v62
    %v371 = vunpack.c.l.b16 %v66
    %v372 = vunpack.c.l.b16 %v70
    %v373 = vunpack.c.l.b16 %v74
    %v374 = vunpack.c.l.b16 %v78
    %v375 = vunpack.c.l.b16 %v86
    %v376 = vunpack.c.l.b16 %v90
    %v377 = vunpack.c.l.b16 %v94
    %v378 = vunpack.c.l.b16 %v98
    %v379 = vunpack.c.l.b16 %v102
    %v380 = vunpack.c.l.b16 %v106
    %v381 = vunpack.c.l.b16 %v110
    %v382 = vunpack.c.l.b16 %v114
    %v383 = vpack.c.b16 %v367, %v367
    %v384 = vpack.c.b16 %v368, %v368
    %v385 = vpack.c.b16 %v369, %v369
    %v386 = vpack.c.b16 %v370, %v370
    %v387 = vpack.c.b16 %v371, %v371
    %v388 = vpack.c.b16 %v372, %v372
    %v389 = vpack.c.b16 %v373, %v373
    %v390 = vpack.c.b16 %v374, %v374
    %v391 = vpack.c.b16 %v375, %v375
    %v392 = vpack.c.b16 %v376, %v376
    %v393 = vpack.c.b16 %v377, %v377
    %v394 = vpack.c.b16 %v378, %v378
    %v395 = vpack.c.b16 %v379, %v379
    %v396 = vpack.c.b16 %v380, %v380
    %v397 = vpack.c.b16 %v381, %v381
    %v398 = vpack.c.b16 %v382, %v382
    %399 = vrot.lane.b32.xlu0 %v383, 12
    %v400 = vpop.permute.xlu0 %399
    %401 = vrot.lane.b32.xlu0 %v384, 12
    %v402 = vpop.permute.xlu0 %401
    %403 = vrot.lane.b32.xlu0 %v385, 12
    %v404 = vpop.permute.xlu0 %403
    %405 = vrot.lane.b32.xlu0 %v386, 12
    %v406 = vpop.permute.xlu0 %405
    %407 = vrot.lane.b32.xlu0 %v387, 12
    %v408 = vpop.permute.xlu0 %407
    %409 = vrot.lane.b32.xlu0 %v388, 12
    %v410 = vpop.permute.xlu0 %409
    %411 = vrot.lane.b32.xlu0 %v389, 12
    %v412 = vpop.permute.xlu0 %411
    %413 = vrot.lane.b32.xlu0 %v390, 12
    %v414 = vpop.permute.xlu0 %413
    %415 = vrot.lane.b32.xlu0 %v391, 12
    %v416 = vpop.permute.xlu0 %415
    %417 = vrot.lane.b32.xlu0 %v392, 12
    %v418 = vpop.permute.xlu0 %417
    %419 = vrot.lane.b32.xlu0 %v393, 12
    %v420 = vpop.permute.xlu0 %419
    %421 = vrot.lane.b32.xlu0 %v394, 12
    %v422 = vpop.permute.xlu0 %421
    %423 = vrot.lane.b32.xlu0 %v395, 12
    %v424 = vpop.permute.xlu0 %423
    %425 = vrot.lane.b32.xlu0 %v396, 12
    %v426 = vpop.permute.xlu0 %425
    %427 = vrot.lane.b32.xlu0 %v397, 12
    %v428 = vpop.permute.xlu0 %427
    %429 = vrot.lane.b32.xlu0 %v398, 12
    %v430 = vpop.permute.xlu0 %429
    %v447 = vunpack.c.l.b16 %v51
    %v448 = vunpack.c.l.b16 %v55
    %v449 = vunpack.c.l.b16 %v59
    %v450 = vunpack.c.l.b16 %v63
    %v451 = vunpack.c.l.b16 %v67
    %v452 = vunpack.c.l.b16 %v71
    %v453 = vunpack.c.l.b16 %v75
    %v454 = vunpack.c.l.b16 %v79
    %v455 = vunpack.c.l.b16 %v87
    %v456 = vunpack.c.l.b16 %v91
    %v457 = vunpack.c.l.b16 %v95
    %v458 = vunpack.c.l.b16 %v99
    %v459 = vunpack.c.l.b16 %v103
    %v460 = vunpack.c.l.b16 %v107
    %v461 = vunpack.c.l.b16 %v111
    %v462 = vunpack.c.l.b16 %v115
    %v463 = vpack.c.b16 %v447, %v367
    %v464 = vpack.c.b16 %v448, %v368
    %v465 = vpack.c.b16 %v449, %v369
    %v466 = vpack.c.b16 %v450, %v370
    %v467 = vpack.c.b16 %v451, %v371
    %v468 = vpack.c.b16 %v452, %v372
    %v469 = vpack.c.b16 %v453, %v373
    %v470 = vpack.c.b16 %v454, %v374
    %v471 = vpack.c.b16 %v455, %v375
    %v472 = vpack.c.b16 %v456, %v376
    %v473 = vpack.c.b16 %v457, %v377
    %v474 = vpack.c.b16 %v458, %v378
    %v475 = vpack.c.b16 %v459, %v379
    %v476 = vpack.c.b16 %v460, %v380
    %v477 = vpack.c.b16 %v461, %v381
    %v478 = vpack.c.b16 %v462, %v382
    %v480 = vshrl.u32 %v463, 16
    %v482 = vshll.u32 %v463, 16
    %v484 = vrot.slane %v482, 1
    %v485 = vor.u32 %v480, %v484
    %v487 = vshrl.u32 %v464, 16
    %v489 = vshll.u32 %v464, 16
    %v491 = vrot.slane %v489, 1
    %v492 = vor.u32 %v487, %v491
    %v494 = vshrl.u32 %v465, 16
    %v496 = vshll.u32 %v465, 16
    %v498 = vrot.slane %v496, 1
    %v499 = vor.u32 %v494, %v498
    %v501 = vshrl.u32 %v466, 16
    %v503 = vshll.u32 %v466, 16
    %v505 = vrot.slane %v503, 1
    %v506 = vor.u32 %v501, %v505
    %v508 = vshrl.u32 %v467, 16
    %v510 = vshll.u32 %v467, 16
    %v512 = vrot.slane %v510, 1
    %v513 = vor.u32 %v508, %v512
    %v515 = vshrl.u32 %v468, 16
    %v517 = vshll.u32 %v468, 16
    %v519 = vrot.slane %v517, 1
    %v520 = vor.u32 %v515, %v519
    %v522 = vshrl.u32 %v469, 16
    %v524 = vshll.u32 %v469, 16
    %v526 = vrot.slane %v524, 1
    %v527 = vor.u32 %v522, %v526
    %v529 = vshrl.u32 %v470, 16
    %v531 = vshll.u32 %v470, 16
    %v533 = vrot.slane %v531, 1
    %v534 = vor.u32 %v529, %v533
    %v536 = vshrl.u32 %v471, 16
    %v538 = vshll.u32 %v471, 16
    %v540 = vrot.slane %v538, 1
    %v541 = vor.u32 %v536, %v540
    %v543 = vshrl.u32 %v472, 16
    %v545 = vshll.u32 %v472, 16
    %v547 = vrot.slane %v545, 1
    %v548 = vor.u32 %v543, %v547
    %v550 = vshrl.u32 %v473, 16
    %v552 = vshll.u32 %v473, 16
    %v554 = vrot.slane %v552, 1
    %v555 = vor.u32 %v550, %v554
    %v557 = vshrl.u32 %v474, 16
    %v559 = vshll.u32 %v474, 16
    %v561 = vrot.slane %v559, 1
    %v562 = vor.u32 %v557, %v561
    %v564 = vshrl.u32 %v475, 16
    %v566 = vshll.u32 %v475, 16
    %v568 = vrot.slane %v566, 1
    %v569 = vor.u32 %v564, %v568
    %v571 = vshrl.u32 %v476, 16
    %v573 = vshll.u32 %v476, 16
    %v575 = vrot.slane %v573, 1
    %v576 = vor.u32 %v571, %v575
    %v578 = vshrl.u32 %v477, 16
    %v580 = vshll.u32 %v477, 16
    %v582 = vrot.slane %v580, 1
    %v583 = vor.u32 %v578, %v582
    %v585 = vshrl.u32 %v478, 16
    %v587 = vshll.u32 %v478, 16
    %v589 = vrot.slane %v587, 1
    %v590 = vor.u32 %v585, %v589
    %591 = vrot.lane.b32.xlu0 %v485, 18
    %v592 = vpop.permute.xlu0 %591
    %593 = vrot.lane.b32.xlu0 %v492, 18
    %v594 = vpop.permute.xlu0 %593
    %595 = vrot.lane.b32.xlu0 %v499, 18
    %v596 = vpop.permute.xlu0 %595
    %597 = vrot.lane.b32.xlu0 %v506, 18
    %v598 = vpop.permute.xlu0 %597
    %599 = vrot.lane.b32.xlu0 %v513, 18
    %v600 = vpop.permute.xlu0 %599
    %601 = vrot.lane.b32.xlu0 %v520, 18
    %v602 = vpop.permute.xlu0 %601
    %603 = vrot.lane.b32.xlu0 %v527, 18
    %v604 = vpop.permute.xlu0 %603
    %605 = vrot.lane.b32.xlu0 %v534, 18
    %v606 = vpop.permute.xlu0 %605
    %607 = vrot.lane.b32.xlu0 %v541, 18
    %v608 = vpop.permute.xlu0 %607
    %609 = vrot.lane.b32.xlu0 %v548, 18
    %v610 = vpop.permute.xlu0 %609
    %611 = vrot.lane.b32.xlu0 %v555, 18
    %v612 = vpop.permute.xlu0 %611
    %613 = vrot.lane.b32.xlu0 %v562, 18
    %v614 = vpop.permute.xlu0 %613
    %615 = vrot.lane.b32.xlu0 %v569, 18
    %v616 = vpop.permute.xlu0 %615
    %617 = vrot.lane.b32.xlu0 %v576, 18
    %v618 = vpop.permute.xlu0 %617
    %619 = vrot.lane.b32.xlu0 %v583, 18
    %v620 = vpop.permute.xlu0 %619
    %621 = vrot.lane.b32.xlu0 %v590, 18
    %v622 = vpop.permute.xlu0 %621
    %v625 = vunpack.c.l.b16 %v80
    %v626 = vunpack.c.l.b16 %v116
    %v627 = vpack.c.b16 %v161, %v161
    %v628 = vpack.c.b16 %v163, %v163
    %v629 = vpack.c.b16 %v165, %v165
    %v630 = vpack.c.b16 %v167, %v167
    %v631 = vpack.c.b16 %v169, %v169
    %v632 = vpack.c.b16 %v171, %v171
    %v633 = vpack.c.b16 %v173, %v173
    %v634 = vpack.c.b16 %v625, %v625
    %v635 = vpack.c.b16 %v177, %v177
    %v636 = vpack.c.b16 %v179, %v179
    %v637 = vpack.c.b16 %v181, %v181
    %v638 = vpack.c.b16 %v183, %v183
    %v639 = vpack.c.b16 %v185, %v185
    %v640 = vpack.c.b16 %v187, %v187
    %v641 = vpack.c.b16 %v189, %v189
    %v642 = vpack.c.b16 %v626, %v626
    %643 = vrot.lane.b32.xlu0 %v627, 24
    %v644 = vpop.permute.xlu0 %643
    %645 = vrot.lane.b32.xlu0 %v628, 24
    %v646 = vpop.permute.xlu0 %645
    %647 = vrot.lane.b32.xlu0 %v629, 24
    %v648 = vpop.permute.xlu0 %647
    %649 = vrot.lane.b32.xlu0 %v630, 24
    %v650 = vpop.permute.xlu0 %649
    %651 = vrot.lane.b32.xlu0 %v631, 24
    %v652 = vpop.permute.xlu0 %651
    %653 = vrot.lane.b32.xlu0 %v632, 24
    %v654 = vpop.permute.xlu0 %653
    %655 = vrot.lane.b32.xlu0 %v633, 24
    %v656 = vpop.permute.xlu0 %655
    %657 = vrot.lane.b32.xlu0 %v634, 24
    %v658 = vpop.permute.xlu0 %657
    %659 = vrot.lane.b32.xlu0 %v635, 24
    %v660 = vpop.permute.xlu0 %659
    %661 = vrot.lane.b32.xlu0 %v636, 24
    %v662 = vpop.permute.xlu0 %661
    %663 = vrot.lane.b32.xlu0 %v637, 24
    %v664 = vpop.permute.xlu0 %663
    %665 = vrot.lane.b32.xlu0 %v638, 24
    %v666 = vpop.permute.xlu0 %665
    %667 = vrot.lane.b32.xlu0 %v639, 24
    %v668 = vpop.permute.xlu0 %667
    %669 = vrot.lane.b32.xlu0 %v640, 24
    %v670 = vpop.permute.xlu0 %669
    %671 = vrot.lane.b32.xlu0 %v641, 24
    %v672 = vpop.permute.xlu0 %671
    %673 = vrot.lane.b32.xlu0 %v642, 24
    %v674 = vpop.permute.xlu0 %673
    %v677 = vunpack.c.l.b16 %v81
    %v678 = vunpack.c.l.b16 %v117
    %v679 = vpack.c.b16 %v677, %v625
    %v680 = vpack.c.b16 %v678, %v626
    %v682 = vshrl.u32 %v679, 16
    %v684 = vshll.u32 %v679, 16
    %v686 = vrot.slane %v684, 1
    %v687 = vor.u32 %v682, %v686
    %v689 = vshrl.u32 %v680, 16
    %v691 = vshll.u32 %v680, 16
    %v693 = vrot.slane %v691, 1
    %v694 = vor.u32 %v689, %v693
    %695 = vrot.lane.b32.xlu0 %v220, 30
    %v696 = vpop.permute.xlu0 %695
    %697 = vrot.lane.b32.xlu0 %v227, 30
    %v698 = vpop.permute.xlu0 %697
    %699 = vrot.lane.b32.xlu0 %v234, 30
    %v700 = vpop.permute.xlu0 %699
    %701 = vrot.lane.b32.xlu0 %v241, 30
    %v702 = vpop.permute.xlu0 %701
    %703 = vrot.lane.b32.xlu0 %v248, 30
    %v704 = vpop.permute.xlu0 %703
    %705 = vrot.lane.b32.xlu0 %v255, 30
    %v706 = vpop.permute.xlu0 %705
    %707 = vrot.lane.b32.xlu0 %v262, 30
    %v708 = vpop.permute.xlu0 %707
    %709 = vrot.lane.b32.xlu0 %v687, 30
    %v710 = vpop.permute.xlu0 %709
    %711 = vrot.lane.b32.xlu0 %v276, 30
    %v712 = vpop.permute.xlu0 %711
    %713 = vrot.lane.b32.xlu0 %v283, 30
    %v714 = vpop.permute.xlu0 %713
    %715 = vrot.lane.b32.xlu0 %v290, 30
    %v716 = vpop.permute.xlu0 %715
    %717 = vrot.lane.b32.xlu0 %v297, 30
    %v718 = vpop.permute.xlu0 %717
    %719 = vrot.lane.b32.xlu0 %v304, 30
    %v720 = vpop.permute.xlu0 %719
    %721 = vrot.lane.b32.xlu0 %v311, 30
    %v722 = vpop.permute.xlu0 %721
    %723 = vrot.lane.b32.xlu0 %v318, 30
    %v724 = vpop.permute.xlu0 %723
    %725 = vrot.lane.b32.xlu0 %v694, 30
    %v726 = vpop.permute.xlu0 %725
    %v729 = vunpack.c.l.b16 %v82
    %v730 = vunpack.c.l.b16 %v118
    %v731 = vpack.c.b16 %v729, %v729
    %v732 = vpack.c.b16 %v730, %v730
    %733 = vrot.lane.b32.xlu0 %v384, 36
    %v734 = vpop.permute.xlu0 %733
    %735 = vrot.lane.b32.xlu0 %v385, 36
    %v736 = vpop.permute.xlu0 %735
    %737 = vrot.lane.b32.xlu0 %v386, 36
    %v738 = vpop.permute.xlu0 %737
    %739 = vrot.lane.b32.xlu0 %v387, 36
    %v740 = vpop.permute.xlu0 %739
    %741 = vrot.lane.b32.xlu0 %v388, 36
    %v742 = vpop.permute.xlu0 %741
    %743 = vrot.lane.b32.xlu0 %v389, 36
    %v744 = vpop.permute.xlu0 %743
    %745 = vrot.lane.b32.xlu0 %v390, 36
    %v746 = vpop.permute.xlu0 %745
    %747 = vrot.lane.b32.xlu0 %v731, 36
    %v748 = vpop.permute.xlu0 %747
    %749 = vrot.lane.b32.xlu0 %v392, 36
    %v750 = vpop.permute.xlu0 %749
    %751 = vrot.lane.b32.xlu0 %v393, 36
    %v752 = vpop.permute.xlu0 %751
    %753 = vrot.lane.b32.xlu0 %v394, 36
    %v754 = vpop.permute.xlu0 %753
    %755 = vrot.lane.b32.xlu0 %v395, 36
    %v756 = vpop.permute.xlu0 %755
    %757 = vrot.lane.b32.xlu0 %v396, 36
    %v758 = vpop.permute.xlu0 %757
    %759 = vrot.lane.b32.xlu0 %v397, 36
    %v760 = vpop.permute.xlu0 %759
    %761 = vrot.lane.b32.xlu0 %v398, 36
    %v762 = vpop.permute.xlu0 %761
    %763 = vrot.lane.b32.xlu0 %v732, 36
    %v764 = vpop.permute.xlu0 %763
    %v767 = vunpack.c.l.b16 %v83
    %v768 = vunpack.c.l.b16 %v119
    %v769 = vpack.c.b16 %v767, %v729
    %v770 = vpack.c.b16 %v768, %v730
    %v772 = vshrl.u32 %v769, 16
    %v774 = vshll.u32 %v769, 16
    %v776 = vrot.slane %v774, 1
    %v777 = vor.u32 %v772, %v776
    %v779 = vshrl.u32 %v770, 16
    %v781 = vshll.u32 %v770, 16
    %v783 = vrot.slane %v781, 1
    %v784 = vor.u32 %v779, %v783
    %785 = vrot.lane.b32.xlu0 %v492, 42
    %v786 = vpop.permute.xlu0 %785
    %787 = vrot.lane.b32.xlu0 %v499, 42
    %v788 = vpop.permute.xlu0 %787
    %789 = vrot.lane.b32.xlu0 %v506, 42
    %v790 = vpop.permute.xlu0 %789
    %791 = vrot.lane.b32.xlu0 %v513, 42
    %v792 = vpop.permute.xlu0 %791
    %793 = vrot.lane.b32.xlu0 %v520, 42
    %v794 = vpop.permute.xlu0 %793
    %795 = vrot.lane.b32.xlu0 %v527, 42
    %v796 = vpop.permute.xlu0 %795
    %797 = vrot.lane.b32.xlu0 %v534, 42
    %v798 = vpop.permute.xlu0 %797
    %799 = vrot.lane.b32.xlu0 %v777, 42
    %v800 = vpop.permute.xlu0 %799
    %801 = vrot.lane.b32.xlu0 %v548, 42
    %v802 = vpop.permute.xlu0 %801
    %803 = vrot.lane.b32.xlu0 %v555, 42
    %v804 = vpop.permute.xlu0 %803
    %805 = vrot.lane.b32.xlu0 %v562, 42
    %v806 = vpop.permute.xlu0 %805
    %807 = vrot.lane.b32.xlu0 %v569, 42
    %v808 = vpop.permute.xlu0 %807
    %809 = vrot.lane.b32.xlu0 %v576, 42
    %v810 = vpop.permute.xlu0 %809
    %811 = vrot.lane.b32.xlu0 %v583, 42
    %v812 = vpop.permute.xlu0 %811
    %813 = vrot.lane.b32.xlu0 %v590, 42
    %v814 = vpop.permute.xlu0 %813
    %815 = vrot.lane.b32.xlu0 %v784, 42
    %v816 = vpop.permute.xlu0 %815
    %vm817 = vcmask 48128
    %v820 = vsel %vm817, %v48, %v320
    %v823 = vsel %vm817, %v52, %v322
    %v826 = vsel %vm817, %v56, %v324
    %v829 = vsel %vm817, %v60, %v326
    %v832 = vsel %vm817, %v64, %v328
    %v835 = vsel %vm817, %v68, %v330
    %v838 = vsel %vm817, %v72, %v332
    %v841 = vsel %vm817, %v76, %v334
    %v844 = vsel %vm817, %v84, %v336
    %v847 = vsel %vm817, %v88, %v338
    %v850 = vsel %vm817, %v92, %v340
    %v853 = vsel %vm817, %v96, %v342
    %v856 = vsel %vm817, %v100, %v344
    %v859 = vsel %vm817, %v104, %v346
    %v862 = vsel %vm817, %v108, %v348
    %v865 = vsel %vm817, %v112, %v350
    %vm866 = vcmask 97280
    %v868 = vsel %vm866, %v820, %v400
    %v870 = vsel %vm866, %v823, %v402
    %v872 = vsel %vm866, %v826, %v404
    %v874 = vsel %vm866, %v829, %v406
    %v876 = vsel %vm866, %v832, %v408
    %v878 = vsel %vm866, %v835, %v410
    %v880 = vsel %vm866, %v838, %v412
    %v882 = vsel %vm866, %v841, %v414
    %v884 = vsel %vm866, %v844, %v416
    %v886 = vsel %vm866, %v847, %v418
    %v888 = vsel %vm866, %v850, %v420
    %v890 = vsel %vm866, %v853, %v422
    %v892 = vsel %vm866, %v856, %v424
    %v894 = vsel %vm866, %v859, %v426
    %v896 = vsel %vm866, %v862, %v428
    %v898 = vsel %vm866, %v865, %v430
    %vm899 = vcmask 146432
    %v901 = vsel %vm899, %v868, %v592
    %v903 = vsel %vm899, %v870, %v594
    %v905 = vsel %vm899, %v872, %v596
    %v907 = vsel %vm899, %v874, %v598
    %v909 = vsel %vm899, %v876, %v600
    %v911 = vsel %vm899, %v878, %v602
    %v913 = vsel %vm899, %v880, %v604
    %v915 = vsel %vm899, %v882, %v606
    %v917 = vsel %vm899, %v884, %v608
    %v919 = vsel %vm899, %v886, %v610
    %v921 = vsel %vm899, %v888, %v612
    %v923 = vsel %vm899, %v890, %v614
    %v925 = vsel %vm899, %v892, %v616
    %v927 = vsel %vm899, %v894, %v618
    %v929 = vsel %vm899, %v896, %v620
    %v931 = vsel %vm899, %v898, %v622
    %vm932 = vcmask 195584
    %v934 = vsel %vm932, %v901, %v644
    %v936 = vsel %vm932, %v903, %v646
    %v938 = vsel %vm932, %v905, %v648
    %v940 = vsel %vm932, %v907, %v650
    %v942 = vsel %vm932, %v909, %v652
    %v944 = vsel %vm932, %v911, %v654
    %v946 = vsel %vm932, %v913, %v656
    %v948 = vsel %vm932, %v915, %v658
    %v950 = vsel %vm932, %v917, %v660
    %v952 = vsel %vm932, %v919, %v662
    %v954 = vsel %vm932, %v921, %v664
    %v956 = vsel %vm932, %v923, %v666
    %v958 = vsel %vm932, %v925, %v668
    %v960 = vsel %vm932, %v927, %v670
    %v962 = vsel %vm932, %v929, %v672
    %v964 = vsel %vm932, %v931, %v674
    %vm965 = vcmask 244736
    %v967 = vsel %vm965, %v934, %v696
    %v969 = vsel %vm965, %v936, %v698
    %v971 = vsel %vm965, %v938, %v700
    %v973 = vsel %vm965, %v940, %v702
    %v975 = vsel %vm965, %v942, %v704
    %v977 = vsel %vm965, %v944, %v706
    %v979 = vsel %vm965, %v946, %v708
    %v981 = vsel %vm965, %v948, %v710
    %v983 = vsel %vm965, %v950, %v712
    %v985 = vsel %vm965, %v952, %v714
    %v987 = vsel %vm965, %v954, %v716
    %v989 = vsel %vm965, %v956, %v718
    %v991 = vsel %vm965, %v958, %v720
    %v993 = vsel %vm965, %v960, %v722
    %v995 = vsel %vm965, %v962, %v724
    %v997 = vsel %vm965, %v964, %v726
    %vm998 = vcmask 293888
    %v1000 = vsel %vm998, %v967, %v734
    %v1002 = vsel %vm998, %v969, %v736
    %v1004 = vsel %vm998, %v971, %v738
    %v1006 = vsel %vm998, %v973, %v740
    %v1008 = vsel %vm998, %v975, %v742
    %v1010 = vsel %vm998, %v977, %v744
    %v1012 = vsel %vm998, %v979, %v746
    %v1014 = vsel %vm998, %v981, %v748
    %v1016 = vsel %vm998, %v983, %v750
    %v1018 = vsel %vm998, %v985, %v752
    %v1020 = vsel %vm998, %v987, %v754
    %v1022 = vsel %vm998, %v989, %v756
    %v1024 = vsel %vm998, %v991, %v758
    %v1026 = vsel %vm998, %v993, %v760
    %v1028 = vsel %vm998, %v995, %v762
    %v1030 = vsel %vm998, %v997, %v764
    %vm1031 = vcmask 343040
    %v1033 = vsel %vm1031, %v1000, %v786
    %v1035 = vsel %vm1031, %v1002, %v788
    %v1037 = vsel %vm1031, %v1004, %v790
    %v1039 = vsel %vm1031, %v1006, %v792
    %v1041 = vsel %vm1031, %v1008, %v794
    %v1043 = vsel %vm1031, %v1010, %v796
    %v1045 = vsel %vm1031, %v1012, %v798
    %v1047 = vsel %vm1031, %v1014, %v800
    %v1049 = vsel %vm1031, %v1016, %v802
    %v1051 = vsel %vm1031, %v1018, %v804
    %v1053 = vsel %vm1031, %v1020, %v806
    %v1055 = vsel %vm1031, %v1022, %v808
    %v1057 = vsel %vm1031, %v1024, %v810
    %v1059 = vsel %vm1031, %v1026, %v812
    %v1061 = vsel %vm1031, %v1028, %v814
    %v1063 = vsel %vm1031, %v1030, %v816
    %v1065 = vlaneseq
    %v1066 = vshrl.u32 %v1065, 7
    %v1067 = vsub.s32 0, %v1066
    %v1068 = vrot.slane %v126, %v1067
    %v1076 = vunpack.c.l.b16 %v120
    %v1077 = vunpack.c.l.b16 %v121
    %v1078 = vunpack.c.l.b16 %v122
    %v1079 = vunpack.c.l.b16 %v123
    %v1080 = vunpack.c.l.b16 %v124
    %v1081 = vunpack.c.l.b16 %v125
    %v1082 = vpack.c.b16 %v1077, %v1076
    %v1083 = vpack.c.b16 %v1079, %v1078
    %v1084 = vpack.c.b16 %v1081, %v1080
    %vm1088 = vcmask 392192
    %v1089 = vsel %vm1088, %v1033, 0
    %1091 = vmatprep.subr.bf16.mxu0 0
    %1092 = vmatpush1.bf16.msra.mxu0 %v1082
    %1093 = vmatprep.subr.bf16.mxu0 0
    %1094 = vmatpush1.bf16.msra.mxu0 %v1083
    %1095 = vmatprep.subr.bf16.mxu0 0
    %1096 = vmatpush1.bf16.msra.mxu0 %v1084
    %1097 = vmatprep.subr.bf16.mxu0 0
    %1098 = vmatpush1.bf16.msra.mxu0 0
    %1099 = vmatprep.subr.bf16.mxu0 0
    %1100 = vmatpush1.bf16.msra.mxu0 0
    %1101 = vmatprep.subr.bf16.mxu0 0
    %1102 = vmatpush1.bf16.msra.mxu0 0
    %1103 = vmatprep.subr.bf16.mxu0 0
    %1104 = vmatpush1.bf16.msra.mxu0 0
    %1105 = vmatprep.subr.bf16.mxu0 0
    %1106 = vmatpush1.bf16.msra.mxu0 0
    %1107 = vmatprep.subr.bf16.mxu0 0
    %1108 = vmatpush1.bf16.msra.mxu0 0
    %1109 = vmatprep.subr.bf16.mxu0 0
    %1110 = vmatpush1.bf16.msra.mxu0 0
    %1111 = vmatprep.subr.bf16.mxu0 0
    %1112 = vmatpush1.bf16.msra.mxu0 0
    %1113 = vmatprep.subr.bf16.mxu0 0
    %1114 = vmatpush1.bf16.msra.mxu0 0
    %1115 = vmatprep.subr.bf16.mxu0 0
    %1116 = vmatpush1.bf16.msra.mxu0 0
    %1117 = vmatprep.subr.bf16.mxu0 0
    %1118 = vmatpush1.bf16.msra.mxu0 0
    %1119 = vmatprep.subr.bf16.mxu0 0
    %1120 = vmatpush1.bf16.msra.mxu0 0
    %1121 = vmatprep.subr.bf16.mxu0 0
    %1122 = vmatpush1.bf16.msra.mxu0 0
    %1123 = vmatprep.mubr.bf16.mxu0 0
    %1124 = vmatmul.mubr.bf16.gmra.mrb[0].mxu0 %v1089
    %v1125 = vpop.f32.mrb[0].mxu0
    %v1126 = vadd.f32 %v1068, %v1125
    %v1127 = vpop.f32.mrb[0].mxu0
    %v1128 = vpop.f32.mrb[0].mxu0
    %v1129 = vpop.f32.mrb[0].mxu0
    %1130 = vdwg.mxu0
    %v1131 = vsel %vm1088, %v1035, 0
    %1133 = vmatprep.subr.bf16.mxu0 0
    %1134 = vmatpush1.bf16.msra.mxu0 %v1082
    %1135 = vmatprep.subr.bf16.mxu0 0
    %1136 = vmatpush1.bf16.msra.mxu0 %v1083
    %1137 = vmatprep.subr.bf16.mxu0 0
    %1138 = vmatpush1.bf16.msra.mxu0 %v1084
    %1139 = vmatprep.subr.bf16.mxu0 0
    %1140 = vmatpush1.bf16.msra.mxu0 0
    %1141 = vmatprep.subr.bf16.mxu0 0
    %1142 = vmatpush1.bf16.msra.mxu0 0
    %1143 = vmatprep.subr.bf16.mxu0 0
    %1144 = vmatpush1.bf16.msra.mxu0 0
    %1145 = vmatprep.subr.bf16.mxu0 0
    %1146 = vmatpush1.bf16.msra.mxu0 0
    %1147 = vmatprep.subr.bf16.mxu0 0
    %1148 = vmatpush1.bf16.msra.mxu0 0
    %1149 = vmatprep.subr.bf16.mxu0 0
    %1150 = vmatpush1.bf16.msra.mxu0 0
    %1151 = vmatprep.subr.bf16.mxu0 0
    %1152 = vmatpush1.bf16.msra.mxu0 0
    %1153 = vmatprep.subr.bf16.mxu0 0
    %1154 = vmatpush1.bf16.msra.mxu0 0
    %1155 = vmatprep.subr.bf16.mxu0 0
    %1156 = vmatpush1.bf16.msra.mxu0 0
    %1157 = vmatprep.subr.bf16.mxu0 0
    %1158 = vmatpush1.bf16.msra.mxu0 0
    %1159 = vmatprep.subr.bf16.mxu0 0
    %1160 = vmatpush1.bf16.msra.mxu0 0
    %1161 = vmatprep.subr.bf16.mxu0 0
    %1162 = vmatpush1.bf16.msra.mxu0 0
    %1163 = vmatprep.subr.bf16.mxu0 0
    %1164 = vmatpush1.bf16.msra.mxu0 0
    %1165 = vmatprep.mubr.bf16.mxu0 0
    %1166 = vmatmul.mubr.bf16.gmra.mrb[0].mxu0 %v1131
    %v1167 = vpop.f32.mrb[0].mxu0
    %v1168 = vadd.f32 %v1068, %v1167
    %v1169 = vpop.f32.mrb[0].mxu0
    %v1170 = vpop.f32.mrb[0].mxu0
    %v1171 = vpop.f32.mrb[0].mxu0
    %1172 = vdwg.mxu0
    %v1173 = vsel %vm1088, %v1037, 0
    %1175 = vmatprep.subr.bf16.mxu0 0
    %1176 = vmatpush1.bf16.msra.mxu0 %v1082
    %1177 = vmatprep.subr.bf16.mxu0 0
    %1178 = vmatpush1.bf16.msra.mxu0 %v1083
    %1179 = vmatprep.subr.bf16.mxu0 0
    %1180 = vmatpush1.bf16.msra.mxu0 %v1084
    %1181 = vmatprep.subr.bf16.mxu0 0
    %1182 = vmatpush1.bf16.msra.mxu0 0
    %1183 = vmatprep.subr.bf16.mxu0 0
    %1184 = vmatpush1.bf16.msra.mxu0 0
    %1185 = vmatprep.subr.bf16.mxu0 0
    %1186 = vmatpush1.bf16.msra.mxu0 0
    %1187 = vmatprep.subr.bf16.mxu0 0
    %1188 = vmatpush1.bf16.msra.mxu0 0
    %1189 = vmatprep.subr.bf16.mxu0 0
    %1190 = vmatpush1.bf16.msra.mxu0 0
    %1191 = vmatprep.subr.bf16.mxu0 0
    %1192 = vmatpush1.bf16.msra.mxu0 0
    %1193 = vmatprep.subr.bf16.mxu0 0
    %1194 = vmatpush1.bf16.msra.mxu0 0
    %1195 = vmatprep.subr.bf16.mxu0 0
    %1196 = vmatpush1.bf16.msra.mxu0 0
    %1197 = vmatprep.subr.bf16.mxu0 0
    %1198 = vmatpush1.bf16.msra.mxu0 0
    %1199 = vmatprep.subr.bf16.mxu0 0
    %1200 = vmatpush1.bf16.msra.mxu0 0
    %1201 = vmatprep.subr.bf16.mxu0 0
    %1202 = vmatpush1.bf16.msra.mxu0 0
    %1203 = vmatprep.subr.bf16.mxu0 0
    %1204 = vmatpush1.bf16.msra.mxu0 0
    %1205 = vmatprep.subr.bf16.mxu0 0
    %1206 = vmatpush1.bf16.msra.mxu0 0
    %1207 = vmatprep.mubr.bf16.mxu0 0
    %1208 = vmatmul.mubr.bf16.gmra.mrb[0].mxu0 %v1173
    %v1209 = vpop.f32.mrb[0].mxu0
    %v1210 = vadd.f32 %v1068, %v1209
    %v1211 = vpop.f32.mrb[0].mxu0
    %v1212 = vpop.f32.mrb[0].mxu0
    %v1213 = vpop.f32.mrb[0].mxu0
    %1214 = vdwg.mxu0
    %v1215 = vsel %vm1088, %v1039, 0
    %1217 = vmatprep.subr.bf16.mxu0 0
    %1218 = vmatpush1.bf16.msra.mxu0 %v1082
    %1219 = vmatprep.subr.bf16.mxu0 0
    %1220 = vmatpush1.bf16.msra.mxu0 %v1083
    %1221 = vmatprep.subr.bf16.mxu0 0
    %1222 = vmatpush1.bf16.msra.mxu0 %v1084
    %1223 = vmatprep.subr.bf16.mxu0 0
    %1224 = vmatpush1.bf16.msra.mxu0 0
    %1225 = vmatprep.subr.bf16.mxu0 0
    %1226 = vmatpush1.bf16.msra.mxu0 0
    %1227 = vmatprep.subr.bf16.mxu0 0
    %1228 = vmatpush1.bf16.msra.mxu0 0
    %1229 = vmatprep.subr.bf16.mxu0 0
    %1230 = vmatpush1.bf16.msra.mxu0 0
    %1231 = vmatprep.subr.bf16.mxu0 0
    %1232 = vmatpush1.bf16.msra.mxu0 0
    %1233 = vmatprep.subr.bf16.mxu0 0
    %1234 = vmatpush1.bf16.msra.mxu0 0
    %1235 = vmatprep.subr.bf16.mxu0 0
    %1236 = vmatpush1.bf16.msra.mxu0 0
    %1237 = vmatprep.subr.bf16.mxu0 0
    %1238 = vmatpush1.bf16.msra.mxu0 0
    %1239 = vmatprep.subr.bf16.mxu0 0
    %1240 = vmatpush1.bf16.msra.mxu0 0
    %1241 = vmatprep.subr.bf16.mxu0 0
    %1242 = vmatpush1.bf16.msra.mxu0 0
    %1243 = vmatprep.subr.bf16.mxu0 0
    %1244 = vmatpush1.bf16.msra.mxu0 0
    %1245 = vmatprep.subr.bf16.mxu0 0
    %1246 = vmatpush1.bf16.msra.mxu0 0
    %1247 = vmatprep.subr.bf16.mxu0 0
    %1248 = vmatpush1.bf16.msra.mxu0 0
    %1249 = vmatprep.mubr.bf16.mxu0 0
    %1250 = vmatmul.mubr.bf16.gmra.mrb[0].mxu0 %v1215
    %v1251 = vpop.f32.mrb[0].mxu0
    %v1252 = vadd.f32 %v1068, %v1251
    %v1253 = vpop.f32.mrb[0].mxu0
    %v1254 = vpop.f32.mrb[0].mxu0
    %v1255 = vpop.f32.mrb[0].mxu0
    %1256 = vdwg.mxu0
    %v1257 = vsel %vm1088, %v1041, 0
    %1259 = vmatprep.subr.bf16.mxu0 0
    %1260 = vmatpush1.bf16.msra.mxu0 %v1082
    %1261 = vmatprep.subr.bf16.mxu0 0
    %1262 = vmatpush1.bf16.msra.mxu0 %v1083
    %1263 = vmatprep.subr.bf16.mxu0 0
    %1264 = vmatpush1.bf16.msra.mxu0 %v1084
    %1265 = vmatprep.subr.bf16.mxu0 0
    %1266 = vmatpush1.bf16.msra.mxu0 0
    %1267 = vmatprep.subr.bf16.mxu0 0
    %1268 = vmatpush1.bf16.msra.mxu0 0
    %1269 = vmatprep.subr.bf16.mxu0 0
    %1270 = vmatpush1.bf16.msra.mxu0 0
    %1271 = vmatprep.subr.bf16.mxu0 0
    %1272 = vmatpush1.bf16.msra.mxu0 0
    %1273 = vmatprep.subr.bf16.mxu0 0
    %1274 = vmatpush1.bf16.msra.mxu0 0
    %1275 = vmatprep.subr.bf16.mxu0 0
    %1276 = vmatpush1.bf16.msra.mxu0 0
    %1277 = vmatprep.subr.bf16.mxu0 0
    %1278 = vmatpush1.bf16.msra.mxu0 0
    %1279 = vmatprep.subr.bf16.mxu0 0
    %1280 = vmatpush1.bf16.msra.mxu0 0
    %1281 = vmatprep.subr.bf16.mxu0 0
    %1282 = vmatpush1.bf16.msra.mxu0 0
    %1283 = vmatprep.subr.bf16.mxu0 0
    %1284 = vmatpush1.bf16.msra.mxu0 0
    %1285 = vmatprep.subr.bf16.mxu0 0
    %1286 = vmatpush1.bf16.msra.mxu0 0
    %1287 = vmatprep.subr.bf16.mxu0 0
    %1288 = vmatpush1.bf16.msra.mxu0 0
    %1289 = vmatprep.subr.bf16.mxu0 0
    %1290 = vmatpush1.bf16.msra.mxu0 0
    %1291 = vmatprep.mubr.bf16.mxu0 0
    %1292 = vmatmul.mubr.bf16.gmra.mrb[0].mxu0 %v1257
    %v1293 = vpop.f32.mrb[0].mxu0
    %v1294 = vadd.f32 %v1068, %v1293
    %v1295 = vpop.f32.mrb[0].mxu0
    %v1296 = vpop.f32.mrb[0].mxu0
    %v1297 = vpop.f32.mrb[0].mxu0
    %1298 = vdwg.mxu0
    %v1299 = vsel %vm1088, %v1043, 0
    %1301 = vmatprep.subr.bf16.mxu0 0
    %1302 = vmatpush1.bf16.msra.mxu0 %v1082
    %1303 = vmatprep.subr.bf16.mxu0 0
    %1304 = vmatpush1.bf16.msra.mxu0 %v1083
    %1305 = vmatprep.subr.bf16.mxu0 0
    %1306 = vmatpush1.bf16.msra.mxu0 %v1084
    %1307 = vmatprep.subr.bf16.mxu0 0
    %1308 = vmatpush1.bf16.msra.mxu0 0
    %1309 = vmatprep.subr.bf16.mxu0 0
    %1310 = vmatpush1.bf16.msra.mxu0 0
    %1311 = vmatprep.subr.bf16.mxu0 0
    %1312 = vmatpush1.bf16.msra.mxu0 0
    %1313 = vmatprep.subr.bf16.mxu0 0
    %1314 = vmatpush1.bf16.msra.mxu0 0
    %1315 = vmatprep.subr.bf16.mxu0 0
    %1316 = vmatpush1.bf16.msra.mxu0 0
    %1317 = vmatprep.subr.bf16.mxu0 0
    %1318 = vmatpush1.bf16.msra.mxu0 0
    %1319 = vmatprep.subr.bf16.mxu0 0
    %1320 = vmatpush1.bf16.msra.mxu0 0
    %1321 = vmatprep.subr.bf16.mxu0 0
    %1322 = vmatpush1.bf16.msra.mxu0 0
    %1323 = vmatprep.subr.bf16.mxu0 0
    %1324 = vmatpush1.bf16.msra.mxu0 0
    %1325 = vmatprep.subr.bf16.mxu0 0
    %1326 = vmatpush1.bf16.msra.mxu0 0
    %1327 = vmatprep.subr.bf16.mxu0 0
    %1328 = vmatpush1.bf16.msra.mxu0 0
    %1329 = vmatprep.subr.bf16.mxu0 0
    %1330 = vmatpush1.bf16.msra.mxu0 0
    %1331 = vmatprep.subr.bf16.mxu0 0
    %1332 = vmatpush1.bf16.msra.mxu0 0
    %1333 = vmatprep.mubr.bf16.mxu0 0
    %1334 = vmatmul.mubr.bf16.gmra.mrb[0].mxu0 %v1299
    %v1335 = vpop.f32.mrb[0].mxu0
    %v1336 = vadd.f32 %v1068, %v1335
    %v1337 = vpop.f32.mrb[0].mxu0
    %v1338 = vpop.f32.mrb[0].mxu0
    %v1339 = vpop.f32.mrb[0].mxu0
    %1340 = vdwg.mxu0
    %v1341 = vsel %vm1088, %v1045, 0
    %1343 = vmatprep.subr.bf16.mxu0 0
    %1344 = vmatpush1.bf16.msra.mxu0 %v1082
    %1345 = vmatprep.subr.bf16.mxu0 0
    %1346 = vmatpush1.bf16.msra.mxu0 %v1083
    %1347 = vmatprep.subr.bf16.mxu0 0
    %1348 = vmatpush1.bf16.msra.mxu0 %v1084
    %1349 = vmatprep.subr.bf16.mxu0 0
    %1350 = vmatpush1.bf16.msra.mxu0 0
    %1351 = vmatprep.subr.bf16.mxu0 0
    %1352 = vmatpush1.bf16.msra.mxu0 0
    %1353 = vmatprep.subr.bf16.mxu0 0
    %1354 = vmatpush1.bf16.msra.mxu0 0
    %1355 = vmatprep.subr.bf16.mxu0 0
    %1356 = vmatpush1.bf16.msra.mxu0 0
    %1357 = vmatprep.subr.bf16.mxu0 0
    %1358 = vmatpush1.bf16.msra.mxu0 0
    %1359 = vmatprep.subr.bf16.mxu0 0
    %1360 = vmatpush1.bf16.msra.mxu0 0
    %1361 = vmatprep.subr.bf16.mxu0 0
    %1362 = vmatpush1.bf16.msra.mxu0 0
    %1363 = vmatprep.subr.bf16.mxu0 0
    %1364 = vmatpush1.bf16.msra.mxu0 0
    %1365 = vmatprep.subr.bf16.mxu0 0
    %1366 = vmatpush1.bf16.msra.mxu0 0
    %1367 = vmatprep.subr.bf16.mxu0 0
    %1368 = vmatpush1.bf16.msra.mxu0 0
    %1369 = vmatprep.subr.bf16.mxu0 0
    %1370 = vmatpush1.bf16.msra.mxu0 0
    %1371 = vmatprep.subr.bf16.mxu0 0
    %1372 = vmatpush1.bf16.msra.mxu0 0
    %1373 = vmatprep.subr.bf16.mxu0 0
    %1374 = vmatpush1.bf16.msra.mxu0 0
    %1375 = vmatprep.mubr.bf16.mxu0 0
    %1376 = vmatmul.mubr.bf16.gmra.mrb[0].mxu0 %v1341
    %v1377 = vpop.f32.mrb[0].mxu0
    %v1378 = vadd.f32 %v1068, %v1377
    %v1379 = vpop.f32.mrb[0].mxu0
    %v1380 = vpop.f32.mrb[0].mxu0
    %v1381 = vpop.f32.mrb[0].mxu0
    %1382 = vdwg.mxu0
    %v1383 = vsel %vm1088, %v1047, 0
    %1385 = vmatprep.subr.bf16.mxu0 0
    %1386 = vmatpush1.bf16.msra.mxu0 %v1082
    %1387 = vmatprep.subr.bf16.mxu0 0
    %1388 = vmatpush1.bf16.msra.mxu0 %v1083
    %1389 = vmatprep.subr.bf16.mxu0 0
    %1390 = vmatpush1.bf16.msra.mxu0 %v1084
    %1391 = vmatprep.subr.bf16.mxu0 0
    %1392 = vmatpush1.bf16.msra.mxu0 0
    %1393 = vmatprep.subr.bf16.mxu0 0
    %1394 = vmatpush1.bf16.msra.mxu0 0
    %1395 = vmatprep.subr.bf16.mxu0 0
    %1396 = vmatpush1.bf16.msra.mxu0 0
    %1397 = vmatprep.subr.bf16.mxu0 0
    %1398 = vmatpush1.bf16.msra.mxu0 0
    %1399 = vmatprep.subr.bf16.mxu0 0
    %1400 = vmatpush1.bf16.msra.mxu0 0
    %1401 = vmatprep.subr.bf16.mxu0 0
    %1402 = vmatpush1.bf16.msra.mxu0 0
    %1403 = vmatprep.subr.bf16.mxu0 0
    %1404 = vmatpush1.bf16.msra.mxu0 0
    %1405 = vmatprep.subr.bf16.mxu0 0
    %1406 = vmatpush1.bf16.msra.mxu0 0
    %1407 = vmatprep.subr.bf16.mxu0 0
    %1408 = vmatpush1.bf16.msra.mxu0 0
    %1409 = vmatprep.subr.bf16.mxu0 0
    %1410 = vmatpush1.bf16.msra.mxu0 0
    %1411 = vmatprep.subr.bf16.mxu0 0
    %1412 = vmatpush1.bf16.msra.mxu0 0
    %1413 = vmatprep.subr.bf16.mxu0 0
    %1414 = vmatpush1.bf16.msra.mxu0 0
    %1415 = vmatprep.subr.bf16.mxu0 0
    %1416 = vmatpush1.bf16.msra.mxu0 0
    %1417 = vmatprep.mubr.bf16.mxu0 0
    %1418 = vmatmul.mubr.bf16.gmra.mrb[0].mxu0 %v1383
    %v1419 = vpop.f32.mrb[0].mxu0
    %v1420 = vadd.f32 %v1068, %v1419
    %v1421 = vpop.f32.mrb[0].mxu0
    %v1422 = vpop.f32.mrb[0].mxu0
    %v1423 = vpop.f32.mrb[0].mxu0
    %1424 = vdwg.mxu0
    %v1425 = vsel %vm1088, %v1049, 0
    %1427 = vmatprep.subr.bf16.mxu0 0
    %1428 = vmatpush1.bf16.msra.mxu0 %v1082
    %1429 = vmatprep.subr.bf16.mxu0 0
    %1430 = vmatpush1.bf16.msra.mxu0 %v1083
    %1431 = vmatprep.subr.bf16.mxu0 0
    %1432 = vmatpush1.bf16.msra.mxu0 %v1084
    %1433 = vmatprep.subr.bf16.mxu0 0
    %1434 = vmatpush1.bf16.msra.mxu0 0
    %1435 = vmatprep.subr.bf16.mxu0 0
    %1436 = vmatpush1.bf16.msra.mxu0 0
    %1437 = vmatprep.subr.bf16.mxu0 0
    %1438 = vmatpush1.bf16.msra.mxu0 0
    %1439 = vmatprep.subr.bf16.mxu0 0
    %1440 = vmatpush1.bf16.msra.mxu0 0
    %1441 = vmatprep.subr.bf16.mxu0 0
    %1442 = vmatpush1.bf16.msra.mxu0 0
    %1443 = vmatprep.subr.bf16.mxu0 0
    %1444 = vmatpush1.bf16.msra.mxu0 0
    %1445 = vmatprep.subr.bf16.mxu0 0
    %1446 = vmatpush1.bf16.msra.mxu0 0
    %1447 = vmatprep.subr.bf16.mxu0 0
    %1448 = vmatpush1.bf16.msra.mxu0 0
    %1449 = vmatprep.subr.bf16.mxu0 0
    %1450 = vmatpush1.bf16.msra.mxu0 0
    %1451 = vmatprep.subr.bf16.mxu0 0
    %1452 = vmatpush1.bf16.msra.mxu0 0
    %1453 = vmatprep.subr.bf16.mxu0 0
    %1454 = vmatpush1.bf16.msra.mxu0 0
    %1455 = vmatprep.subr.bf16.mxu0 0
    %1456 = vmatpush1.bf16.msra.mxu0 0
    %1457 = vmatprep.subr.bf16.mxu0 0
    %1458 = vmatpush1.bf16.msra.mxu0 0
    %1459 = vmatprep.mubr.bf16.mxu0 0
    %1460 = vmatmul.mubr.bf16.gmra.mrb[0].mxu0 %v1425
    %v1461 = vpop.f32.mrb[0].mxu0
    %v1462 = vadd.f32 %v1068, %v1461
    %v1463 = vpop.f32.mrb[0].mxu0
    %v1464 = vpop.f32.mrb[0].mxu0
    %v1465 = vpop.f32.mrb[0].mxu0
    %1466 = vdwg.mxu0
    %v1467 = vsel %vm1088, %v1051, 0
    %1469 = vmatprep.subr.bf16.mxu0 0
    %1470 = vmatpush1.bf16.msra.mxu0 %v1082
    %1471 = vmatprep.subr.bf16.mxu0 0
    %1472 = vmatpush1.bf16.msra.mxu0 %v1083
    %1473 = vmatprep.subr.bf16.mxu0 0
    %1474 = vmatpush1.bf16.msra.mxu0 %v1084
    %1475 = vmatprep.subr.bf16.mxu0 0
    %1476 = vmatpush1.bf16.msra.mxu0 0
    %1477 = vmatprep.subr.bf16.mxu0 0
    %1478 = vmatpush1.bf16.msra.mxu0 0
    %1479 = vmatprep.subr.bf16.mxu0 0
    %1480 = vmatpush1.bf16.msra.mxu0 0
    %1481 = vmatprep.subr.bf16.mxu0 0
    %1482 = vmatpush1.bf16.msra.mxu0 0
    %1483 = vmatprep.subr.bf16.mxu0 0
    %1484 = vmatpush1.bf16.msra.mxu0 0
    %1485 = vmatprep.subr.bf16.mxu0 0
    %1486 = vmatpush1.bf16.msra.mxu0 0
    %1487 = vmatprep.subr.bf16.mxu0 0
    %1488 = vmatpush1.bf16.msra.mxu0 0
    %1489 = vmatprep.subr.bf16.mxu0 0
    %1490 = vmatpush1.bf16.msra.mxu0 0
    %1491 = vmatprep.subr.bf16.mxu0 0
    %1492 = vmatpush1.bf16.msra.mxu0 0
    %1493 = vmatprep.subr.bf16.mxu0 0
    %1494 = vmatpush1.bf16.msra.mxu0 0
    %1495 = vmatprep.subr.bf16.mxu0 0
    %1496 = vmatpush1.bf16.msra.mxu0 0
    %1497 = vmatprep.subr.bf16.mxu0 0
    %1498 = vmatpush1.bf16.msra.mxu0 0
    %1499 = vmatprep.subr.bf16.mxu0 0
    %1500 = vmatpush1.bf16.msra.mxu0 0
    %1501 = vmatprep.mubr.bf16.mxu0 0
    %1502 = vmatmul.mubr.bf16.gmra.mrb[0].mxu0 %v1467
    %v1503 = vpop.f32.mrb[0].mxu0
    %v1504 = vadd.f32 %v1068, %v1503
    %v1505 = vpop.f32.mrb[0].mxu0
    %v1506 = vpop.f32.mrb[0].mxu0
    %v1507 = vpop.f32.mrb[0].mxu0
    %1508 = vdwg.mxu0
    %v1509 = vsel %vm1088, %v1053, 0
    %1511 = vmatprep.subr.bf16.mxu0 0
    %1512 = vmatpush1.bf16.msra.mxu0 %v1082
    %1513 = vmatprep.subr.bf16.mxu0 0
    %1514 = vmatpush1.bf16.msra.mxu0 %v1083
    %1515 = vmatprep.subr.bf16.mxu0 0
    %1516 = vmatpush1.bf16.msra.mxu0 %v1084
    %1517 = vmatprep.subr.bf16.mxu0 0
    %1518 = vmatpush1.bf16.msra.mxu0 0
    %1519 = vmatprep.subr.bf16.mxu0 0
    %1520 = vmatpush1.bf16.msra.mxu0 0
    %1521 = vmatprep.subr.bf16.mxu0 0
    %1522 = vmatpush1.bf16.msra.mxu0 0
    %1523 = vmatprep.subr.bf16.mxu0 0
    %1524 = vmatpush1.bf16.msra.mxu0 0
    %1525 = vmatprep.subr.bf16.mxu0 0
    %1526 = vmatpush1.bf16.msra.mxu0 0
    %1527 = vmatprep.subr.bf16.mxu0 0
    %1528 = vmatpush1.bf16.msra.mxu0 0
    %1529 = vmatprep.subr.bf16.mxu0 0
    %1530 = vmatpush1.bf16.msra.mxu0 0
    %1531 = vmatprep.subr.bf16.mxu0 0
    %1532 = vmatpush1.bf16.msra.mxu0 0
    %1533 = vmatprep.subr.bf16.mxu0 0
    %1534 = vmatpush1.bf16.msra.mxu0 0
    %1535 = vmatprep.subr.bf16.mxu0 0
    %1536 = vmatpush1.bf16.msra.mxu0 0
    %1537 = vmatprep.subr.bf16.mxu0 0
    %1538 = vmatpush1.bf16.msra.mxu0 0
    %1539 = vmatprep.subr.bf16.mxu0 0
    %1540 = vmatpush1.bf16.msra.mxu0 0
    %1541 = vmatprep.subr.bf16.mxu0 0
    %1542 = vmatpush1.bf16.msra.mxu0 0
    %1543 = vmatprep.mubr.bf16.mxu0 0
    %1544 = vmatmul.mubr.bf16.gmra.mrb[0].mxu0 %v1509
    %v1545 = vpop.f32.mrb[0].mxu0
    %v1546 = vadd.f32 %v1068, %v1545
    %v1547 = vpop.f32.mrb[0].mxu0
    %v1548 = vpop.f32.mrb[0].mxu0
    %v1549 = vpop.f32.mrb[0].mxu0
    %1550 = vdwg.mxu0
    %v1551 = vsel %vm1088, %v1055, 0
    %1553 = vmatprep.subr.bf16.mxu0 0
    %1554 = vmatpush1.bf16.msra.mxu0 %v1082
    %1555 = vmatprep.subr.bf16.mxu0 0
    %1556 = vmatpush1.bf16.msra.mxu0 %v1083
    %1557 = vmatprep.subr.bf16.mxu0 0
    %1558 = vmatpush1.bf16.msra.mxu0 %v1084
    %1559 = vmatprep.subr.bf16.mxu0 0
    %1560 = vmatpush1.bf16.msra.mxu0 0
    %1561 = vmatprep.subr.bf16.mxu0 0
    %1562 = vmatpush1.bf16.msra.mxu0 0
    %1563 = vmatprep.subr.bf16.mxu0 0
    %1564 = vmatpush1.bf16.msra.mxu0 0
    %1565 = vmatprep.subr.bf16.mxu0 0
    %1566 = vmatpush1.bf16.msra.mxu0 0
    %1567 = vmatprep.subr.bf16.mxu0 0
    %1568 = vmatpush1.bf16.msra.mxu0 0
    %1569 = vmatprep.subr.bf16.mxu0 0
    %1570 = vmatpush1.bf16.msra.mxu0 0
    %1571 = vmatprep.subr.bf16.mxu0 0
    %1572 = vmatpush1.bf16.msra.mxu0 0
    %1573 = vmatprep.subr.bf16.mxu0 0
    %1574 = vmatpush1.bf16.msra.mxu0 0
    %1575 = vmatprep.subr.bf16.mxu0 0
    %1576 = vmatpush1.bf16.msra.mxu0 0
    %1577 = vmatprep.subr.bf16.mxu0 0
    %1578 = vmatpush1.bf16.msra.mxu0 0
    %1579 = vmatprep.subr.bf16.mxu0 0
    %1580 = vmatpush1.bf16.msra.mxu0 0
    %1581 = vmatprep.subr.bf16.mxu0 0
    %1582 = vmatpush1.bf16.msra.mxu0 0
    %1583 = vmatprep.subr.bf16.mxu0 0
    %1584 = vmatpush1.bf16.msra.mxu0 0
    %1585 = vmatprep.mubr.bf16.mxu0 0
    %1586 = vmatmul.mubr.bf16.gmra.mrb[0].mxu0 %v1551
    %v1587 = vpop.f32.mrb[0].mxu0
    %v1588 = vadd.f32 %v1068, %v1587
    %v1589 = vpop.f32.mrb[0].mxu0
    %v1590 = vpop.f32.mrb[0].mxu0
    %v1591 = vpop.f32.mrb[0].mxu0
    %1592 = vdwg.mxu0
    %v1593 = vsel %vm1088, %v1057, 0
    %1595 = vmatprep.subr.bf16.mxu0 0
    %1596 = vmatpush1.bf16.msra.mxu0 %v1082
    %1597 = vmatprep.subr.bf16.mxu0 0
    %1598 = vmatpush1.bf16.msra.mxu0 %v1083
    %1599 = vmatprep.subr.bf16.mxu0 0
    %1600 = vmatpush1.bf16.msra.mxu0 %v1084
    %1601 = vmatprep.subr.bf16.mxu0 0
    %1602 = vmatpush1.bf16.msra.mxu0 0
    %1603 = vmatprep.subr.bf16.mxu0 0
    %1604 = vmatpush1.bf16.msra.mxu0 0
    %1605 = vmatprep.subr.bf16.mxu0 0
    %1606 = vmatpush1.bf16.msra.mxu0 0
    %1607 = vmatprep.subr.bf16.mxu0 0
    %1608 = vmatpush1.bf16.msra.mxu0 0
    %1609 = vmatprep.subr.bf16.mxu0 0
    %1610 = vmatpush1.bf16.msra.mxu0 0
    %1611 = vmatprep.subr.bf16.mxu0 0
    %1612 = vmatpush1.bf16.msra.mxu0 0
    %1613 = vmatprep.subr.bf16.mxu0 0
    %1614 = vmatpush1.bf16.msra.mxu0 0
    %1615 = vmatprep.subr.bf16.mxu0 0
    %1616 = vmatpush1.bf16.msra.mxu0 0
    %1617 = vmatprep.subr.bf16.mxu0 0
    %1618 = vmatpush1.bf16.msra.mxu0 0
    %1619 = vmatprep.subr.bf16.mxu0 0
    %1620 = vmatpush1.bf16.msra.mxu0 0
    %1621 = vmatprep.subr.bf16.mxu0 0
    %1622 = vmatpush1.bf16.msra.mxu0 0
    %1623 = vmatprep.subr.bf16.mxu0 0
    %1624 = vmatpush1.bf16.msra.mxu0 0
    %1625 = vmatprep.subr.bf16.mxu0 0
    %1626 = vmatpush1.bf16.msra.mxu0 0
    %1627 = vmatprep.mubr.bf16.mxu0 0
    %1628 = vmatmul.mubr.bf16.gmra.mrb[0].mxu0 %v1593
    %v1629 = vpop.f32.mrb[0].mxu0
    %v1630 = vadd.f32 %v1068, %v1629
    %v1631 = vpop.f32.mrb[0].mxu0
    %v1632 = vpop.f32.mrb[0].mxu0
    %v1633 = vpop.f32.mrb[0].mxu0
    %1634 = vdwg.mxu0
    %v1635 = vsel %vm1088, %v1059, 0
    %1637 = vmatprep.subr.bf16.mxu0 0
    %1638 = vmatpush1.bf16.msra.mxu0 %v1082
    %1639 = vmatprep.subr.bf16.mxu0 0
    %1640 = vmatpush1.bf16.msra.mxu0 %v1083
    %1641 = vmatprep.subr.bf16.mxu0 0
    %1642 = vmatpush1.bf16.msra.mxu0 %v1084
    %1643 = vmatprep.subr.bf16.mxu0 0
    %1644 = vmatpush1.bf16.msra.mxu0 0
    %1645 = vmatprep.subr.bf16.mxu0 0
    %1646 = vmatpush1.bf16.msra.mxu0 0
    %1647 = vmatprep.subr.bf16.mxu0 0
    %1648 = vmatpush1.bf16.msra.mxu0 0
    %1649 = vmatprep.subr.bf16.mxu0 0
    %1650 = vmatpush1.bf16.msra.mxu0 0
    %1651 = vmatprep.subr.bf16.mxu0 0
    %1652 = vmatpush1.bf16.msra.mxu0 0
    %1653 = vmatprep.subr.bf16.mxu0 0
    %1654 = vmatpush1.bf16.msra.mxu0 0
    %1655 = vmatprep.subr.bf16.mxu0 0
    %1656 = vmatpush1.bf16.msra.mxu0 0
    %1657 = vmatprep.subr.bf16.mxu0 0
    %1658 = vmatpush1.bf16.msra.mxu0 0
    %1659 = vmatprep.subr.bf16.mxu0 0
    %1660 = vmatpush1.bf16.msra.mxu0 0
    %1661 = vmatprep.subr.bf16.mxu0 0
    %1662 = vmatpush1.bf16.msra.mxu0 0
    %1663 = vmatprep.subr.bf16.mxu0 0
    %1664 = vmatpush1.bf16.msra.mxu0 0
    %1665 = vmatprep.subr.bf16.mxu0 0
    %1666 = vmatpush1.bf16.msra.mxu0 0
    %1667 = vmatprep.subr.bf16.mxu0 0
    %1668 = vmatpush1.bf16.msra.mxu0 0
    %1669 = vmatprep.mubr.bf16.mxu0 0
    %1670 = vmatmul.mubr.bf16.gmra.mrb[0].mxu0 %v1635
    %v1671 = vpop.f32.mrb[0].mxu0
    %v1672 = vadd.f32 %v1068, %v1671
    %v1673 = vpop.f32.mrb[0].mxu0
    %v1674 = vpop.f32.mrb[0].mxu0
    %v1675 = vpop.f32.mrb[0].mxu0
    %1676 = vdwg.mxu0
    %v1677 = vsel %vm1088, %v1061, 0
    %1679 = vmatprep.subr.bf16.mxu0 0
    %1680 = vmatpush1.bf16.msra.mxu0 %v1082
    %1681 = vmatprep.subr.bf16.mxu0 0
    %1682 = vmatpush1.bf16.msra.mxu0 %v1083
    %1683 = vmatprep.subr.bf16.mxu0 0
    %1684 = vmatpush1.bf16.msra.mxu0 %v1084
    %1685 = vmatprep.subr.bf16.mxu0 0
    %1686 = vmatpush1.bf16.msra.mxu0 0
    %1687 = vmatprep.subr.bf16.mxu0 0
    %1688 = vmatpush1.bf16.msra.mxu0 0
    %1689 = vmatprep.subr.bf16.mxu0 0
    %1690 = vmatpush1.bf16.msra.mxu0 0
    %1691 = vmatprep.subr.bf16.mxu0 0
    %1692 = vmatpush1.bf16.msra.mxu0 0
    %1693 = vmatprep.subr.bf16.mxu0 0
    %1694 = vmatpush1.bf16.msra.mxu0 0
    %1695 = vmatprep.subr.bf16.mxu0 0
    %1696 = vmatpush1.bf16.msra.mxu0 0
    %1697 = vmatprep.subr.bf16.mxu0 0
    %1698 = vmatpush1.bf16.msra.mxu0 0
    %1699 = vmatprep.subr.bf16.mxu0 0
    %1700 = vmatpush1.bf16.msra.mxu0 0
    %1701 = vmatprep.subr.bf16.mxu0 0
    %1702 = vmatpush1.bf16.msra.mxu0 0
    %1703 = vmatprep.subr.bf16.mxu0 0
    %1704 = vmatpush1.bf16.msra.mxu0 0
    %1705 = vmatprep.subr.bf16.mxu0 0
    %1706 = vmatpush1.bf16.msra.mxu0 0
    %1707 = vmatprep.subr.bf16.mxu0 0
    %1708 = vmatpush1.bf16.msra.mxu0 0
    %1709 = vmatprep.subr.bf16.mxu0 0
    %1710 = vmatpush1.bf16.msra.mxu0 0
    %1711 = vmatprep.mubr.bf16.mxu0 0
    %1712 = vmatmul.mubr.bf16.gmra.mrb[0].mxu0 %v1677
    %v1713 = vpop.f32.mrb[0].mxu0
    %v1714 = vadd.f32 %v1068, %v1713
    %v1715 = vpop.f32.mrb[0].mxu0
    %v1716 = vpop.f32.mrb[0].mxu0
    %v1717 = vpop.f32.mrb[0].mxu0
    %1718 = vdwg.mxu0
    %v1719 = vsel %vm1088, %v1063, 0
    %1721 = vmatprep.subr.bf16.mxu0 0
    %1722 = vmatpush1.bf16.msra.mxu0 %v1082
    %1723 = vmatprep.subr.bf16.mxu0 0
    %1724 = vmatpush1.bf16.msra.mxu0 %v1083
    %1725 = vmatprep.subr.bf16.mxu0 0
    %1726 = vmatpush1.bf16.msra.mxu0 %v1084
    %1727 = vmatprep.subr.bf16.mxu0 0
    %1728 = vmatpush1.bf16.msra.mxu0 0
    %1729 = vmatprep.subr.bf16.mxu0 0
    %1730 = vmatpush1.bf16.msra.mxu0 0
    %1731 = vmatprep.subr.bf16.mxu0 0
    %1732 = vmatpush1.bf16.msra.mxu0 0
    %1733 = vmatprep.subr.bf16.mxu0 0
    %1734 = vmatpush1.bf16.msra.mxu0 0
    %1735 = vmatprep.subr.bf16.mxu0 0
    %1736 = vmatpush1.bf16.msra.mxu0 0
    %1737 = vmatprep.subr.bf16.mxu0 0
    %1738 = vmatpush1.bf16.msra.mxu0 0
    %1739 = vmatprep.subr.bf16.mxu0 0
    %1740 = vmatpush1.bf16.msra.mxu0 0
    %1741 = vmatprep.subr.bf16.mxu0 0
    %1742 = vmatpush1.bf16.msra.mxu0 0
    %1743 = vmatprep.subr.bf16.mxu0 0
    %1744 = vmatpush1.bf16.msra.mxu0 0
    %1745 = vmatprep.subr.bf16.mxu0 0
    %1746 = vmatpush1.bf16.msra.mxu0 0
    %1747 = vmatprep.subr.bf16.mxu0 0
    %1748 = vmatpush1.bf16.msra.mxu0 0
    %1749 = vmatprep.subr.bf16.mxu0 0
    %1750 = vmatpush1.bf16.msra.mxu0 0
    %1751 = vmatprep.subr.bf16.mxu0 0
    %1752 = vmatpush1.bf16.msra.mxu0 0
    %1753 = vmatprep.mubr.bf16.mxu0 0
    %1754 = vmatmul.mubr.bf16.gmra.mrb[0].mxu0 %v1719
    %v1755 = vpop.f32.mrb[0].mxu0
    %v1756 = vadd.f32 %v1068, %v1755
    %v1757 = vpop.f32.mrb[0].mxu0
    %v1758 = vpop.f32.mrb[0].mxu0
    %v1759 = vpop.f32.mrb[0].mxu0
    %1760 = vdwg.mxu0
    %vm1761 = vcmp.ge.f32.partialorder %v1126, 0.0
    %vm1762 = vcmp.ge.f32.partialorder %v1168, 0.0
    %vm1763 = vcmp.ge.f32.partialorder %v1210, 0.0
    %vm1764 = vcmp.ge.f32.partialorder %v1252, 0.0
    %vm1765 = vcmp.ge.f32.partialorder %v1294, 0.0
    %vm1766 = vcmp.ge.f32.partialorder %v1336, 0.0
    %vm1767 = vcmp.ge.f32.partialorder %v1378, 0.0
    %vm1768 = vcmp.ge.f32.partialorder %v1420, 0.0
    %vm1769 = vcmp.ge.f32.partialorder %v1462, 0.0
    %vm1770 = vcmp.ge.f32.partialorder %v1504, 0.0
    %vm1771 = vcmp.ge.f32.partialorder %v1546, 0.0
    %vm1772 = vcmp.ge.f32.partialorder %v1588, 0.0
    %vm1773 = vcmp.ge.f32.partialorder %v1630, 0.0
    %vm1774 = vcmp.ge.f32.partialorder %v1672, 0.0
    %vm1775 = vcmp.ge.f32.partialorder %v1714, 0.0
    %vm1776 = vcmp.ge.f32.partialorder %v1756, 0.0
    %v1777 = vmul.f32 %v1126, 0.01
    %v1778 = vmul.f32 %v1168, 0.01
    %v1779 = vmul.f32 %v1210, 0.01
    %v1780 = vmul.f32 %v1252, 0.01
    %v1781 = vmul.f32 %v1294, 0.01
    %v1782 = vmul.f32 %v1336, 0.01
    %v1783 = vmul.f32 %v1378, 0.01
    %v1784 = vmul.f32 %v1420, 0.01
    %v1785 = vmul.f32 %v1462, 0.01
    %v1786 = vmul.f32 %v1504, 0.01
    %v1787 = vmul.f32 %v1546, 0.01
    %v1788 = vmul.f32 %v1588, 0.01
    %v1789 = vmul.f32 %v1630, 0.01
    %v1790 = vmul.f32 %v1672, 0.01
    %v1791 = vmul.f32 %v1714, 0.01
    %v1792 = vmul.f32 %v1756, 0.01
    %v1793 = vsel %vm1761, %v1126, %v1777
    %v1794 = vsel %vm1762, %v1168, %v1778
    %v1795 = vsel %vm1763, %v1210, %v1779
    %v1796 = vsel %vm1764, %v1252, %v1780
    %v1797 = vsel %vm1765, %v1294, %v1781
    %v1798 = vsel %vm1766, %v1336, %v1782
    %v1799 = vsel %vm1767, %v1378, %v1783
    %v1800 = vsel %vm1768, %v1420, %v1784
    %v1801 = vsel %vm1769, %v1462, %v1785
    %v1802 = vsel %vm1770, %v1504, %v1786
    %v1803 = vsel %vm1771, %v1546, %v1787
    %v1804 = vsel %vm1772, %v1588, %v1788
    %v1805 = vsel %vm1773, %v1630, %v1789
    %v1806 = vsel %vm1774, %v1672, %v1790
    %v1807 = vsel %vm1775, %v1714, %v1791
    %v1808 = vsel %vm1776, %v1756, %v1792
    %v1809 = vpack.c.bf16 %v1793, %v1793
    %v1810 = vpack.c.bf16 %v1794, %v1794
    %v1811 = vpack.c.bf16 %v1795, %v1795
    %v1812 = vpack.c.bf16 %v1796, %v1796
    %v1813 = vpack.c.bf16 %v1797, %v1797
    %v1814 = vpack.c.bf16 %v1798, %v1798
    %v1815 = vpack.c.bf16 %v1799, %v1799
    %v1816 = vpack.c.bf16 %v1800, %v1800
    %v1817 = vpack.c.bf16 %v1801, %v1801
    %v1818 = vpack.c.bf16 %v1802, %v1802
    %v1819 = vpack.c.bf16 %v1803, %v1803
    %v1820 = vpack.c.bf16 %v1804, %v1804
    %v1821 = vpack.c.bf16 %v1805, %v1805
    %v1822 = vpack.c.bf16 %v1806, %v1806
    %v1823 = vpack.c.bf16 %v1807, %v1807
    %v1824 = vpack.c.bf16 %v1808, %v1808
    %v1825 = vld [vmem:[%s7] sm:$0x7]
    %v1826 = vld [vmem:[%s8] sm:$0x7]
    %vm1827 = vcmask 64512
    %v1829 = vsel %vm1827, %v1825, 0
    %vm1831 = vcmask 1043456
    %v1833 = vsel %vm1831, %v1809, 0
    %1835 = vmatprep.subr.bf16.mxu0 0
    %1836 = vmatpush1.bf16.msra.mxu0 %v1833
    %1837 = vmatprep.subr.bf16.mxu0 0
    %1838 = vmatpush1.bf16.msra.mxu0 0
    %1839 = vmatprep.subr.bf16.mxu0 0
    %1840 = vmatpush1.bf16.msra.mxu0 0
    %1841 = vmatprep.subr.bf16.mxu0 0
    %1842 = vmatpush1.bf16.msra.mxu0 0
    %1843 = vmatprep.subr.bf16.mxu0 0
    %1844 = vmatpush1.bf16.msra.mxu0 0
    %1845 = vmatprep.subr.bf16.mxu0 0
    %1846 = vmatpush1.bf16.msra.mxu0 0
    %1847 = vmatprep.subr.bf16.mxu0 0
    %1848 = vmatpush1.bf16.msra.mxu0 0
    %1849 = vmatprep.subr.bf16.mxu0 0
    %1850 = vmatpush1.bf16.msra.mxu0 0
    %1851 = vmatprep.subr.bf16.mxu0 0
    %1852 = vmatpush1.bf16.msra.mxu0 0
    %1853 = vmatprep.subr.bf16.mxu0 0
    %1854 = vmatpush1.bf16.msra.mxu0 0
    %1855 = vmatprep.subr.bf16.mxu0 0
    %1856 = vmatpush1.bf16.msra.mxu0 0
    %1857 = vmatprep.subr.bf16.mxu0 0
    %1858 = vmatpush1.bf16.msra.mxu0 0
    %1859 = vmatprep.subr.bf16.mxu0 0
    %1860 = vmatpush1.bf16.msra.mxu0 0
    %1861 = vmatprep.subr.bf16.mxu0 0
    %1862 = vmatpush1.bf16.msra.mxu0 0
    %1863 = vmatprep.subr.bf16.mxu0 0
    %1864 = vmatpush1.bf16.msra.mxu0 0
    %1865 = vmatprep.subr.bf16.mxu0 0
    %1866 = vmatpush1.bf16.msra.mxu0 0
    %1867 = vmatprep.mubr.bf16.mxu0 0
    %1868 = vmatmul.mubr.bf16.gmra.mrb[0].mxu0 %v1829
    %v1869 = vpop.f32.mrb[0].mxu0
    %v1870 = vadd.f32 0.0, %v1869
    %v1871 = vpop.f32.mrb[0].mxu0
    %v1872 = vpop.f32.mrb[0].mxu0
    %v1873 = vpop.f32.mrb[0].mxu0
    %1874 = vdwg.mxu0
    %v1876 = vsel %vm1831, %v1810, 0
    %1878 = vmatprep.subr.bf16.mxu0 0
    %1879 = vmatpush1.bf16.msra.mxu0 %v1876
    %1880 = vmatprep.subr.bf16.mxu0 0
    %1881 = vmatpush1.bf16.msra.mxu0 0
    %1882 = vmatprep.subr.bf16.mxu0 0
    %1883 = vmatpush1.bf16.msra.mxu0 0
    %1884 = vmatprep.subr.bf16.mxu0 0
    %1885 = vmatpush1.bf16.msra.mxu0 0
    %1886 = vmatprep.subr.bf16.mxu0 0
    %1887 = vmatpush1.bf16.msra.mxu0 0
    %1888 = vmatprep.subr.bf16.mxu0 0
    %1889 = vmatpush1.bf16.msra.mxu0 0
    %1890 = vmatprep.subr.bf16.mxu0 0
    %1891 = vmatpush1.bf16.msra.mxu0 0
    %1892 = vmatprep.subr.bf16.mxu0 0
    %1893 = vmatpush1.bf16.msra.mxu0 0
    %1894 = vmatprep.subr.bf16.mxu0 0
    %1895 = vmatpush1.bf16.msra.mxu0 0
    %1896 = vmatprep.subr.bf16.mxu0 0
    %1897 = vmatpush1.bf16.msra.mxu0 0
    %1898 = vmatprep.subr.bf16.mxu0 0
    %1899 = vmatpush1.bf16.msra.mxu0 0
    %1900 = vmatprep.subr.bf16.mxu0 0
    %1901 = vmatpush1.bf16.msra.mxu0 0
    %1902 = vmatprep.subr.bf16.mxu0 0
    %1903 = vmatpush1.bf16.msra.mxu0 0
    %1904 = vmatprep.subr.bf16.mxu0 0
    %1905 = vmatpush1.bf16.msra.mxu0 0
    %1906 = vmatprep.subr.bf16.mxu0 0
    %1907 = vmatpush1.bf16.msra.mxu0 0
    %1908 = vmatprep.subr.bf16.mxu0 0
    %1909 = vmatpush1.bf16.msra.mxu0 0
    %1910 = vmatprep.mubr.bf16.mxu0 0
    %1911 = vmatmul.mubr.bf16.gmra.mrb[0].mxu0 %v1829
    %v1912 = vpop.f32.mrb[0].mxu0
    %v1913 = vadd.f32 0.0, %v1912
    %v1914 = vpop.f32.mrb[0].mxu0
    %v1915 = vpop.f32.mrb[0].mxu0
    %v1916 = vpop.f32.mrb[0].mxu0
    %1917 = vdwg.mxu0
    %v1919 = vsel %vm1831, %v1811, 0
    %1921 = vmatprep.subr.bf16.mxu0 0
    %1922 = vmatpush1.bf16.msra.mxu0 %v1919
    %1923 = vmatprep.subr.bf16.mxu0 0
    %1924 = vmatpush1.bf16.msra.mxu0 0
    %1925 = vmatprep.subr.bf16.mxu0 0
    %1926 = vmatpush1.bf16.msra.mxu0 0
    %1927 = vmatprep.subr.bf16.mxu0 0
    %1928 = vmatpush1.bf16.msra.mxu0 0
    %1929 = vmatprep.subr.bf16.mxu0 0
    %1930 = vmatpush1.bf16.msra.mxu0 0
    %1931 = vmatprep.subr.bf16.mxu0 0
    %1932 = vmatpush1.bf16.msra.mxu0 0
    %1933 = vmatprep.subr.bf16.mxu0 0
    %1934 = vmatpush1.bf16.msra.mxu0 0
    %1935 = vmatprep.subr.bf16.mxu0 0
    %1936 = vmatpush1.bf16.msra.mxu0 0
    %1937 = vmatprep.subr.bf16.mxu0 0
    %1938 = vmatpush1.bf16.msra.mxu0 0
    %1939 = vmatprep.subr.bf16.mxu0 0
    %1940 = vmatpush1.bf16.msra.mxu0 0
    %1941 = vmatprep.subr.bf16.mxu0 0
    %1942 = vmatpush1.bf16.msra.mxu0 0
    %1943 = vmatprep.subr.bf16.mxu0 0
    %1944 = vmatpush1.bf16.msra.mxu0 0
    %1945 = vmatprep.subr.bf16.mxu0 0
    %1946 = vmatpush1.bf16.msra.mxu0 0
    %1947 = vmatprep.subr.bf16.mxu0 0
    %1948 = vmatpush1.bf16.msra.mxu0 0
    %1949 = vmatprep.subr.bf16.mxu0 0
    %1950 = vmatpush1.bf16.msra.mxu0 0
    %1951 = vmatprep.subr.bf16.mxu0 0
    %1952 = vmatpush1.bf16.msra.mxu0 0
    %1953 = vmatprep.mubr.bf16.mxu0 0
    %1954 = vmatmul.mubr.bf16.gmra.mrb[0].mxu0 %v1829
    %v1955 = vpop.f32.mrb[0].mxu0
    %v1956 = vadd.f32 0.0, %v1955
    %v1957 = vpop.f32.mrb[0].mxu0
    %v1958 = vpop.f32.mrb[0].mxu0
    %v1959 = vpop.f32.mrb[0].mxu0
    %1960 = vdwg.mxu0
    %v1962 = vsel %vm1831, %v1812, 0
    %1964 = vmatprep.subr.bf16.mxu0 0
    %1965 = vmatpush1.bf16.msra.mxu0 %v1962
    %1966 = vmatprep.subr.bf16.mxu0 0
    %1967 = vmatpush1.bf16.msra.mxu0 0
    %1968 = vmatprep.subr.bf16.mxu0 0
    %1969 = vmatpush1.bf16.msra.mxu0 0
    %1970 = vmatprep.subr.bf16.mxu0 0
    %1971 = vmatpush1.bf16.msra.mxu0 0
    %1972 = vmatprep.subr.bf16.mxu0 0
    %1973 = vmatpush1.bf16.msra.mxu0 0
    %1974 = vmatprep.subr.bf16.mxu0 0
    %1975 = vmatpush1.bf16.msra.mxu0 0
    %1976 = vmatprep.subr.bf16.mxu0 0
    %1977 = vmatpush1.bf16.msra.mxu0 0
    %1978 = vmatprep.subr.bf16.mxu0 0
    %1979 = vmatpush1.bf16.msra.mxu0 0
    %1980 = vmatprep.subr.bf16.mxu0 0
    %1981 = vmatpush1.bf16.msra.mxu0 0
    %1982 = vmatprep.subr.bf16.mxu0 0
    %1983 = vmatpush1.bf16.msra.mxu0 0
    %1984 = vmatprep.subr.bf16.mxu0 0
    %1985 = vmatpush1.bf16.msra.mxu0 0
    %1986 = vmatprep.subr.bf16.mxu0 0
    %1987 = vmatpush1.bf16.msra.mxu0 0
    %1988 = vmatprep.subr.bf16.mxu0 0
    %1989 = vmatpush1.bf16.msra.mxu0 0
    %1990 = vmatprep.subr.bf16.mxu0 0
    %1991 = vmatpush1.bf16.msra.mxu0 0
    %1992 = vmatprep.subr.bf16.mxu0 0
    %1993 = vmatpush1.bf16.msra.mxu0 0
    %1994 = vmatprep.subr.bf16.mxu0 0
    %1995 = vmatpush1.bf16.msra.mxu0 0
    %1996 = vmatprep.mubr.bf16.mxu0 0
    %1997 = vmatmul.mubr.bf16.gmra.mrb[0].mxu0 %v1829
    %v1998 = vpop.f32.mrb[0].mxu0
    %v1999 = vadd.f32 0.0, %v1998
    %v2000 = vpop.f32.mrb[0].mxu0
    %v2001 = vpop.f32.mrb[0].mxu0
    %v2002 = vpop.f32.mrb[0].mxu0
    %2003 = vdwg.mxu0
    %v2005 = vsel %vm1831, %v1813, 0
    %2007 = vmatprep.subr.bf16.mxu0 0
    %2008 = vmatpush1.bf16.msra.mxu0 %v2005
    %2009 = vmatprep.subr.bf16.mxu0 0
    %2010 = vmatpush1.bf16.msra.mxu0 0
    %2011 = vmatprep.subr.bf16.mxu0 0
    %2012 = vmatpush1.bf16.msra.mxu0 0
    %2013 = vmatprep.subr.bf16.mxu0 0
    %2014 = vmatpush1.bf16.msra.mxu0 0
    %2015 = vmatprep.subr.bf16.mxu0 0
    %2016 = vmatpush1.bf16.msra.mxu0 0
    %2017 = vmatprep.subr.bf16.mxu0 0
    %2018 = vmatpush1.bf16.msra.mxu0 0
    %2019 = vmatprep.subr.bf16.mxu0 0
    %2020 = vmatpush1.bf16.msra.mxu0 0
    %2021 = vmatprep.subr.bf16.mxu0 0
    %2022 = vmatpush1.bf16.msra.mxu0 0
    %2023 = vmatprep.subr.bf16.mxu0 0
    %2024 = vmatpush1.bf16.msra.mxu0 0
    %2025 = vmatprep.subr.bf16.mxu0 0
    %2026 = vmatpush1.bf16.msra.mxu0 0
    %2027 = vmatprep.subr.bf16.mxu0 0
    %2028 = vmatpush1.bf16.msra.mxu0 0
    %2029 = vmatprep.subr.bf16.mxu0 0
    %2030 = vmatpush1.bf16.msra.mxu0 0
    %2031 = vmatprep.subr.bf16.mxu0 0
    %2032 = vmatpush1.bf16.msra.mxu0 0
    %2033 = vmatprep.subr.bf16.mxu0 0
    %2034 = vmatpush1.bf16.msra.mxu0 0
    %2035 = vmatprep.subr.bf16.mxu0 0
    %2036 = vmatpush1.bf16.msra.mxu0 0
    %2037 = vmatprep.subr.bf16.mxu0 0
    %2038 = vmatpush1.bf16.msra.mxu0 0
    %2039 = vmatprep.mubr.bf16.mxu0 0
    %2040 = vmatmul.mubr.bf16.gmra.mrb[0].mxu0 %v1829
    %v2041 = vpop.f32.mrb[0].mxu0
    %v2042 = vadd.f32 0.0, %v2041
    %v2043 = vpop.f32.mrb[0].mxu0
    %v2044 = vpop.f32.mrb[0].mxu0
    %v2045 = vpop.f32.mrb[0].mxu0
    %2046 = vdwg.mxu0
    %v2048 = vsel %vm1831, %v1814, 0
    %2050 = vmatprep.subr.bf16.mxu0 0
    %2051 = vmatpush1.bf16.msra.mxu0 %v2048
    %2052 = vmatprep.subr.bf16.mxu0 0
    %2053 = vmatpush1.bf16.msra.mxu0 0
    %2054 = vmatprep.subr.bf16.mxu0 0
    %2055 = vmatpush1.bf16.msra.mxu0 0
    %2056 = vmatprep.subr.bf16.mxu0 0
    %2057 = vmatpush1.bf16.msra.mxu0 0
    %2058 = vmatprep.subr.bf16.mxu0 0
    %2059 = vmatpush1.bf16.msra.mxu0 0
    %2060 = vmatprep.subr.bf16.mxu0 0
    %2061 = vmatpush1.bf16.msra.mxu0 0
    %2062 = vmatprep.subr.bf16.mxu0 0
    %2063 = vmatpush1.bf16.msra.mxu0 0
    %2064 = vmatprep.subr.bf16.mxu0 0
    %2065 = vmatpush1.bf16.msra.mxu0 0
    %2066 = vmatprep.subr.bf16.mxu0 0
    %2067 = vmatpush1.bf16.msra.mxu0 0
    %2068 = vmatprep.subr.bf16.mxu0 0
    %2069 = vmatpush1.bf16.msra.mxu0 0
    %2070 = vmatprep.subr.bf16.mxu0 0
    %2071 = vmatpush1.bf16.msra.mxu0 0
    %2072 = vmatprep.subr.bf16.mxu0 0
    %2073 = vmatpush1.bf16.msra.mxu0 0
    %2074 = vmatprep.subr.bf16.mxu0 0
    %2075 = vmatpush1.bf16.msra.mxu0 0
    %2076 = vmatprep.subr.bf16.mxu0 0
    %2077 = vmatpush1.bf16.msra.mxu0 0
    %2078 = vmatprep.subr.bf16.mxu0 0
    %2079 = vmatpush1.bf16.msra.mxu0 0
    %2080 = vmatprep.subr.bf16.mxu0 0
    %2081 = vmatpush1.bf16.msra.mxu0 0
    %2082 = vmatprep.mubr.bf16.mxu0 0
    %2083 = vmatmul.mubr.bf16.gmra.mrb[0].mxu0 %v1829
    %v2084 = vpop.f32.mrb[0].mxu0
    %v2085 = vadd.f32 0.0, %v2084
    %v2086 = vpop.f32.mrb[0].mxu0
    %v2087 = vpop.f32.mrb[0].mxu0
    %v2088 = vpop.f32.mrb[0].mxu0
    %2089 = vdwg.mxu0
    %v2091 = vsel %vm1831, %v1815, 0
    %2093 = vmatprep.subr.bf16.mxu0 0
    %2094 = vmatpush1.bf16.msra.mxu0 %v2091
    %2095 = vmatprep.subr.bf16.mxu0 0
    %2096 = vmatpush1.bf16.msra.mxu0 0
    %2097 = vmatprep.subr.bf16.mxu0 0
    %2098 = vmatpush1.bf16.msra.mxu0 0
    %2099 = vmatprep.subr.bf16.mxu0 0
    %2100 = vmatpush1.bf16.msra.mxu0 0
    %2101 = vmatprep.subr.bf16.mxu0 0
    %2102 = vmatpush1.bf16.msra.mxu0 0
    %2103 = vmatprep.subr.bf16.mxu0 0
    %2104 = vmatpush1.bf16.msra.mxu0 0
    %2105 = vmatprep.subr.bf16.mxu0 0
    %2106 = vmatpush1.bf16.msra.mxu0 0
    %2107 = vmatprep.subr.bf16.mxu0 0
    %2108 = vmatpush1.bf16.msra.mxu0 0
    %2109 = vmatprep.subr.bf16.mxu0 0
    %2110 = vmatpush1.bf16.msra.mxu0 0
    %2111 = vmatprep.subr.bf16.mxu0 0
    %2112 = vmatpush1.bf16.msra.mxu0 0
    %2113 = vmatprep.subr.bf16.mxu0 0
    %2114 = vmatpush1.bf16.msra.mxu0 0
    %2115 = vmatprep.subr.bf16.mxu0 0
    %2116 = vmatpush1.bf16.msra.mxu0 0
    %2117 = vmatprep.subr.bf16.mxu0 0
    %2118 = vmatpush1.bf16.msra.mxu0 0
    %2119 = vmatprep.subr.bf16.mxu0 0
    %2120 = vmatpush1.bf16.msra.mxu0 0
    %2121 = vmatprep.subr.bf16.mxu0 0
    %2122 = vmatpush1.bf16.msra.mxu0 0
    %2123 = vmatprep.subr.bf16.mxu0 0
    %2124 = vmatpush1.bf16.msra.mxu0 0
    %2125 = vmatprep.mubr.bf16.mxu0 0
    %2126 = vmatmul.mubr.bf16.gmra.mrb[0].mxu0 %v1829
    %v2127 = vpop.f32.mrb[0].mxu0
    %v2128 = vadd.f32 0.0, %v2127
    %v2129 = vpop.f32.mrb[0].mxu0
    %v2130 = vpop.f32.mrb[0].mxu0
    %v2131 = vpop.f32.mrb[0].mxu0
    %2132 = vdwg.mxu0
    %v2134 = vsel %vm1831, %v1816, 0
    %2136 = vmatprep.subr.bf16.mxu0 0
    %2137 = vmatpush1.bf16.msra.mxu0 %v2134
    %2138 = vmatprep.subr.bf16.mxu0 0
    %2139 = vmatpush1.bf16.msra.mxu0 0
    %2140 = vmatprep.subr.bf16.mxu0 0
    %2141 = vmatpush1.bf16.msra.mxu0 0
    %2142 = vmatprep.subr.bf16.mxu0 0
    %2143 = vmatpush1.bf16.msra.mxu0 0
    %2144 = vmatprep.subr.bf16.mxu0 0
    %2145 = vmatpush1.bf16.msra.mxu0 0
    %2146 = vmatprep.subr.bf16.mxu0 0
    %2147 = vmatpush1.bf16.msra.mxu0 0
    %2148 = vmatprep.subr.bf16.mxu0 0
    %2149 = vmatpush1.bf16.msra.mxu0 0
    %2150 = vmatprep.subr.bf16.mxu0 0
    %2151 = vmatpush1.bf16.msra.mxu0 0
    %2152 = vmatprep.subr.bf16.mxu0 0
    %2153 = vmatpush1.bf16.msra.mxu0 0
    %2154 = vmatprep.subr.bf16.mxu0 0
    %2155 = vmatpush1.bf16.msra.mxu0 0
    %2156 = vmatprep.subr.bf16.mxu0 0
    %2157 = vmatpush1.bf16.msra.mxu0 0
    %2158 = vmatprep.subr.bf16.mxu0 0
    %2159 = vmatpush1.bf16.msra.mxu0 0
    %2160 = vmatprep.subr.bf16.mxu0 0
    %2161 = vmatpush1.bf16.msra.mxu0 0
    %2162 = vmatprep.subr.bf16.mxu0 0
    %2163 = vmatpush1.bf16.msra.mxu0 0
    %2164 = vmatprep.subr.bf16.mxu0 0
    %2165 = vmatpush1.bf16.msra.mxu0 0
    %2166 = vmatprep.subr.bf16.mxu0 0
    %2167 = vmatpush1.bf16.msra.mxu0 0
    %2168 = vmatprep.mubr.bf16.mxu0 0
    %2169 = vmatmul.mubr.bf16.gmra.mrb[0].mxu0 %v1829
    %v2170 = vpop.f32.mrb[0].mxu0
    %v2171 = vadd.f32 0.0, %v2170
    %v2172 = vpop.f32.mrb[0].mxu0
    %v2173 = vpop.f32.mrb[0].mxu0
    %v2174 = vpop.f32.mrb[0].mxu0
    %2175 = vdwg.mxu0
    %v2177 = vsel %vm1831, %v1817, 0
    %2179 = vmatprep.subr.bf16.mxu0 0
    %2180 = vmatpush1.bf16.msra.mxu0 %v2177
    %2181 = vmatprep.subr.bf16.mxu0 0
    %2182 = vmatpush1.bf16.msra.mxu0 0
    %2183 = vmatprep.subr.bf16.mxu0 0
    %2184 = vmatpush1.bf16.msra.mxu0 0
    %2185 = vmatprep.subr.bf16.mxu0 0
    %2186 = vmatpush1.bf16.msra.mxu0 0
    %2187 = vmatprep.subr.bf16.mxu0 0
    %2188 = vmatpush1.bf16.msra.mxu0 0
    %2189 = vmatprep.subr.bf16.mxu0 0
    %2190 = vmatpush1.bf16.msra.mxu0 0
    %2191 = vmatprep.subr.bf16.mxu0 0
    %2192 = vmatpush1.bf16.msra.mxu0 0
    %2193 = vmatprep.subr.bf16.mxu0 0
    %2194 = vmatpush1.bf16.msra.mxu0 0
    %2195 = vmatprep.subr.bf16.mxu0 0
    %2196 = vmatpush1.bf16.msra.mxu0 0
    %2197 = vmatprep.subr.bf16.mxu0 0
    %2198 = vmatpush1.bf16.msra.mxu0 0
    %2199 = vmatprep.subr.bf16.mxu0 0
    %2200 = vmatpush1.bf16.msra.mxu0 0
    %2201 = vmatprep.subr.bf16.mxu0 0
    %2202 = vmatpush1.bf16.msra.mxu0 0
    %2203 = vmatprep.subr.bf16.mxu0 0
    %2204 = vmatpush1.bf16.msra.mxu0 0
    %2205 = vmatprep.subr.bf16.mxu0 0
    %2206 = vmatpush1.bf16.msra.mxu0 0
    %2207 = vmatprep.subr.bf16.mxu0 0
    %2208 = vmatpush1.bf16.msra.mxu0 0
    %2209 = vmatprep.subr.bf16.mxu0 0
    %2210 = vmatpush1.bf16.msra.mxu0 0
    %2211 = vmatprep.mubr.bf16.mxu0 0
    %2212 = vmatmul.mubr.bf16.gmra.mrb[0].mxu0 %v1829
    %v2213 = vpop.f32.mrb[0].mxu0
    %v2214 = vadd.f32 0.0, %v2213
    %v2215 = vpop.f32.mrb[0].mxu0
    %v2216 = vpop.f32.mrb[0].mxu0
    %v2217 = vpop.f32.mrb[0].mxu0
    %2218 = vdwg.mxu0
    %v2220 = vsel %vm1831, %v1818, 0
    %2222 = vmatprep.subr.bf16.mxu0 0
    %2223 = vmatpush1.bf16.msra.mxu0 %v2220
    %2224 = vmatprep.subr.bf16.mxu0 0
    %2225 = vmatpush1.bf16.msra.mxu0 0
    %2226 = vmatprep.subr.bf16.mxu0 0
    %2227 = vmatpush1.bf16.msra.mxu0 0
    %2228 = vmatprep.subr.bf16.mxu0 0
    %2229 = vmatpush1.bf16.msra.mxu0 0
    %2230 = vmatprep.subr.bf16.mxu0 0
    %2231 = vmatpush1.bf16.msra.mxu0 0
    %2232 = vmatprep.subr.bf16.mxu0 0
    %2233 = vmatpush1.bf16.msra.mxu0 0
    %2234 = vmatprep.subr.bf16.mxu0 0
    %2235 = vmatpush1.bf16.msra.mxu0 0
    %2236 = vmatprep.subr.bf16.mxu0 0
    %2237 = vmatpush1.bf16.msra.mxu0 0
    %2238 = vmatprep.subr.bf16.mxu0 0
    %2239 = vmatpush1.bf16.msra.mxu0 0
    %2240 = vmatprep.subr.bf16.mxu0 0
    %2241 = vmatpush1.bf16.msra.mxu0 0
    %2242 = vmatprep.subr.bf16.mxu0 0
    %2243 = vmatpush1.bf16.msra.mxu0 0
    %2244 = vmatprep.subr.bf16.mxu0 0
    %2245 = vmatpush1.bf16.msra.mxu0 0
    %2246 = vmatprep.subr.bf16.mxu0 0
    %2247 = vmatpush1.bf16.msra.mxu0 0
    %2248 = vmatprep.subr.bf16.mxu0 0
    %2249 = vmatpush1.bf16.msra.mxu0 0
    %2250 = vmatprep.subr.bf16.mxu0 0
    %2251 = vmatpush1.bf16.msra.mxu0 0
    %2252 = vmatprep.subr.bf16.mxu0 0
    %2253 = vmatpush1.bf16.msra.mxu0 0
    %2254 = vmatprep.mubr.bf16.mxu0 0
    %2255 = vmatmul.mubr.bf16.gmra.mrb[0].mxu0 %v1829
    %v2256 = vpop.f32.mrb[0].mxu0
    %v2257 = vadd.f32 0.0, %v2256
    %v2258 = vpop.f32.mrb[0].mxu0
    %v2259 = vpop.f32.mrb[0].mxu0
    %v2260 = vpop.f32.mrb[0].mxu0
    %2261 = vdwg.mxu0
    %v2263 = vsel %vm1831, %v1819, 0
    %2265 = vmatprep.subr.bf16.mxu0 0
    %2266 = vmatpush1.bf16.msra.mxu0 %v2263
    %2267 = vmatprep.subr.bf16.mxu0 0
    %2268 = vmatpush1.bf16.msra.mxu0 0
    %2269 = vmatprep.subr.bf16.mxu0 0
    %2270 = vmatpush1.bf16.msra.mxu0 0
    %2271 = vmatprep.subr.bf16.mxu0 0
    %2272 = vmatpush1.bf16.msra.mxu0 0
    %2273 = vmatprep.subr.bf16.mxu0 0
    %2274 = vmatpush1.bf16.msra.mxu0 0
    %2275 = vmatprep.subr.bf16.mxu0 0
    %2276 = vmatpush1.bf16.msra.mxu0 0
    %2277 = vmatprep.subr.bf16.mxu0 0
    %2278 = vmatpush1.bf16.msra.mxu0 0
    %2279 = vmatprep.subr.bf16.mxu0 0
    %2280 = vmatpush1.bf16.msra.mxu0 0
    %2281 = vmatprep.subr.bf16.mxu0 0
    %2282 = vmatpush1.bf16.msra.mxu0 0
    %2283 = vmatprep.subr.bf16.mxu0 0
    %2284 = vmatpush1.bf16.msra.mxu0 0
    %2285 = vmatprep.subr.bf16.mxu0 0
    %2286 = vmatpush1.bf16.msra.mxu0 0
    %2287 = vmatprep.subr.bf16.mxu0 0
    %2288 = vmatpush1.bf16.msra.mxu0 0
    %2289 = vmatprep.subr.bf16.mxu0 0
    %2290 = vmatpush1.bf16.msra.mxu0 0
    %2291 = vmatprep.subr.bf16.mxu0 0
    %2292 = vmatpush1.bf16.msra.mxu0 0
    %2293 = vmatprep.subr.bf16.mxu0 0
    %2294 = vmatpush1.bf16.msra.mxu0 0
    %2295 = vmatprep.subr.bf16.mxu0 0
    %2296 = vmatpush1.bf16.msra.mxu0 0
    %2297 = vmatprep.mubr.bf16.mxu0 0
    %2298 = vmatmul.mubr.bf16.gmra.mrb[0].mxu0 %v1829
    %v2299 = vpop.f32.mrb[0].mxu0
    %v2300 = vadd.f32 0.0, %v2299
    %v2301 = vpop.f32.mrb[0].mxu0
    %v2302 = vpop.f32.mrb[0].mxu0
    %v2303 = vpop.f32.mrb[0].mxu0
    %2304 = vdwg.mxu0
    %v2306 = vsel %vm1831, %v1820, 0
    %2308 = vmatprep.subr.bf16.mxu0 0
    %2309 = vmatpush1.bf16.msra.mxu0 %v2306
    %2310 = vmatprep.subr.bf16.mxu0 0
    %2311 = vmatpush1.bf16.msra.mxu0 0
    %2312 = vmatprep.subr.bf16.mxu0 0
    %2313 = vmatpush1.bf16.msra.mxu0 0
    %2314 = vmatprep.subr.bf16.mxu0 0
    %2315 = vmatpush1.bf16.msra.mxu0 0
    %2316 = vmatprep.subr.bf16.mxu0 0
    %2317 = vmatpush1.bf16.msra.mxu0 0
    %2318 = vmatprep.subr.bf16.mxu0 0
    %2319 = vmatpush1.bf16.msra.mxu0 0
    %2320 = vmatprep.subr.bf16.mxu0 0
    %2321 = vmatpush1.bf16.msra.mxu0 0
    %2322 = vmatprep.subr.bf16.mxu0 0
    %2323 = vmatpush1.bf16.msra.mxu0 0
    %2324 = vmatprep.subr.bf16.mxu0 0
    %2325 = vmatpush1.bf16.msra.mxu0 0
    %2326 = vmatprep.subr.bf16.mxu0 0
    %2327 = vmatpush1.bf16.msra.mxu0 0
    %2328 = vmatprep.subr.bf16.mxu0 0
    %2329 = vmatpush1.bf16.msra.mxu0 0
    %2330 = vmatprep.subr.bf16.mxu0 0
    %2331 = vmatpush1.bf16.msra.mxu0 0
    %2332 = vmatprep.subr.bf16.mxu0 0
    %2333 = vmatpush1.bf16.msra.mxu0 0
    %2334 = vmatprep.subr.bf16.mxu0 0
    %2335 = vmatpush1.bf16.msra.mxu0 0
    %2336 = vmatprep.subr.bf16.mxu0 0
    %2337 = vmatpush1.bf16.msra.mxu0 0
    %2338 = vmatprep.subr.bf16.mxu0 0
    %2339 = vmatpush1.bf16.msra.mxu0 0
    %2340 = vmatprep.mubr.bf16.mxu0 0
    %2341 = vmatmul.mubr.bf16.gmra.mrb[0].mxu0 %v1829
    %v2342 = vpop.f32.mrb[0].mxu0
    %v2343 = vadd.f32 0.0, %v2342
    %v2344 = vpop.f32.mrb[0].mxu0
    %v2345 = vpop.f32.mrb[0].mxu0
    %v2346 = vpop.f32.mrb[0].mxu0
    %2347 = vdwg.mxu0
    %v2349 = vsel %vm1831, %v1821, 0
    %2351 = vmatprep.subr.bf16.mxu0 0
    %2352 = vmatpush1.bf16.msra.mxu0 %v2349
    %2353 = vmatprep.subr.bf16.mxu0 0
    %2354 = vmatpush1.bf16.msra.mxu0 0
    %2355 = vmatprep.subr.bf16.mxu0 0
    %2356 = vmatpush1.bf16.msra.mxu0 0
    %2357 = vmatprep.subr.bf16.mxu0 0
    %2358 = vmatpush1.bf16.msra.mxu0 0
    %2359 = vmatprep.subr.bf16.mxu0 0
    %2360 = vmatpush1.bf16.msra.mxu0 0
    %2361 = vmatprep.subr.bf16.mxu0 0
    %2362 = vmatpush1.bf16.msra.mxu0 0
    %2363 = vmatprep.subr.bf16.mxu0 0
    %2364 = vmatpush1.bf16.msra.mxu0 0
    %2365 = vmatprep.subr.bf16.mxu0 0
    %2366 = vmatpush1.bf16.msra.mxu0 0
    %2367 = vmatprep.subr.bf16.mxu0 0
    %2368 = vmatpush1.bf16.msra.mxu0 0
    %2369 = vmatprep.subr.bf16.mxu0 0
    %2370 = vmatpush1.bf16.msra.mxu0 0
    %2371 = vmatprep.subr.bf16.mxu0 0
    %2372 = vmatpush1.bf16.msra.mxu0 0
    %2373 = vmatprep.subr.bf16.mxu0 0
    %2374 = vmatpush1.bf16.msra.mxu0 0
    %2375 = vmatprep.subr.bf16.mxu0 0
    %2376 = vmatpush1.bf16.msra.mxu0 0
    %2377 = vmatprep.subr.bf16.mxu0 0
    %2378 = vmatpush1.bf16.msra.mxu0 0
    %2379 = vmatprep.subr.bf16.mxu0 0
    %2380 = vmatpush1.bf16.msra.mxu0 0
    %2381 = vmatprep.subr.bf16.mxu0 0
    %2382 = vmatpush1.bf16.msra.mxu0 0
    %2383 = vmatprep.mubr.bf16.mxu0 0
    %2384 = vmatmul.mubr.bf16.gmra.mrb[0].mxu0 %v1829
    %v2385 = vpop.f32.mrb[0].mxu0
    %v2386 = vadd.f32 0.0, %v2385
    %v2387 = vpop.f32.mrb[0].mxu0
    %v2388 = vpop.f32.mrb[0].mxu0
    %v2389 = vpop.f32.mrb[0].mxu0
    %2390 = vdwg.mxu0
    %v2392 = vsel %vm1831, %v1822, 0
    %2394 = vmatprep.subr.bf16.mxu0 0
    %2395 = vmatpush1.bf16.msra.mxu0 %v2392
    %2396 = vmatprep.subr.bf16.mxu0 0
    %2397 = vmatpush1.bf16.msra.mxu0 0
    %2398 = vmatprep.subr.bf16.mxu0 0
    %2399 = vmatpush1.bf16.msra.mxu0 0
    %2400 = vmatprep.subr.bf16.mxu0 0
    %2401 = vmatpush1.bf16.msra.mxu0 0
    %2402 = vmatprep.subr.bf16.mxu0 0
    %2403 = vmatpush1.bf16.msra.mxu0 0
    %2404 = vmatprep.subr.bf16.mxu0 0
    %2405 = vmatpush1.bf16.msra.mxu0 0
    %2406 = vmatprep.subr.bf16.mxu0 0
    %2407 = vmatpush1.bf16.msra.mxu0 0
    %2408 = vmatprep.subr.bf16.mxu0 0
    %2409 = vmatpush1.bf16.msra.mxu0 0
    %2410 = vmatprep.subr.bf16.mxu0 0
    %2411 = vmatpush1.bf16.msra.mxu0 0
    %2412 = vmatprep.subr.bf16.mxu0 0
    %2413 = vmatpush1.bf16.msra.mxu0 0
    %2414 = vmatprep.subr.bf16.mxu0 0
    %2415 = vmatpush1.bf16.msra.mxu0 0
    %2416 = vmatprep.subr.bf16.mxu0 0
    %2417 = vmatpush1.bf16.msra.mxu0 0
    %2418 = vmatprep.subr.bf16.mxu0 0
    %2419 = vmatpush1.bf16.msra.mxu0 0
    %2420 = vmatprep.subr.bf16.mxu0 0
    %2421 = vmatpush1.bf16.msra.mxu0 0
    %2422 = vmatprep.subr.bf16.mxu0 0
    %2423 = vmatpush1.bf16.msra.mxu0 0
    %2424 = vmatprep.subr.bf16.mxu0 0
    %2425 = vmatpush1.bf16.msra.mxu0 0
    %2426 = vmatprep.mubr.bf16.mxu0 0
    %2427 = vmatmul.mubr.bf16.gmra.mrb[0].mxu0 %v1829
    %v2428 = vpop.f32.mrb[0].mxu0
    %v2429 = vadd.f32 0.0, %v2428
    %v2430 = vpop.f32.mrb[0].mxu0
    %v2431 = vpop.f32.mrb[0].mxu0
    %v2432 = vpop.f32.mrb[0].mxu0
    %2433 = vdwg.mxu0
    %v2435 = vsel %vm1831, %v1823, 0
    %2437 = vmatprep.subr.bf16.mxu0 0
    %2438 = vmatpush1.bf16.msra.mxu0 %v2435
    %2439 = vmatprep.subr.bf16.mxu0 0
    %2440 = vmatpush1.bf16.msra.mxu0 0
    %2441 = vmatprep.subr.bf16.mxu0 0
    %2442 = vmatpush1.bf16.msra.mxu0 0
    %2443 = vmatprep.subr.bf16.mxu0 0
    %2444 = vmatpush1.bf16.msra.mxu0 0
    %2445 = vmatprep.subr.bf16.mxu0 0
    %2446 = vmatpush1.bf16.msra.mxu0 0
    %2447 = vmatprep.subr.bf16.mxu0 0
    %2448 = vmatpush1.bf16.msra.mxu0 0
    %2449 = vmatprep.subr.bf16.mxu0 0
    %2450 = vmatpush1.bf16.msra.mxu0 0
    %2451 = vmatprep.subr.bf16.mxu0 0
    %2452 = vmatpush1.bf16.msra.mxu0 0
    %2453 = vmatprep.subr.bf16.mxu0 0
    %2454 = vmatpush1.bf16.msra.mxu0 0
    %2455 = vmatprep.subr.bf16.mxu0 0
    %2456 = vmatpush1.bf16.msra.mxu0 0
    %2457 = vmatprep.subr.bf16.mxu0 0
    %2458 = vmatpush1.bf16.msra.mxu0 0
    %2459 = vmatprep.subr.bf16.mxu0 0
    %2460 = vmatpush1.bf16.msra.mxu0 0
    %2461 = vmatprep.subr.bf16.mxu0 0
    %2462 = vmatpush1.bf16.msra.mxu0 0
    %2463 = vmatprep.subr.bf16.mxu0 0
    %2464 = vmatpush1.bf16.msra.mxu0 0
    %2465 = vmatprep.subr.bf16.mxu0 0
    %2466 = vmatpush1.bf16.msra.mxu0 0
    %2467 = vmatprep.subr.bf16.mxu0 0
    %2468 = vmatpush1.bf16.msra.mxu0 0
    %2469 = vmatprep.mubr.bf16.mxu0 0
    %2470 = vmatmul.mubr.bf16.gmra.mrb[0].mxu0 %v1829
    %v2471 = vpop.f32.mrb[0].mxu0
    %v2472 = vadd.f32 0.0, %v2471
    %v2473 = vpop.f32.mrb[0].mxu0
    %v2474 = vpop.f32.mrb[0].mxu0
    %v2475 = vpop.f32.mrb[0].mxu0
    %2476 = vdwg.mxu0
    %v2478 = vsel %vm1831, %v1824, 0
    %2480 = vmatprep.subr.bf16.mxu0 0
    %2481 = vmatpush1.bf16.msra.mxu0 %v2478
    %2482 = vmatprep.subr.bf16.mxu0 0
    %2483 = vmatpush1.bf16.msra.mxu0 0
    %2484 = vmatprep.subr.bf16.mxu0 0
    %2485 = vmatpush1.bf16.msra.mxu0 0
    %2486 = vmatprep.subr.bf16.mxu0 0
    %2487 = vmatpush1.bf16.msra.mxu0 0
    %2488 = vmatprep.subr.bf16.mxu0 0
    %2489 = vmatpush1.bf16.msra.mxu0 0
    %2490 = vmatprep.subr.bf16.mxu0 0
    %2491 = vmatpush1.bf16.msra.mxu0 0
    %2492 = vmatprep.subr.bf16.mxu0 0
    %2493 = vmatpush1.bf16.msra.mxu0 0
    %2494 = vmatprep.subr.bf16.mxu0 0
    %2495 = vmatpush1.bf16.msra.mxu0 0
    %2496 = vmatprep.subr.bf16.mxu0 0
    %2497 = vmatpush1.bf16.msra.mxu0 0
    %2498 = vmatprep.subr.bf16.mxu0 0
    %2499 = vmatpush1.bf16.msra.mxu0 0
    %2500 = vmatprep.subr.bf16.mxu0 0
    %2501 = vmatpush1.bf16.msra.mxu0 0
    %2502 = vmatprep.subr.bf16.mxu0 0
    %2503 = vmatpush1.bf16.msra.mxu0 0
    %2504 = vmatprep.subr.bf16.mxu0 0
    %2505 = vmatpush1.bf16.msra.mxu0 0
    %2506 = vmatprep.subr.bf16.mxu0 0
    %2507 = vmatpush1.bf16.msra.mxu0 0
    %2508 = vmatprep.subr.bf16.mxu0 0
    %2509 = vmatpush1.bf16.msra.mxu0 0
    %2510 = vmatprep.subr.bf16.mxu0 0
    %2511 = vmatpush1.bf16.msra.mxu0 0
    %2512 = vmatprep.mubr.bf16.mxu0 0
    %2513 = vmatmul.mubr.bf16.gmra.mrb[0].mxu0 %v1829
    %v2514 = vpop.f32.mrb[0].mxu0
    %v2515 = vadd.f32 0.0, %v2514
    %v2516 = vpop.f32.mrb[0].mxu0
    %v2517 = vpop.f32.mrb[0].mxu0
    %v2518 = vpop.f32.mrb[0].mxu0
    %2519 = vdwg.mxu0
    %v2521 = vsel %vm1827, %v1826, 0
    %2523 = vmatprep.subr.bf16.mxu0 0
    %2524 = vmatpush1.bf16.msra.mxu0 %v1833
    %2525 = vmatprep.subr.bf16.mxu0 0
    %2526 = vmatpush1.bf16.msra.mxu0 0
    %2527 = vmatprep.subr.bf16.mxu0 0
    %2528 = vmatpush1.bf16.msra.mxu0 0
    %2529 = vmatprep.subr.bf16.mxu0 0
    %2530 = vmatpush1.bf16.msra.mxu0 0
    %2531 = vmatprep.subr.bf16.mxu0 0
    %2532 = vmatpush1.bf16.msra.mxu0 0
    %2533 = vmatprep.subr.bf16.mxu0 0
    %2534 = vmatpush1.bf16.msra.mxu0 0
    %2535 = vmatprep.subr.bf16.mxu0 0
    %2536 = vmatpush1.bf16.msra.mxu0 0
    %2537 = vmatprep.subr.bf16.mxu0 0
    %2538 = vmatpush1.bf16.msra.mxu0 0
    %2539 = vmatprep.subr.bf16.mxu0 0
    %2540 = vmatpush1.bf16.msra.mxu0 0
    %2541 = vmatprep.subr.bf16.mxu0 0
    %2542 = vmatpush1.bf16.msra.mxu0 0
    %2543 = vmatprep.subr.bf16.mxu0 0
    %2544 = vmatpush1.bf16.msra.mxu0 0
    %2545 = vmatprep.subr.bf16.mxu0 0
    %2546 = vmatpush1.bf16.msra.mxu0 0
    %2547 = vmatprep.subr.bf16.mxu0 0
    %2548 = vmatpush1.bf16.msra.mxu0 0
    %2549 = vmatprep.subr.bf16.mxu0 0
    %2550 = vmatpush1.bf16.msra.mxu0 0
    %2551 = vmatprep.subr.bf16.mxu0 0
    %2552 = vmatpush1.bf16.msra.mxu0 0
    %2553 = vmatprep.subr.bf16.mxu0 0
    %2554 = vmatpush1.bf16.msra.mxu0 0
    %2555 = vmatprep.mubr.bf16.mxu0 0
    %2556 = vmatmul.mubr.bf16.gmra.mrb[0].mxu0 %v2521
    %v2557 = vpop.f32.mrb[0].mxu0
    %v2558 = vadd.f32 0.0, %v2557
    %v2559 = vpop.f32.mrb[0].mxu0
    %v2560 = vpop.f32.mrb[0].mxu0
    %v2561 = vpop.f32.mrb[0].mxu0
    %2562 = vdwg.mxu0
    %2563 = vmatprep.subr.bf16.mxu0 0
    %2564 = vmatpush1.bf16.msra.mxu0 %v1876
    %2565 = vmatprep.subr.bf16.mxu0 0
    %2566 = vmatpush1.bf16.msra.mxu0 0
    %2567 = vmatprep.subr.bf16.mxu0 0
    %2568 = vmatpush1.bf16.msra.mxu0 0
    %2569 = vmatprep.subr.bf16.mxu0 0
    %2570 = vmatpush1.bf16.msra.mxu0 0
    %2571 = vmatprep.subr.bf16.mxu0 0
    %2572 = vmatpush1.bf16.msra.mxu0 0
    %2573 = vmatprep.subr.bf16.mxu0 0
    %2574 = vmatpush1.bf16.msra.mxu0 0
    %2575 = vmatprep.subr.bf16.mxu0 0
    %2576 = vmatpush1.bf16.msra.mxu0 0
    %2577 = vmatprep.subr.bf16.mxu0 0
    %2578 = vmatpush1.bf16.msra.mxu0 0
    %2579 = vmatprep.subr.bf16.mxu0 0
    %2580 = vmatpush1.bf16.msra.mxu0 0
    %2581 = vmatprep.subr.bf16.mxu0 0
    %2582 = vmatpush1.bf16.msra.mxu0 0
    %2583 = vmatprep.subr.bf16.mxu0 0
    %2584 = vmatpush1.bf16.msra.mxu0 0
    %2585 = vmatprep.subr.bf16.mxu0 0
    %2586 = vmatpush1.bf16.msra.mxu0 0
    %2587 = vmatprep.subr.bf16.mxu0 0
    %2588 = vmatpush1.bf16.msra.mxu0 0
    %2589 = vmatprep.subr.bf16.mxu0 0
    %2590 = vmatpush1.bf16.msra.mxu0 0
    %2591 = vmatprep.subr.bf16.mxu0 0
    %2592 = vmatpush1.bf16.msra.mxu0 0
    %2593 = vmatprep.subr.bf16.mxu0 0
    %2594 = vmatpush1.bf16.msra.mxu0 0
    %2595 = vmatprep.mubr.bf16.mxu0 0
    %2596 = vmatmul.mubr.bf16.gmra.mrb[0].mxu0 %v2521
    %v2597 = vpop.f32.mrb[0].mxu0
    %v2598 = vadd.f32 0.0, %v2597
    %v2599 = vpop.f32.mrb[0].mxu0
    %v2600 = vpop.f32.mrb[0].mxu0
    %v2601 = vpop.f32.mrb[0].mxu0
    %2602 = vdwg.mxu0
    %2603 = vmatprep.subr.bf16.mxu0 0
    %2604 = vmatpush1.bf16.msra.mxu0 %v1919
    %2605 = vmatprep.subr.bf16.mxu0 0
    %2606 = vmatpush1.bf16.msra.mxu0 0
    %2607 = vmatprep.subr.bf16.mxu0 0
    %2608 = vmatpush1.bf16.msra.mxu0 0
    %2609 = vmatprep.subr.bf16.mxu0 0
    %2610 = vmatpush1.bf16.msra.mxu0 0
    %2611 = vmatprep.subr.bf16.mxu0 0
    %2612 = vmatpush1.bf16.msra.mxu0 0
    %2613 = vmatprep.subr.bf16.mxu0 0
    %2614 = vmatpush1.bf16.msra.mxu0 0
    %2615 = vmatprep.subr.bf16.mxu0 0
    %2616 = vmatpush1.bf16.msra.mxu0 0
    %2617 = vmatprep.subr.bf16.mxu0 0
    %2618 = vmatpush1.bf16.msra.mxu0 0
    %2619 = vmatprep.subr.bf16.mxu0 0
    %2620 = vmatpush1.bf16.msra.mxu0 0
    %2621 = vmatprep.subr.bf16.mxu0 0
    %2622 = vmatpush1.bf16.msra.mxu0 0
    %2623 = vmatprep.subr.bf16.mxu0 0
    %2624 = vmatpush1.bf16.msra.mxu0 0
    %2625 = vmatprep.subr.bf16.mxu0 0
    %2626 = vmatpush1.bf16.msra.mxu0 0
    %2627 = vmatprep.subr.bf16.mxu0 0
    %2628 = vmatpush1.bf16.msra.mxu0 0
    %2629 = vmatprep.subr.bf16.mxu0 0
    %2630 = vmatpush1.bf16.msra.mxu0 0
    %2631 = vmatprep.subr.bf16.mxu0 0
    %2632 = vmatpush1.bf16.msra.mxu0 0
    %2633 = vmatprep.subr.bf16.mxu0 0
    %2634 = vmatpush1.bf16.msra.mxu0 0
    %2635 = vmatprep.mubr.bf16.mxu0 0
    %2636 = vmatmul.mubr.bf16.gmra.mrb[0].mxu0 %v2521
    %v2637 = vpop.f32.mrb[0].mxu0
    %v2638 = vadd.f32 0.0, %v2637
    %v2639 = vpop.f32.mrb[0].mxu0
    %v2640 = vpop.f32.mrb[0].mxu0
    %v2641 = vpop.f32.mrb[0].mxu0
    %2642 = vdwg.mxu0
    %2643 = vmatprep.subr.bf16.mxu0 0
    %2644 = vmatpush1.bf16.msra.mxu0 %v1962
    %2645 = vmatprep.subr.bf16.mxu0 0
    %2646 = vmatpush1.bf16.msra.mxu0 0
    %2647 = vmatprep.subr.bf16.mxu0 0
    %2648 = vmatpush1.bf16.msra.mxu0 0
    %2649 = vmatprep.subr.bf16.mxu0 0
    %2650 = vmatpush1.bf16.msra.mxu0 0
    %2651 = vmatprep.subr.bf16.mxu0 0
    %2652 = vmatpush1.bf16.msra.mxu0 0
    %2653 = vmatprep.subr.bf16.mxu0 0
    %2654 = vmatpush1.bf16.msra.mxu0 0
    %2655 = vmatprep.subr.bf16.mxu0 0
    %2656 = vmatpush1.bf16.msra.mxu0 0
    %2657 = vmatprep.subr.bf16.mxu0 0
    %2658 = vmatpush1.bf16.msra.mxu0 0
    %2659 = vmatprep.subr.bf16.mxu0 0
    %2660 = vmatpush1.bf16.msra.mxu0 0
    %2661 = vmatprep.subr.bf16.mxu0 0
    %2662 = vmatpush1.bf16.msra.mxu0 0
    %2663 = vmatprep.subr.bf16.mxu0 0
    %2664 = vmatpush1.bf16.msra.mxu0 0
    %2665 = vmatprep.subr.bf16.mxu0 0
    %2666 = vmatpush1.bf16.msra.mxu0 0
    %2667 = vmatprep.subr.bf16.mxu0 0
    %2668 = vmatpush1.bf16.msra.mxu0 0
    %2669 = vmatprep.subr.bf16.mxu0 0
    %2670 = vmatpush1.bf16.msra.mxu0 0
    %2671 = vmatprep.subr.bf16.mxu0 0
    %2672 = vmatpush1.bf16.msra.mxu0 0
    %2673 = vmatprep.subr.bf16.mxu0 0
    %2674 = vmatpush1.bf16.msra.mxu0 0
    %2675 = vmatprep.mubr.bf16.mxu0 0
    %2676 = vmatmul.mubr.bf16.gmra.mrb[0].mxu0 %v2521
    %v2677 = vpop.f32.mrb[0].mxu0
    %v2678 = vadd.f32 0.0, %v2677
    %v2679 = vpop.f32.mrb[0].mxu0
    %v2680 = vpop.f32.mrb[0].mxu0
    %v2681 = vpop.f32.mrb[0].mxu0
    %2682 = vdwg.mxu0
    %2683 = vmatprep.subr.bf16.mxu0 0
    %2684 = vmatpush1.bf16.msra.mxu0 %v2005
    %2685 = vmatprep.subr.bf16.mxu0 0
    %2686 = vmatpush1.bf16.msra.mxu0 0
    %2687 = vmatprep.subr.bf16.mxu0 0
    %2688 = vmatpush1.bf16.msra.mxu0 0
    %2689 = vmatprep.subr.bf16.mxu0 0
    %2690 = vmatpush1.bf16.msra.mxu0 0
    %2691 = vmatprep.subr.bf16.mxu0 0
    %2692 = vmatpush1.bf16.msra.mxu0 0
    %2693 = vmatprep.subr.bf16.mxu0 0
    %2694 = vmatpush1.bf16.msra.mxu0 0
    %2695 = vmatprep.subr.bf16.mxu0 0
    %2696 = vmatpush1.bf16.msra.mxu0 0
    %2697 = vmatprep.subr.bf16.mxu0 0
    %2698 = vmatpush1.bf16.msra.mxu0 0
    %2699 = vmatprep.subr.bf16.mxu0 0
    %2700 = vmatpush1.bf16.msra.mxu0 0
    %2701 = vmatprep.subr.bf16.mxu0 0
    %2702 = vmatpush1.bf16.msra.mxu0 0
    %2703 = vmatprep.subr.bf16.mxu0 0
    %2704 = vmatpush1.bf16.msra.mxu0 0
    %2705 = vmatprep.subr.bf16.mxu0 0
    %2706 = vmatpush1.bf16.msra.mxu0 0
    %2707 = vmatprep.subr.bf16.mxu0 0
    %2708 = vmatpush1.bf16.msra.mxu0 0
    %2709 = vmatprep.subr.bf16.mxu0 0
    %2710 = vmatpush1.bf16.msra.mxu0 0
    %2711 = vmatprep.subr.bf16.mxu0 0
    %2712 = vmatpush1.bf16.msra.mxu0 0
    %2713 = vmatprep.subr.bf16.mxu0 0
    %2714 = vmatpush1.bf16.msra.mxu0 0
    %2715 = vmatprep.mubr.bf16.mxu0 0
    %2716 = vmatmul.mubr.bf16.gmra.mrb[0].mxu0 %v2521
    %v2717 = vpop.f32.mrb[0].mxu0
    %v2718 = vadd.f32 0.0, %v2717
    %v2719 = vpop.f32.mrb[0].mxu0
    %v2720 = vpop.f32.mrb[0].mxu0
    %v2721 = vpop.f32.mrb[0].mxu0
    %2722 = vdwg.mxu0
    %2723 = vmatprep.subr.bf16.mxu0 0
    %2724 = vmatpush1.bf16.msra.mxu0 %v2048
    %2725 = vmatprep.subr.bf16.mxu0 0
    %2726 = vmatpush1.bf16.msra.mxu0 0
    %2727 = vmatprep.subr.bf16.mxu0 0
    %2728 = vmatpush1.bf16.msra.mxu0 0
    %2729 = vmatprep.subr.bf16.mxu0 0
    %2730 = vmatpush1.bf16.msra.mxu0 0
    %2731 = vmatprep.subr.bf16.mxu0 0
    %2732 = vmatpush1.bf16.msra.mxu0 0
    %2733 = vmatprep.subr.bf16.mxu0 0
    %2734 = vmatpush1.bf16.msra.mxu0 0
    %2735 = vmatprep.subr.bf16.mxu0 0
    %2736 = vmatpush1.bf16.msra.mxu0 0
    %2737 = vmatprep.subr.bf16.mxu0 0
    %2738 = vmatpush1.bf16.msra.mxu0 0
    %2739 = vmatprep.subr.bf16.mxu0 0
    %2740 = vmatpush1.bf16.msra.mxu0 0
    %2741 = vmatprep.subr.bf16.mxu0 0
    %2742 = vmatpush1.bf16.msra.mxu0 0
    %2743 = vmatprep.subr.bf16.mxu0 0
    %2744 = vmatpush1.bf16.msra.mxu0 0
    %2745 = vmatprep.subr.bf16.mxu0 0
    %2746 = vmatpush1.bf16.msra.mxu0 0
    %2747 = vmatprep.subr.bf16.mxu0 0
    %2748 = vmatpush1.bf16.msra.mxu0 0
    %2749 = vmatprep.subr.bf16.mxu0 0
    %2750 = vmatpush1.bf16.msra.mxu0 0
    %2751 = vmatprep.subr.bf16.mxu0 0
    %2752 = vmatpush1.bf16.msra.mxu0 0
    %2753 = vmatprep.subr.bf16.mxu0 0
    %2754 = vmatpush1.bf16.msra.mxu0 0
    %2755 = vmatprep.mubr.bf16.mxu0 0
    %2756 = vmatmul.mubr.bf16.gmra.mrb[0].mxu0 %v2521
    %v2757 = vpop.f32.mrb[0].mxu0
    %v2758 = vadd.f32 0.0, %v2757
    %v2759 = vpop.f32.mrb[0].mxu0
    %v2760 = vpop.f32.mrb[0].mxu0
    %v2761 = vpop.f32.mrb[0].mxu0
    %2762 = vdwg.mxu0
    %2763 = vmatprep.subr.bf16.mxu0 0
    %2764 = vmatpush1.bf16.msra.mxu0 %v2091
    %2765 = vmatprep.subr.bf16.mxu0 0
    %2766 = vmatpush1.bf16.msra.mxu0 0
    %2767 = vmatprep.subr.bf16.mxu0 0
    %2768 = vmatpush1.bf16.msra.mxu0 0
    %2769 = vmatprep.subr.bf16.mxu0 0
    %2770 = vmatpush1.bf16.msra.mxu0 0
    %2771 = vmatprep.subr.bf16.mxu0 0
    %2772 = vmatpush1.bf16.msra.mxu0 0
    %2773 = vmatprep.subr.bf16.mxu0 0
    %2774 = vmatpush1.bf16.msra.mxu0 0
    %2775 = vmatprep.subr.bf16.mxu0 0
    %2776 = vmatpush1.bf16.msra.mxu0 0
    %2777 = vmatprep.subr.bf16.mxu0 0
    %2778 = vmatpush1.bf16.msra.mxu0 0
    %2779 = vmatprep.subr.bf16.mxu0 0
    %2780 = vmatpush1.bf16.msra.mxu0 0
    %2781 = vmatprep.subr.bf16.mxu0 0
    %2782 = vmatpush1.bf16.msra.mxu0 0
    %2783 = vmatprep.subr.bf16.mxu0 0
    %2784 = vmatpush1.bf16.msra.mxu0 0
    %2785 = vmatprep.subr.bf16.mxu0 0
    %2786 = vmatpush1.bf16.msra.mxu0 0
    %2787 = vmatprep.subr.bf16.mxu0 0
    %2788 = vmatpush1.bf16.msra.mxu0 0
    %2789 = vmatprep.subr.bf16.mxu0 0
    %2790 = vmatpush1.bf16.msra.mxu0 0
    %2791 = vmatprep.subr.bf16.mxu0 0
    %2792 = vmatpush1.bf16.msra.mxu0 0
    %2793 = vmatprep.subr.bf16.mxu0 0
    %2794 = vmatpush1.bf16.msra.mxu0 0
    %2795 = vmatprep.mubr.bf16.mxu0 0
    %2796 = vmatmul.mubr.bf16.gmra.mrb[0].mxu0 %v2521
    %v2797 = vpop.f32.mrb[0].mxu0
    %v2798 = vadd.f32 0.0, %v2797
    %v2799 = vpop.f32.mrb[0].mxu0
    %v2800 = vpop.f32.mrb[0].mxu0
    %v2801 = vpop.f32.mrb[0].mxu0
    %2802 = vdwg.mxu0
    %2803 = vmatprep.subr.bf16.mxu0 0
    %2804 = vmatpush1.bf16.msra.mxu0 %v2134
    %2805 = vmatprep.subr.bf16.mxu0 0
    %2806 = vmatpush1.bf16.msra.mxu0 0
    %2807 = vmatprep.subr.bf16.mxu0 0
    %2808 = vmatpush1.bf16.msra.mxu0 0
    %2809 = vmatprep.subr.bf16.mxu0 0
    %2810 = vmatpush1.bf16.msra.mxu0 0
    %2811 = vmatprep.subr.bf16.mxu0 0
    %2812 = vmatpush1.bf16.msra.mxu0 0
    %2813 = vmatprep.subr.bf16.mxu0 0
    %2814 = vmatpush1.bf16.msra.mxu0 0
    %2815 = vmatprep.subr.bf16.mxu0 0
    %2816 = vmatpush1.bf16.msra.mxu0 0
    %2817 = vmatprep.subr.bf16.mxu0 0
    %2818 = vmatpush1.bf16.msra.mxu0 0
    %2819 = vmatprep.subr.bf16.mxu0 0
    %2820 = vmatpush1.bf16.msra.mxu0 0
    %2821 = vmatprep.subr.bf16.mxu0 0
    %2822 = vmatpush1.bf16.msra.mxu0 0
    %2823 = vmatprep.subr.bf16.mxu0 0
    %2824 = vmatpush1.bf16.msra.mxu0 0
    %2825 = vmatprep.subr.bf16.mxu0 0
    %2826 = vmatpush1.bf16.msra.mxu0 0
    %2827 = vmatprep.subr.bf16.mxu0 0
    %2828 = vmatpush1.bf16.msra.mxu0 0
    %2829 = vmatprep.subr.bf16.mxu0 0
    %2830 = vmatpush1.bf16.msra.mxu0 0
    %2831 = vmatprep.subr.bf16.mxu0 0
    %2832 = vmatpush1.bf16.msra.mxu0 0
    %2833 = vmatprep.subr.bf16.mxu0 0
    %2834 = vmatpush1.bf16.msra.mxu0 0
    %2835 = vmatprep.mubr.bf16.mxu0 0
    %2836 = vmatmul.mubr.bf16.gmra.mrb[0].mxu0 %v2521
    %v2837 = vpop.f32.mrb[0].mxu0
    %v2838 = vadd.f32 0.0, %v2837
    %v2839 = vpop.f32.mrb[0].mxu0
    %v2840 = vpop.f32.mrb[0].mxu0
    %v2841 = vpop.f32.mrb[0].mxu0
    %2842 = vdwg.mxu0
    %2843 = vmatprep.subr.bf16.mxu0 0
    %2844 = vmatpush1.bf16.msra.mxu0 %v2177
    %2845 = vmatprep.subr.bf16.mxu0 0
    %2846 = vmatpush1.bf16.msra.mxu0 0
    %2847 = vmatprep.subr.bf16.mxu0 0
    %2848 = vmatpush1.bf16.msra.mxu0 0
    %2849 = vmatprep.subr.bf16.mxu0 0
    %2850 = vmatpush1.bf16.msra.mxu0 0
    %2851 = vmatprep.subr.bf16.mxu0 0
    %2852 = vmatpush1.bf16.msra.mxu0 0
    %2853 = vmatprep.subr.bf16.mxu0 0
    %2854 = vmatpush1.bf16.msra.mxu0 0
    %2855 = vmatprep.subr.bf16.mxu0 0
    %2856 = vmatpush1.bf16.msra.mxu0 0
    %2857 = vmatprep.subr.bf16.mxu0 0
    %2858 = vmatpush1.bf16.msra.mxu0 0
    %2859 = vmatprep.subr.bf16.mxu0 0
    %2860 = vmatpush1.bf16.msra.mxu0 0
    %2861 = vmatprep.subr.bf16.mxu0 0
    %2862 = vmatpush1.bf16.msra.mxu0 0
    %2863 = vmatprep.subr.bf16.mxu0 0
    %2864 = vmatpush1.bf16.msra.mxu0 0
    %2865 = vmatprep.subr.bf16.mxu0 0
    %2866 = vmatpush1.bf16.msra.mxu0 0
    %2867 = vmatprep.subr.bf16.mxu0 0
    %2868 = vmatpush1.bf16.msra.mxu0 0
    %2869 = vmatprep.subr.bf16.mxu0 0
    %2870 = vmatpush1.bf16.msra.mxu0 0
    %2871 = vmatprep.subr.bf16.mxu0 0
    %2872 = vmatpush1.bf16.msra.mxu0 0
    %2873 = vmatprep.subr.bf16.mxu0 0
    %2874 = vmatpush1.bf16.msra.mxu0 0
    %2875 = vmatprep.mubr.bf16.mxu0 0
    %2876 = vmatmul.mubr.bf16.gmra.mrb[0].mxu0 %v2521
    %v2877 = vpop.f32.mrb[0].mxu0
    %v2878 = vadd.f32 0.0, %v2877
    %v2879 = vpop.f32.mrb[0].mxu0
    %v2880 = vpop.f32.mrb[0].mxu0
    %v2881 = vpop.f32.mrb[0].mxu0
    %2882 = vdwg.mxu0
    %2883 = vmatprep.subr.bf16.mxu0 0
    %2884 = vmatpush1.bf16.msra.mxu0 %v2220
    %2885 = vmatprep.subr.bf16.mxu0 0
    %2886 = vmatpush1.bf16.msra.mxu0 0
    %2887 = vmatprep.subr.bf16.mxu0 0
    %2888 = vmatpush1.bf16.msra.mxu0 0
    %2889 = vmatprep.subr.bf16.mxu0 0
    %2890 = vmatpush1.bf16.msra.mxu0 0
    %2891 = vmatprep.subr.bf16.mxu0 0
    %2892 = vmatpush1.bf16.msra.mxu0 0
    %2893 = vmatprep.subr.bf16.mxu0 0
    %2894 = vmatpush1.bf16.msra.mxu0 0
    %2895 = vmatprep.subr.bf16.mxu0 0
    %2896 = vmatpush1.bf16.msra.mxu0 0
    %2897 = vmatprep.subr.bf16.mxu0 0
    %2898 = vmatpush1.bf16.msra.mxu0 0
    %2899 = vmatprep.subr.bf16.mxu0 0
    %2900 = vmatpush1.bf16.msra.mxu0 0
    %2901 = vmatprep.subr.bf16.mxu0 0
    %2902 = vmatpush1.bf16.msra.mxu0 0
    %2903 = vmatprep.subr.bf16.mxu0 0
    %2904 = vmatpush1.bf16.msra.mxu0 0
    %2905 = vmatprep.subr.bf16.mxu0 0
    %2906 = vmatpush1.bf16.msra.mxu0 0
    %2907 = vmatprep.subr.bf16.mxu0 0
    %2908 = vmatpush1.bf16.msra.mxu0 0
    %2909 = vmatprep.subr.bf16.mxu0 0
    %2910 = vmatpush1.bf16.msra.mxu0 0
    %2911 = vmatprep.subr.bf16.mxu0 0
    %2912 = vmatpush1.bf16.msra.mxu0 0
    %2913 = vmatprep.subr.bf16.mxu0 0
    %2914 = vmatpush1.bf16.msra.mxu0 0
    %2915 = vmatprep.mubr.bf16.mxu0 0
    %2916 = vmatmul.mubr.bf16.gmra.mrb[0].mxu0 %v2521
    %v2917 = vpop.f32.mrb[0].mxu0
    %v2918 = vadd.f32 0.0, %v2917
    %v2919 = vpop.f32.mrb[0].mxu0
    %v2920 = vpop.f32.mrb[0].mxu0
    %v2921 = vpop.f32.mrb[0].mxu0
    %2922 = vdwg.mxu0
    %2923 = vmatprep.subr.bf16.mxu0 0
    %2924 = vmatpush1.bf16.msra.mxu0 %v2263
    %2925 = vmatprep.subr.bf16.mxu0 0
    %2926 = vmatpush1.bf16.msra.mxu0 0
    %2927 = vmatprep.subr.bf16.mxu0 0
    %2928 = vmatpush1.bf16.msra.mxu0 0
    %2929 = vmatprep.subr.bf16.mxu0 0
    %2930 = vmatpush1.bf16.msra.mxu0 0
    %2931 = vmatprep.subr.bf16.mxu0 0
    %2932 = vmatpush1.bf16.msra.mxu0 0
    %2933 = vmatprep.subr.bf16.mxu0 0
    %2934 = vmatpush1.bf16.msra.mxu0 0
    %2935 = vmatprep.subr.bf16.mxu0 0
    %2936 = vmatpush1.bf16.msra.mxu0 0
    %2937 = vmatprep.subr.bf16.mxu0 0
    %2938 = vmatpush1.bf16.msra.mxu0 0
    %2939 = vmatprep.subr.bf16.mxu0 0
    %2940 = vmatpush1.bf16.msra.mxu0 0
    %2941 = vmatprep.subr.bf16.mxu0 0
    %2942 = vmatpush1.bf16.msra.mxu0 0
    %2943 = vmatprep.subr.bf16.mxu0 0
    %2944 = vmatpush1.bf16.msra.mxu0 0
    %2945 = vmatprep.subr.bf16.mxu0 0
    %2946 = vmatpush1.bf16.msra.mxu0 0
    %2947 = vmatprep.subr.bf16.mxu0 0
    %2948 = vmatpush1.bf16.msra.mxu0 0
    %2949 = vmatprep.subr.bf16.mxu0 0
    %2950 = vmatpush1.bf16.msra.mxu0 0
    %2951 = vmatprep.subr.bf16.mxu0 0
    %2952 = vmatpush1.bf16.msra.mxu0 0
    %2953 = vmatprep.subr.bf16.mxu0 0
    %2954 = vmatpush1.bf16.msra.mxu0 0
    %2955 = vmatprep.mubr.bf16.mxu0 0
    %2956 = vmatmul.mubr.bf16.gmra.mrb[0].mxu0 %v2521
    %v2957 = vpop.f32.mrb[0].mxu0
    %v2958 = vadd.f32 0.0, %v2957
    %v2959 = vpop.f32.mrb[0].mxu0
    %v2960 = vpop.f32.mrb[0].mxu0
    %v2961 = vpop.f32.mrb[0].mxu0
    %2962 = vdwg.mxu0
    %2963 = vmatprep.subr.bf16.mxu0 0
    %2964 = vmatpush1.bf16.msra.mxu0 %v2306
    %2965 = vmatprep.subr.bf16.mxu0 0
    %2966 = vmatpush1.bf16.msra.mxu0 0
    %2967 = vmatprep.subr.bf16.mxu0 0
    %2968 = vmatpush1.bf16.msra.mxu0 0
    %2969 = vmatprep.subr.bf16.mxu0 0
    %2970 = vmatpush1.bf16.msra.mxu0 0
    %2971 = vmatprep.subr.bf16.mxu0 0
    %2972 = vmatpush1.bf16.msra.mxu0 0
    %2973 = vmatprep.subr.bf16.mxu0 0
    %2974 = vmatpush1.bf16.msra.mxu0 0
    %2975 = vmatprep.subr.bf16.mxu0 0
    %2976 = vmatpush1.bf16.msra.mxu0 0
    %2977 = vmatprep.subr.bf16.mxu0 0
    %2978 = vmatpush1.bf16.msra.mxu0 0
    %2979 = vmatprep.subr.bf16.mxu0 0
    %2980 = vmatpush1.bf16.msra.mxu0 0
    %2981 = vmatprep.subr.bf16.mxu0 0
    %2982 = vmatpush1.bf16.msra.mxu0 0
    %2983 = vmatprep.subr.bf16.mxu0 0
    %2984 = vmatpush1.bf16.msra.mxu0 0
    %2985 = vmatprep.subr.bf16.mxu0 0
    %2986 = vmatpush1.bf16.msra.mxu0 0
    %2987 = vmatprep.subr.bf16.mxu0 0
    %2988 = vmatpush1.bf16.msra.mxu0 0
    %2989 = vmatprep.subr.bf16.mxu0 0
    %2990 = vmatpush1.bf16.msra.mxu0 0
    %2991 = vmatprep.subr.bf16.mxu0 0
    %2992 = vmatpush1.bf16.msra.mxu0 0
    %2993 = vmatprep.subr.bf16.mxu0 0
    %2994 = vmatpush1.bf16.msra.mxu0 0
    %2995 = vmatprep.mubr.bf16.mxu0 0
    %2996 = vmatmul.mubr.bf16.gmra.mrb[0].mxu0 %v2521
    %v2997 = vpop.f32.mrb[0].mxu0
    %v2998 = vadd.f32 0.0, %v2997
    %v2999 = vpop.f32.mrb[0].mxu0
    %v3000 = vpop.f32.mrb[0].mxu0
    %v3001 = vpop.f32.mrb[0].mxu0
    %3002 = vdwg.mxu0
    %3003 = vmatprep.subr.bf16.mxu0 0
    %3004 = vmatpush1.bf16.msra.mxu0 %v2349
    %3005 = vmatprep.subr.bf16.mxu0 0
    %3006 = vmatpush1.bf16.msra.mxu0 0
    %3007 = vmatprep.subr.bf16.mxu0 0
    %3008 = vmatpush1.bf16.msra.mxu0 0
    %3009 = vmatprep.subr.bf16.mxu0 0
    %3010 = vmatpush1.bf16.msra.mxu0 0
    %3011 = vmatprep.subr.bf16.mxu0 0
    %3012 = vmatpush1.bf16.msra.mxu0 0
    %3013 = vmatprep.subr.bf16.mxu0 0
    %3014 = vmatpush1.bf16.msra.mxu0 0
    %3015 = vmatprep.subr.bf16.mxu0 0
    %3016 = vmatpush1.bf16.msra.mxu0 0
    %3017 = vmatprep.subr.bf16.mxu0 0
    %3018 = vmatpush1.bf16.msra.mxu0 0
    %3019 = vmatprep.subr.bf16.mxu0 0
    %3020 = vmatpush1.bf16.msra.mxu0 0
    %3021 = vmatprep.subr.bf16.mxu0 0
    %3022 = vmatpush1.bf16.msra.mxu0 0
    %3023 = vmatprep.subr.bf16.mxu0 0
    %3024 = vmatpush1.bf16.msra.mxu0 0
    %3025 = vmatprep.subr.bf16.mxu0 0
    %3026 = vmatpush1.bf16.msra.mxu0 0
    %3027 = vmatprep.subr.bf16.mxu0 0
    %3028 = vmatpush1.bf16.msra.mxu0 0
    %3029 = vmatprep.subr.bf16.mxu0 0
    %3030 = vmatpush1.bf16.msra.mxu0 0
    %3031 = vmatprep.subr.bf16.mxu0 0
    %3032 = vmatpush1.bf16.msra.mxu0 0
    %3033 = vmatprep.subr.bf16.mxu0 0
    %3034 = vmatpush1.bf16.msra.mxu0 0
    %3035 = vmatprep.mubr.bf16.mxu0 0
    %3036 = vmatmul.mubr.bf16.gmra.mrb[0].mxu0 %v2521
    %v3037 = vpop.f32.mrb[0].mxu0
    %v3038 = vadd.f32 0.0, %v3037
    %v3039 = vpop.f32.mrb[0].mxu0
    %v3040 = vpop.f32.mrb[0].mxu0
    %v3041 = vpop.f32.mrb[0].mxu0
    %3042 = vdwg.mxu0
    %3043 = vmatprep.subr.bf16.mxu0 0
    %3044 = vmatpush1.bf16.msra.mxu0 %v2392
    %3045 = vmatprep.subr.bf16.mxu0 0
    %3046 = vmatpush1.bf16.msra.mxu0 0
    %3047 = vmatprep.subr.bf16.mxu0 0
    %3048 = vmatpush1.bf16.msra.mxu0 0
    %3049 = vmatprep.subr.bf16.mxu0 0
    %3050 = vmatpush1.bf16.msra.mxu0 0
    %3051 = vmatprep.subr.bf16.mxu0 0
    %3052 = vmatpush1.bf16.msra.mxu0 0
    %3053 = vmatprep.subr.bf16.mxu0 0
    %3054 = vmatpush1.bf16.msra.mxu0 0
    %3055 = vmatprep.subr.bf16.mxu0 0
    %3056 = vmatpush1.bf16.msra.mxu0 0
    %3057 = vmatprep.subr.bf16.mxu0 0
    %3058 = vmatpush1.bf16.msra.mxu0 0
    %3059 = vmatprep.subr.bf16.mxu0 0
    %3060 = vmatpush1.bf16.msra.mxu0 0
    %3061 = vmatprep.subr.bf16.mxu0 0
    %3062 = vmatpush1.bf16.msra.mxu0 0
    %3063 = vmatprep.subr.bf16.mxu0 0
    %3064 = vmatpush1.bf16.msra.mxu0 0
    %3065 = vmatprep.subr.bf16.mxu0 0
    %3066 = vmatpush1.bf16.msra.mxu0 0
    %3067 = vmatprep.subr.bf16.mxu0 0
    %3068 = vmatpush1.bf16.msra.mxu0 0
    %3069 = vmatprep.subr.bf16.mxu0 0
    %3070 = vmatpush1.bf16.msra.mxu0 0
    %3071 = vmatprep.subr.bf16.mxu0 0
    %3072 = vmatpush1.bf16.msra.mxu0 0
    %3073 = vmatprep.subr.bf16.mxu0 0
    %3074 = vmatpush1.bf16.msra.mxu0 0
    %3075 = vmatprep.mubr.bf16.mxu0 0
    %3076 = vmatmul.mubr.bf16.gmra.mrb[0].mxu0 %v2521
    %v3077 = vpop.f32.mrb[0].mxu0
    %v3078 = vadd.f32 0.0, %v3077
    %v3079 = vpop.f32.mrb[0].mxu0
    %v3080 = vpop.f32.mrb[0].mxu0
    %v3081 = vpop.f32.mrb[0].mxu0
    %3082 = vdwg.mxu0
    %3083 = vmatprep.subr.bf16.mxu0 0
    %3084 = vmatpush1.bf16.msra.mxu0 %v2435
    %3085 = vmatprep.subr.bf16.mxu0 0
    %3086 = vmatpush1.bf16.msra.mxu0 0
    %3087 = vmatprep.subr.bf16.mxu0 0
    %3088 = vmatpush1.bf16.msra.mxu0 0
    %3089 = vmatprep.subr.bf16.mxu0 0
    %3090 = vmatpush1.bf16.msra.mxu0 0
    %3091 = vmatprep.subr.bf16.mxu0 0
    %3092 = vmatpush1.bf16.msra.mxu0 0
    %3093 = vmatprep.subr.bf16.mxu0 0
    %3094 = vmatpush1.bf16.msra.mxu0 0
    %3095 = vmatprep.subr.bf16.mxu0 0
    %3096 = vmatpush1.bf16.msra.mxu0 0
    %3097 = vmatprep.subr.bf16.mxu0 0
    %3098 = vmatpush1.bf16.msra.mxu0 0
    %3099 = vmatprep.subr.bf16.mxu0 0
    %3100 = vmatpush1.bf16.msra.mxu0 0
    %3101 = vmatprep.subr.bf16.mxu0 0
    %3102 = vmatpush1.bf16.msra.mxu0 0
    %3103 = vmatprep.subr.bf16.mxu0 0
    %3104 = vmatpush1.bf16.msra.mxu0 0
    %3105 = vmatprep.subr.bf16.mxu0 0
    %3106 = vmatpush1.bf16.msra.mxu0 0
    %3107 = vmatprep.subr.bf16.mxu0 0
    %3108 = vmatpush1.bf16.msra.mxu0 0
    %3109 = vmatprep.subr.bf16.mxu0 0
    %3110 = vmatpush1.bf16.msra.mxu0 0
    %3111 = vmatprep.subr.bf16.mxu0 0
    %3112 = vmatpush1.bf16.msra.mxu0 0
    %3113 = vmatprep.subr.bf16.mxu0 0
    %3114 = vmatpush1.bf16.msra.mxu0 0
    %3115 = vmatprep.mubr.bf16.mxu0 0
    %3116 = vmatmul.mubr.bf16.gmra.mrb[0].mxu0 %v2521
    %v3117 = vpop.f32.mrb[0].mxu0
    %v3118 = vadd.f32 0.0, %v3117
    %v3119 = vpop.f32.mrb[0].mxu0
    %v3120 = vpop.f32.mrb[0].mxu0
    %v3121 = vpop.f32.mrb[0].mxu0
    %3122 = vdwg.mxu0
    %3123 = vmatprep.subr.bf16.mxu0 0
    %3124 = vmatpush1.bf16.msra.mxu0 %v2478
    %3125 = vmatprep.subr.bf16.mxu0 0
    %3126 = vmatpush1.bf16.msra.mxu0 0
    %3127 = vmatprep.subr.bf16.mxu0 0
    %3128 = vmatpush1.bf16.msra.mxu0 0
    %3129 = vmatprep.subr.bf16.mxu0 0
    %3130 = vmatpush1.bf16.msra.mxu0 0
    %3131 = vmatprep.subr.bf16.mxu0 0
    %3132 = vmatpush1.bf16.msra.mxu0 0
    %3133 = vmatprep.subr.bf16.mxu0 0
    %3134 = vmatpush1.bf16.msra.mxu0 0
    %3135 = vmatprep.subr.bf16.mxu0 0
    %3136 = vmatpush1.bf16.msra.mxu0 0
    %3137 = vmatprep.subr.bf16.mxu0 0
    %3138 = vmatpush1.bf16.msra.mxu0 0
    %3139 = vmatprep.subr.bf16.mxu0 0
    %3140 = vmatpush1.bf16.msra.mxu0 0
    %3141 = vmatprep.subr.bf16.mxu0 0
    %3142 = vmatpush1.bf16.msra.mxu0 0
    %3143 = vmatprep.subr.bf16.mxu0 0
    %3144 = vmatpush1.bf16.msra.mxu0 0
    %3145 = vmatprep.subr.bf16.mxu0 0
    %3146 = vmatpush1.bf16.msra.mxu0 0
    %3147 = vmatprep.subr.bf16.mxu0 0
    %3148 = vmatpush1.bf16.msra.mxu0 0
    %3149 = vmatprep.subr.bf16.mxu0 0
    %3150 = vmatpush1.bf16.msra.mxu0 0
    %3151 = vmatprep.subr.bf16.mxu0 0
    %3152 = vmatpush1.bf16.msra.mxu0 0
    %3153 = vmatprep.subr.bf16.mxu0 0
    %3154 = vmatpush1.bf16.msra.mxu0 0
    %3155 = vmatprep.mubr.bf16.mxu0 0
    %3156 = vmatmul.mubr.bf16.gmra.mrb[0].mxu0 %v2521
    %v3157 = vpop.f32.mrb[0].mxu0
    %v3158 = vadd.f32 0.0, %v3157
    %v3159 = vpop.f32.mrb[0].mxu0
    %v3160 = vpop.f32.mrb[0].mxu0
    %v3161 = vpop.f32.mrb[0].mxu0
    %3162 = vdwg.mxu0
    %3179 = vrot.lane.b32.xlu0 %v2558, 8
    %v3180 = vpop.permute.xlu0 %3179
    %3181 = vrot.lane.b32.xlu0 %v2598, 8
    %v3182 = vpop.permute.xlu0 %3181
    %3183 = vrot.lane.b32.xlu0 %v2638, 8
    %v3184 = vpop.permute.xlu0 %3183
    %3185 = vrot.lane.b32.xlu0 %v2678, 8
    %v3186 = vpop.permute.xlu0 %3185
    %3187 = vrot.lane.b32.xlu0 %v2718, 8
    %v3188 = vpop.permute.xlu0 %3187
    %3189 = vrot.lane.b32.xlu0 %v2758, 8
    %v3190 = vpop.permute.xlu0 %3189
    %3191 = vrot.lane.b32.xlu0 %v2798, 8
    %v3192 = vpop.permute.xlu0 %3191
    %3193 = vrot.lane.b32.xlu0 %v2838, 8
    %v3194 = vpop.permute.xlu0 %3193
    %3195 = vrot.lane.b32.xlu0 %v2878, 8
    %v3196 = vpop.permute.xlu0 %3195
    %3197 = vrot.lane.b32.xlu0 %v2918, 8
    %v3198 = vpop.permute.xlu0 %3197
    %3199 = vrot.lane.b32.xlu0 %v2958, 8
    %v3200 = vpop.permute.xlu0 %3199
    %3201 = vrot.lane.b32.xlu0 %v2998, 8
    %v3202 = vpop.permute.xlu0 %3201
    %3203 = vrot.lane.b32.xlu0 %v3038, 8
    %v3204 = vpop.permute.xlu0 %3203
    %3205 = vrot.lane.b32.xlu0 %v3078, 8
    %v3206 = vpop.permute.xlu0 %3205
    %3207 = vrot.lane.b32.xlu0 %v3118, 8
    %v3208 = vpop.permute.xlu0 %3207
    %3209 = vrot.lane.b32.xlu0 %v3158, 8
    %v3210 = vpop.permute.xlu0 %3209
    %v3227 = vsel %vm1827, %v1870, %v3180
    %v3228 = vsel %vm1827, %v1913, %v3182
    %v3229 = vsel %vm1827, %v1956, %v3184
    %v3230 = vsel %vm1827, %v1999, %v3186
    %v3231 = vsel %vm1827, %v2042, %v3188
    %v3232 = vsel %vm1827, %v2085, %v3190
    %v3233 = vsel %vm1827, %v2128, %v3192
    %v3234 = vsel %vm1827, %v2171, %v3194
    %v3235 = vsel %vm1827, %v2214, %v3196
    %v3236 = vsel %vm1827, %v2257, %v3198
    %v3237 = vsel %vm1827, %v2300, %v3200
    %v3238 = vsel %vm1827, %v2343, %v3202
    %v3239 = vsel %vm1827, %v2386, %v3204
    %v3240 = vsel %vm1827, %v2429, %v3206
    %v3241 = vsel %vm1827, %v2472, %v3208
    %v3242 = vsel %vm1827, %v2515, %v3210
    %v3243 = vpack.c.bf16 %v3227, %v3227
    %v3244 = vpack.c.bf16 %v3228, %v3228
    %v3245 = vpack.c.bf16 %v3229, %v3229
    %v3246 = vpack.c.bf16 %v3230, %v3230
    %v3247 = vpack.c.bf16 %v3231, %v3231
    %v3248 = vpack.c.bf16 %v3232, %v3232
    %v3249 = vpack.c.bf16 %v3233, %v3233
    %v3250 = vpack.c.bf16 %v3234, %v3234
    %v3251 = vpack.c.bf16 %v3235, %v3235
    %v3252 = vpack.c.bf16 %v3236, %v3236
    %v3253 = vpack.c.bf16 %v3237, %v3237
    %v3254 = vpack.c.bf16 %v3238, %v3238
    %v3255 = vpack.c.bf16 %v3239, %v3239
    %v3256 = vpack.c.bf16 %v3240, %v3240
    %v3257 = vpack.c.bf16 %v3241, %v3241
    %v3258 = vpack.c.bf16 %v3242, %v3242
    %v3259 = vld [vmem:[%s3] sm:$0xf]
    %v3260 = vld [vmem:[%s3 + $0x4] sm:$0xf]
    %v3261 = vld [vmem:[%s3 + $0x8] sm:$0xf]
    %v3262 = vld [vmem:[%s3 + $0xc] sm:$0xf]
    %v3263 = vld [vmem:[%s3 + $0x10] sm:$0xf]
    %v3264 = vld [vmem:[%s3 + $0x14] sm:$0xf]
    %v3265 = vld [vmem:[%s3 + $0x18] sm:$0xf]
    %v3266 = vld [vmem:[%s3 + $0x1c] sm:$0xf]
    %v3267 = vld [vmem:[%s3 + $0x20] sm:$0xf]
    %v3268 = vld [vmem:[%s3 + $0x24] sm:$0xf]
    %v3269 = vld [vmem:[%s3 + $0x28] sm:$0xf]
    %v3270 = vld [vmem:[%s3 + $0x2c] sm:$0xf]
    %v3271 = vld [vmem:[%s3 + $0x30] sm:$0xf]
    %v3272 = vld [vmem:[%s3 + $0x34] sm:$0xf]
    %v3273 = vld [vmem:[%s3 + $0x38] sm:$0xf]
    %v3274 = vld [vmem:[%s3 + $0x3c] sm:$0xf]
    %v3275 = vld [vmem:[%s4] sm:$0x1]
    %v3277 = vshrl.u32 0, 16
    %v3279 = vshll.u32 0, 16
    %v3281 = vrot.slane %v3279, 1
    %v3282 = vor.u32 %v3277, %v3281
    %v3284 = vshrl.u32 %v3244, 16
    %v3286 = vshll.u32 %v3244, 16
    %v3288 = vrot.slane %v3286, 1
    %v3289 = vor.u32 %v3284, %v3288
    %v3291 = vshrl.u32 %v3246, 16
    %v3293 = vshll.u32 %v3246, 16
    %v3295 = vrot.slane %v3293, 1
    %v3296 = vor.u32 %v3291, %v3295
    %v3298 = vshrl.u32 %v3248, 16
    %v3300 = vshll.u32 %v3248, 16
    %v3302 = vrot.slane %v3300, 1
    %v3303 = vor.u32 %v3298, %v3302
    %v3305 = vshrl.u32 %v3252, 16
    %v3307 = vshll.u32 %v3252, 16
    %v3309 = vrot.slane %v3307, 1
    %v3310 = vor.u32 %v3305, %v3309
    %v3312 = vshrl.u32 %v3254, 16
    %v3314 = vshll.u32 %v3254, 16
    %v3316 = vrot.slane %v3314, 1
    %v3317 = vor.u32 %v3312, %v3316
    %v3319 = vshrl.u32 %v3256, 16
    %v3321 = vshll.u32 %v3256, 16
    %v3323 = vrot.slane %v3321, 1
    %v3324 = vor.u32 %v3319, %v3323
    %3325 = vrot.lane.b32.xlu0 %v3282, 16
    %v3326 = vpop.permute.xlu0 %3325
    %3327 = vrot.lane.b32.xlu0 %v3289, 16
    %v3328 = vpop.permute.xlu0 %3327
    %3329 = vrot.lane.b32.xlu0 %v3296, 16
    %v3330 = vpop.permute.xlu0 %3329
    %3331 = vrot.lane.b32.xlu0 %v3303, 16
    %v3332 = vpop.permute.xlu0 %3331
    %3333 = vrot.lane.b32.xlu0 %v3310, 16
    %v3334 = vpop.permute.xlu0 %3333
    %3335 = vrot.lane.b32.xlu0 %v3317, 16
    %v3336 = vpop.permute.xlu0 %3335
    %3337 = vrot.lane.b32.xlu0 %v3324, 16
    %v3338 = vpop.permute.xlu0 %3337
    %3347 = vrot.lane.b32.xlu0 %v3243, 32
    %v3348 = vpop.permute.xlu0 %3347
    %3349 = vrot.lane.b32.xlu0 %v3245, 32
    %v3350 = vpop.permute.xlu0 %3349
    %3351 = vrot.lane.b32.xlu0 %v3247, 32
    %v3352 = vpop.permute.xlu0 %3351
    %3353 = vrot.lane.b32.xlu0 %v3249, 32
    %v3354 = vpop.permute.xlu0 %3353
    %3355 = vrot.lane.b32.xlu0 %v3251, 32
    %v3356 = vpop.permute.xlu0 %3355
    %3357 = vrot.lane.b32.xlu0 %v3253, 32
    %v3358 = vpop.permute.xlu0 %3357
    %3359 = vrot.lane.b32.xlu0 %v3255, 32
    %v3360 = vpop.permute.xlu0 %3359
    %3361 = vrot.lane.b32.xlu0 %v3257, 32
    %v3362 = vpop.permute.xlu0 %3361
    %v3364 = vshrl.u32 %v3243, 16
    %v3366 = vshll.u32 %v3243, 16
    %v3368 = vrot.slane %v3366, 1
    %v3369 = vor.u32 %v3364, %v3368
    %v3371 = vshrl.u32 %v3245, 16
    %v3373 = vshll.u32 %v3245, 16
    %v3375 = vrot.slane %v3373, 1
    %v3376 = vor.u32 %v3371, %v3375
    %v3378 = vshrl.u32 %v3247, 16
    %v3380 = vshll.u32 %v3247, 16
    %v3382 = vrot.slane %v3380, 1
    %v3383 = vor.u32 %v3378, %v3382
    %v3385 = vshrl.u32 %v3249, 16
    %v3387 = vshll.u32 %v3249, 16
    %v3389 = vrot.slane %v3387, 1
    %v3390 = vor.u32 %v3385, %v3389
    %v3392 = vshrl.u32 %v3251, 16
    %v3394 = vshll.u32 %v3251, 16
    %v3396 = vrot.slane %v3394, 1
    %v3397 = vor.u32 %v3392, %v3396
    %v3399 = vshrl.u32 %v3253, 16
    %v3401 = vshll.u32 %v3253, 16
    %v3403 = vrot.slane %v3401, 1
    %v3404 = vor.u32 %v3399, %v3403
    %v3406 = vshrl.u32 %v3255, 16
    %v3408 = vshll.u32 %v3255, 16
    %v3410 = vrot.slane %v3408, 1
    %v3411 = vor.u32 %v3406, %v3410
    %v3413 = vshrl.u32 %v3257, 16
    %v3415 = vshll.u32 %v3257, 16
    %v3417 = vrot.slane %v3415, 1
    %v3418 = vor.u32 %v3413, %v3417
    %3419 = vrot.lane.b32.xlu0 %v3369, 48
    %v3420 = vpop.permute.xlu0 %3419
    %3421 = vrot.lane.b32.xlu0 %v3376, 48
    %v3422 = vpop.permute.xlu0 %3421
    %3423 = vrot.lane.b32.xlu0 %v3383, 48
    %v3424 = vpop.permute.xlu0 %3423
    %3425 = vrot.lane.b32.xlu0 %v3390, 48
    %v3426 = vpop.permute.xlu0 %3425
    %3427 = vrot.lane.b32.xlu0 %v3397, 48
    %v3428 = vpop.permute.xlu0 %3427
    %3429 = vrot.lane.b32.xlu0 %v3404, 48
    %v3430 = vpop.permute.xlu0 %3429
    %3431 = vrot.lane.b32.xlu0 %v3411, 48
    %v3432 = vpop.permute.xlu0 %3431
    %3433 = vrot.lane.b32.xlu0 %v3418, 48
    %v3434 = vpop.permute.xlu0 %3433
    %3443 = vrot.lane.b32.xlu0 %v3244, 64
    %v3444 = vpop.permute.xlu0 %3443
    %3445 = vrot.lane.b32.xlu0 %v3246, 64
    %v3446 = vpop.permute.xlu0 %3445
    %3447 = vrot.lane.b32.xlu0 %v3248, 64
    %v3448 = vpop.permute.xlu0 %3447
    %3449 = vrot.lane.b32.xlu0 %v3250, 64
    %v3450 = vpop.permute.xlu0 %3449
    %3451 = vrot.lane.b32.xlu0 %v3252, 64
    %v3452 = vpop.permute.xlu0 %3451
    %3453 = vrot.lane.b32.xlu0 %v3254, 64
    %v3454 = vpop.permute.xlu0 %3453
    %3455 = vrot.lane.b32.xlu0 %v3256, 64
    %v3456 = vpop.permute.xlu0 %3455
    %3457 = vrot.lane.b32.xlu0 %v3258, 64
    %v3458 = vpop.permute.xlu0 %3457
    %v3460 = vshrl.u32 %v3250, 16
    %v3462 = vshll.u32 %v3250, 16
    %v3464 = vrot.slane %v3462, 1
    %v3465 = vor.u32 %v3460, %v3464
    %v3467 = vshrl.u32 %v3258, 16
    %v3469 = vshll.u32 %v3258, 16
    %v3471 = vrot.slane %v3469, 1
    %v3472 = vor.u32 %v3467, %v3471
    %3473 = vrot.lane.b32.xlu0 %v3289, 80
    %v3474 = vpop.permute.xlu0 %3473
    %3475 = vrot.lane.b32.xlu0 %v3296, 80
    %v3476 = vpop.permute.xlu0 %3475
    %3477 = vrot.lane.b32.xlu0 %v3303, 80
    %v3478 = vpop.permute.xlu0 %3477
    %3479 = vrot.lane.b32.xlu0 %v3465, 80
    %v3480 = vpop.permute.xlu0 %3479
    %3481 = vrot.lane.b32.xlu0 %v3310, 80
    %v3482 = vpop.permute.xlu0 %3481
    %3483 = vrot.lane.b32.xlu0 %v3317, 80
    %v3484 = vpop.permute.xlu0 %3483
    %3485 = vrot.lane.b32.xlu0 %v3324, 80
    %v3486 = vpop.permute.xlu0 %3485
    %3487 = vrot.lane.b32.xlu0 %v3472, 80
    %v3488 = vpop.permute.xlu0 %3487
    %3490 = vrot.lane.b32.xlu0 %v3245, 96
    %v3491 = vpop.permute.xlu0 %3490
    %3492 = vrot.lane.b32.xlu0 %v3247, 96
    %v3493 = vpop.permute.xlu0 %3492
    %3494 = vrot.lane.b32.xlu0 %v3249, 96
    %v3495 = vpop.permute.xlu0 %3494
    %3496 = vrot.lane.b32.xlu0 0, 96
    %v3497 = vpop.permute.xlu0 %3496
    %3498 = vrot.lane.b32.xlu0 %v3253, 96
    %v3499 = vpop.permute.xlu0 %3498
    %3500 = vrot.lane.b32.xlu0 %v3255, 96
    %v3501 = vpop.permute.xlu0 %3500
    %3502 = vrot.lane.b32.xlu0 %v3257, 96
    %v3503 = vpop.permute.xlu0 %3502
    %3504 = vrot.lane.b32.xlu0 %v3376, 112
    %v3505 = vpop.permute.xlu0 %3504
    %3506 = vrot.lane.b32.xlu0 %v3383, 112
    %v3507 = vpop.permute.xlu0 %3506
    %3508 = vrot.lane.b32.xlu0 %v3390, 112
    %v3509 = vpop.permute.xlu0 %3508
    %3510 = vrot.lane.b32.xlu0 %v3282, 112
    %v3511 = vpop.permute.xlu0 %3510
    %3512 = vrot.lane.b32.xlu0 %v3404, 112
    %v3513 = vpop.permute.xlu0 %3512
    %3514 = vrot.lane.b32.xlu0 %v3411, 112
    %v3515 = vpop.permute.xlu0 %3514
    %3516 = vrot.lane.b32.xlu0 %v3418, 112
    %v3517 = vpop.permute.xlu0 %3516
    %vm3518 = vcmask 130048
    %v3520 = vsel %vm3518, 0, %v3326
    %v3522 = vsel %vm3518, %v3244, %v3328
    %v3524 = vsel %vm3518, %v3246, %v3330
    %v3526 = vsel %vm3518, %v3248, %v3332
    %v3528 = vsel %vm3518, %v3252, %v3334
    %v3530 = vsel %vm3518, %v3254, %v3336
    %v3532 = vsel %vm3518, %v3256, %v3338
    %vm3533 = vcmask 261120
    %v3535 = vsel %vm3533, %v3520, %v3348
    %v3537 = vsel %vm3533, %v3522, %v3350
    %v3539 = vsel %vm3533, %v3524, %v3352
    %v3541 = vsel %vm3533, %v3526, %v3354
    %v3543 = vsel %vm3533, %v3520, %v3356
    %v3545 = vsel %vm3533, %v3528, %v3358
    %v3547 = vsel %vm3533, %v3530, %v3360
    %v3549 = vsel %vm3533, %v3532, %v3362
    %v3551 = vsel %vm1088, %v3535, %v3420
    %v3553 = vsel %vm1088, %v3537, %v3422
    %v3555 = vsel %vm1088, %v3539, %v3424
    %v3557 = vsel %vm1088, %v3541, %v3426
    %v3559 = vsel %vm1088, %v3543, %v3428
    %v3561 = vsel %vm1088, %v3545, %v3430
    %v3563 = vsel %vm1088, %v3547, %v3432
    %v3565 = vsel %vm1088, %v3549, %v3434
    %vm3566 = vcmask 523264
    %v3568 = vsel %vm3566, %v3551, %v3444
    %v3570 = vsel %vm3566, %v3553, %v3446
    %v3572 = vsel %vm3566, %v3555, %v3448
    %v3574 = vsel %vm3566, %v3557, %v3450
    %v3576 = vsel %vm3566, %v3559, %v3452
    %v3578 = vsel %vm3566, %v3561, %v3454
    %v3580 = vsel %vm3566, %v3563, %v3456
    %v3582 = vsel %vm3566, %v3565, %v3458
    %vm3583 = vcmask 654336
    %v3585 = vsel %vm3583, %v3568, %v3474
    %v3587 = vsel %vm3583, %v3570, %v3476
    %v3589 = vsel %vm3583, %v3572, %v3478
    %v3591 = vsel %vm3583, %v3574, %v3480
    %v3593 = vsel %vm3583, %v3576, %v3482
    %v3595 = vsel %vm3583, %v3578, %v3484
    %v3597 = vsel %vm3583, %v3580, %v3486
    %v3599 = vsel %vm3583, %v3582, %v3488
    %vm3600 = vcmask 785408
    %v3602 = vsel %vm3600, %v3585, %v3491
    %v3604 = vsel %vm3600, %v3587, %v3493
    %v3606 = vsel %vm3600, %v3589, %v3495
    %v3608 = vsel %vm3600, %v3591, %v3497
    %v3610 = vsel %vm3600, %v3593, %v3499
    %v3612 = vsel %vm3600, %v3595, %v3501
    %v3614 = vsel %vm3600, %v3597, %v3503
    %v3615 = vsel %vm3600, %v3599, %v3497
    %vm3616 = vcmask 916480
    %v3618 = vsel %vm3616, %v3602, %v3505
    %v3621 = vsel %vm3616, %v3604, %v3507
    %v3624 = vsel %vm3616, %v3606, %v3509
    %v3627 = vsel %vm3616, %v3608, %v3511
    %v3630 = vsel %vm3616, %v3610, %v3513
    %v3633 = vsel %vm3616, %v3612, %v3515
    %v3636 = vsel %vm3616, %v3614, %v3517
    %v3638 = vsel %vm3616, %v3615, %v3511
    %v3641 = vlaneseq
    %v3642 = vshrl.u32 %v3641, 7
    %v3643 = vsub.s32 0, %v3642
    %v3644 = vrot.slane %v3275, %v3643
    %v3662 = vunpack.c.l.b16 %v3259
    %v3663 = vunpack.c.l.b16 %v3260
    %v3664 = vunpack.c.l.b16 %v3261
    %v3665 = vunpack.c.l.b16 %v3262
    %v3666 = vunpack.c.l.b16 %v3263
    %v3667 = vunpack.c.l.b16 %v3264
    %v3668 = vunpack.c.l.b16 %v3265
    %v3669 = vunpack.c.l.b16 %v3266
    %v3670 = vunpack.c.l.b16 %v3267
    %v3671 = vunpack.c.l.b16 %v3268
    %v3672 = vunpack.c.l.b16 %v3269
    %v3673 = vunpack.c.l.b16 %v3270
    %v3674 = vunpack.c.l.b16 %v3271
    %v3675 = vunpack.c.l.b16 %v3272
    %v3676 = vunpack.c.l.b16 %v3273
    %v3677 = vunpack.c.l.b16 %v3274
    %v3678 = vpack.c.b16 %v3663, %v3662
    %v3679 = vpack.c.b16 %v3665, %v3664
    %v3680 = vpack.c.b16 %v3667, %v3666
    %v3681 = vpack.c.b16 %v3669, %v3668
    %v3682 = vpack.c.b16 %v3671, %v3670
    %v3683 = vpack.c.b16 %v3673, %v3672
    %v3684 = vpack.c.b16 %v3675, %v3674
    %v3685 = vpack.c.b16 %v3677, %v3676
    %3694 = vmatprep.subr.bf16.mxu0 0
    %3695 = vmatpush1.bf16.msra.mxu0 %v3678
    %3696 = vmatprep.subr.bf16.mxu0 0
    %3697 = vmatpush1.bf16.msra.mxu0 %v3679
    %3698 = vmatprep.subr.bf16.mxu0 0
    %3699 = vmatpush1.bf16.msra.mxu0 %v3680
    %3700 = vmatprep.subr.bf16.mxu0 0
    %3701 = vmatpush1.bf16.msra.mxu0 %v3681
    %3702 = vmatprep.subr.bf16.mxu0 0
    %3703 = vmatpush1.bf16.msra.mxu0 %v3682
    %3704 = vmatprep.subr.bf16.mxu0 0
    %3705 = vmatpush1.bf16.msra.mxu0 %v3683
    %3706 = vmatprep.subr.bf16.mxu0 0
    %3707 = vmatpush1.bf16.msra.mxu0 %v3684
    %3708 = vmatprep.subr.bf16.mxu0 0
    %3709 = vmatpush1.bf16.msra.mxu0 %v3685
    %3710 = vmatprep.subr.bf16.mxu0 0
    %3711 = vmatpush1.bf16.msra.mxu0 0
    %3712 = vmatprep.subr.bf16.mxu0 0
    %3713 = vmatpush1.bf16.msra.mxu0 0
    %3714 = vmatprep.subr.bf16.mxu0 0
    %3715 = vmatpush1.bf16.msra.mxu0 0
    %3716 = vmatprep.subr.bf16.mxu0 0
    %3717 = vmatpush1.bf16.msra.mxu0 0
    %3718 = vmatprep.subr.bf16.mxu0 0
    %3719 = vmatpush1.bf16.msra.mxu0 0
    %3720 = vmatprep.subr.bf16.mxu0 0
    %3721 = vmatpush1.bf16.msra.mxu0 0
    %3722 = vmatprep.subr.bf16.mxu0 0
    %3723 = vmatpush1.bf16.msra.mxu0 0
    %3724 = vmatprep.subr.bf16.mxu0 0
    %3725 = vmatpush1.bf16.msra.mxu0 0
    %3726 = vmatprep.mubr.bf16.mxu0 0
    %3727 = vmatmul.mubr.bf16.gmra.mrb[0].mxu0 %v3618
    %v3728 = vpop.f32.mrb[0].mxu0
    %v3729 = vadd.f32 %v3644, %v3728
    %v3730 = vpop.f32.mrb[0].mxu0
    %v3731 = vpop.f32.mrb[0].mxu0
    %v3732 = vpop.f32.mrb[0].mxu0
    %3733 = vdwg.mxu0
    %3734 = vmatprep.subr.bf16.mxu0 0
    %3735 = vmatpush1.bf16.msra.mxu0 %v3678
    %3736 = vmatprep.subr.bf16.mxu0 0
    %3737 = vmatpush1.bf16.msra.mxu0 %v3679
    %3738 = vmatprep.subr.bf16.mxu0 0
    %3739 = vmatpush1.bf16.msra.mxu0 %v3680
    %3740 = vmatprep.subr.bf16.mxu0 0
    %3741 = vmatpush1.bf16.msra.mxu0 %v3681
    %3742 = vmatprep.subr.bf16.mxu0 0
    %3743 = vmatpush1.bf16.msra.mxu0 %v3682
    %3744 = vmatprep.subr.bf16.mxu0 0
    %3745 = vmatpush1.bf16.msra.mxu0 %v3683
    %3746 = vmatprep.subr.bf16.mxu0 0
    %3747 = vmatpush1.bf16.msra.mxu0 %v3684
    %3748 = vmatprep.subr.bf16.mxu0 0
    %3749 = vmatpush1.bf16.msra.mxu0 %v3685
    %3750 = vmatprep.subr.bf16.mxu0 0
    %3751 = vmatpush1.bf16.msra.mxu0 0
    %3752 = vmatprep.subr.bf16.mxu0 0
    %3753 = vmatpush1.bf16.msra.mxu0 0
    %3754 = vmatprep.subr.bf16.mxu0 0
    %3755 = vmatpush1.bf16.msra.mxu0 0
    %3756 = vmatprep.subr.bf16.mxu0 0
    %3757 = vmatpush1.bf16.msra.mxu0 0
    %3758 = vmatprep.subr.bf16.mxu0 0
    %3759 = vmatpush1.bf16.msra.mxu0 0
    %3760 = vmatprep.subr.bf16.mxu0 0
    %3761 = vmatpush1.bf16.msra.mxu0 0
    %3762 = vmatprep.subr.bf16.mxu0 0
    %3763 = vmatpush1.bf16.msra.mxu0 0
    %3764 = vmatprep.subr.bf16.mxu0 0
    %3765 = vmatpush1.bf16.msra.mxu0 0
    %3766 = vmatprep.mubr.bf16.mxu0 0
    %3767 = vmatmul.mubr.bf16.gmra.mrb[0].mxu0 %v3621
    %v3768 = vpop.f32.mrb[0].mxu0
    %v3769 = vadd.f32 %v3644, %v3768
    %v3770 = vpop.f32.mrb[0].mxu0
    %v3771 = vpop.f32.mrb[0].mxu0
    %v3772 = vpop.f32.mrb[0].mxu0
    %3773 = vdwg.mxu0
    %3774 = vmatprep.subr.bf16.mxu0 0
    %3775 = vmatpush1.bf16.msra.mxu0 %v3678
    %3776 = vmatprep.subr.bf16.mxu0 0
    %3777 = vmatpush1.bf16.msra.mxu0 %v3679
    %3778 = vmatprep.subr.bf16.mxu0 0
    %3779 = vmatpush1.bf16.msra.mxu0 %v3680
    %3780 = vmatprep.subr.bf16.mxu0 0
    %3781 = vmatpush1.bf16.msra.mxu0 %v3681
    %3782 = vmatprep.subr.bf16.mxu0 0
    %3783 = vmatpush1.bf16.msra.mxu0 %v3682
    %3784 = vmatprep.subr.bf16.mxu0 0
    %3785 = vmatpush1.bf16.msra.mxu0 %v3683
    %3786 = vmatprep.subr.bf16.mxu0 0
    %3787 = vmatpush1.bf16.msra.mxu0 %v3684
    %3788 = vmatprep.subr.bf16.mxu0 0
    %3789 = vmatpush1.bf16.msra.mxu0 %v3685
    %3790 = vmatprep.subr.bf16.mxu0 0
    %3791 = vmatpush1.bf16.msra.mxu0 0
    %3792 = vmatprep.subr.bf16.mxu0 0
    %3793 = vmatpush1.bf16.msra.mxu0 0
    %3794 = vmatprep.subr.bf16.mxu0 0
    %3795 = vmatpush1.bf16.msra.mxu0 0
    %3796 = vmatprep.subr.bf16.mxu0 0
    %3797 = vmatpush1.bf16.msra.mxu0 0
    %3798 = vmatprep.subr.bf16.mxu0 0
    %3799 = vmatpush1.bf16.msra.mxu0 0
    %3800 = vmatprep.subr.bf16.mxu0 0
    %3801 = vmatpush1.bf16.msra.mxu0 0
    %3802 = vmatprep.subr.bf16.mxu0 0
    %3803 = vmatpush1.bf16.msra.mxu0 0
    %3804 = vmatprep.subr.bf16.mxu0 0
    %3805 = vmatpush1.bf16.msra.mxu0 0
    %3806 = vmatprep.mubr.bf16.mxu0 0
    %3807 = vmatmul.mubr.bf16.gmra.mrb[0].mxu0 %v3624
    %v3808 = vpop.f32.mrb[0].mxu0
    %v3809 = vadd.f32 %v3644, %v3808
    %v3810 = vpop.f32.mrb[0].mxu0
    %v3811 = vpop.f32.mrb[0].mxu0
    %v3812 = vpop.f32.mrb[0].mxu0
    %3813 = vdwg.mxu0
    %3814 = vmatprep.subr.bf16.mxu0 0
    %3815 = vmatpush1.bf16.msra.mxu0 %v3678
    %3816 = vmatprep.subr.bf16.mxu0 0
    %3817 = vmatpush1.bf16.msra.mxu0 %v3679
    %3818 = vmatprep.subr.bf16.mxu0 0
    %3819 = vmatpush1.bf16.msra.mxu0 %v3680
    %3820 = vmatprep.subr.bf16.mxu0 0
    %3821 = vmatpush1.bf16.msra.mxu0 %v3681
    %3822 = vmatprep.subr.bf16.mxu0 0
    %3823 = vmatpush1.bf16.msra.mxu0 %v3682
    %3824 = vmatprep.subr.bf16.mxu0 0
    %3825 = vmatpush1.bf16.msra.mxu0 %v3683
    %3826 = vmatprep.subr.bf16.mxu0 0
    %3827 = vmatpush1.bf16.msra.mxu0 %v3684
    %3828 = vmatprep.subr.bf16.mxu0 0
    %3829 = vmatpush1.bf16.msra.mxu0 %v3685
    %3830 = vmatprep.subr.bf16.mxu0 0
    %3831 = vmatpush1.bf16.msra.mxu0 0
    %3832 = vmatprep.subr.bf16.mxu0 0
    %3833 = vmatpush1.bf16.msra.mxu0 0
    %3834 = vmatprep.subr.bf16.mxu0 0
    %3835 = vmatpush1.bf16.msra.mxu0 0
    %3836 = vmatprep.subr.bf16.mxu0 0
    %3837 = vmatpush1.bf16.msra.mxu0 0
    %3838 = vmatprep.subr.bf16.mxu0 0
    %3839 = vmatpush1.bf16.msra.mxu0 0
    %3840 = vmatprep.subr.bf16.mxu0 0
    %3841 = vmatpush1.bf16.msra.mxu0 0
    %3842 = vmatprep.subr.bf16.mxu0 0
    %3843 = vmatpush1.bf16.msra.mxu0 0
    %3844 = vmatprep.subr.bf16.mxu0 0
    %3845 = vmatpush1.bf16.msra.mxu0 0
    %3846 = vmatprep.mubr.bf16.mxu0 0
    %3847 = vmatmul.mubr.bf16.gmra.mrb[0].mxu0 %v3627
    %v3848 = vpop.f32.mrb[0].mxu0
    %v3849 = vadd.f32 %v3644, %v3848
    %v3850 = vpop.f32.mrb[0].mxu0
    %v3851 = vpop.f32.mrb[0].mxu0
    %v3852 = vpop.f32.mrb[0].mxu0
    %3853 = vdwg.mxu0
    %3854 = vmatprep.subr.bf16.mxu0 0
    %3855 = vmatpush1.bf16.msra.mxu0 %v3678
    %3856 = vmatprep.subr.bf16.mxu0 0
    %3857 = vmatpush1.bf16.msra.mxu0 %v3679
    %3858 = vmatprep.subr.bf16.mxu0 0
    %3859 = vmatpush1.bf16.msra.mxu0 %v3680
    %3860 = vmatprep.subr.bf16.mxu0 0
    %3861 = vmatpush1.bf16.msra.mxu0 %v3681
    %3862 = vmatprep.subr.bf16.mxu0 0
    %3863 = vmatpush1.bf16.msra.mxu0 %v3682
    %3864 = vmatprep.subr.bf16.mxu0 0
    %3865 = vmatpush1.bf16.msra.mxu0 %v3683
    %3866 = vmatprep.subr.bf16.mxu0 0
    %3867 = vmatpush1.bf16.msra.mxu0 %v3684
    %3868 = vmatprep.subr.bf16.mxu0 0
    %3869 = vmatpush1.bf16.msra.mxu0 %v3685
    %3870 = vmatprep.subr.bf16.mxu0 0
    %3871 = vmatpush1.bf16.msra.mxu0 0
    %3872 = vmatprep.subr.bf16.mxu0 0
    %3873 = vmatpush1.bf16.msra.mxu0 0
    %3874 = vmatprep.subr.bf16.mxu0 0
    %3875 = vmatpush1.bf16.msra.mxu0 0
    %3876 = vmatprep.subr.bf16.mxu0 0
    %3877 = vmatpush1.bf16.msra.mxu0 0
    %3878 = vmatprep.subr.bf16.mxu0 0
    %3879 = vmatpush1.bf16.msra.mxu0 0
    %3880 = vmatprep.subr.bf16.mxu0 0
    %3881 = vmatpush1.bf16.msra.mxu0 0
    %3882 = vmatprep.subr.bf16.mxu0 0
    %3883 = vmatpush1.bf16.msra.mxu0 0
    %3884 = vmatprep.subr.bf16.mxu0 0
    %3885 = vmatpush1.bf16.msra.mxu0 0
    %3886 = vmatprep.mubr.bf16.mxu0 0
    %3887 = vmatmul.mubr.bf16.gmra.mrb[0].mxu0 %v3630
    %v3888 = vpop.f32.mrb[0].mxu0
    %v3889 = vadd.f32 %v3644, %v3888
    %v3890 = vpop.f32.mrb[0].mxu0
    %v3891 = vpop.f32.mrb[0].mxu0
    %v3892 = vpop.f32.mrb[0].mxu0
    %3893 = vdwg.mxu0
    %3894 = vmatprep.subr.bf16.mxu0 0
    %3895 = vmatpush1.bf16.msra.mxu0 %v3678
    %3896 = vmatprep.subr.bf16.mxu0 0
    %3897 = vmatpush1.bf16.msra.mxu0 %v3679
    %3898 = vmatprep.subr.bf16.mxu0 0
    %3899 = vmatpush1.bf16.msra.mxu0 %v3680
    %3900 = vmatprep.subr.bf16.mxu0 0
    %3901 = vmatpush1.bf16.msra.mxu0 %v3681
    %3902 = vmatprep.subr.bf16.mxu0 0
    %3903 = vmatpush1.bf16.msra.mxu0 %v3682
    %3904 = vmatprep.subr.bf16.mxu0 0
    %3905 = vmatpush1.bf16.msra.mxu0 %v3683
    %3906 = vmatprep.subr.bf16.mxu0 0
    %3907 = vmatpush1.bf16.msra.mxu0 %v3684
    %3908 = vmatprep.subr.bf16.mxu0 0
    %3909 = vmatpush1.bf16.msra.mxu0 %v3685
    %3910 = vmatprep.subr.bf16.mxu0 0
    %3911 = vmatpush1.bf16.msra.mxu0 0
    %3912 = vmatprep.subr.bf16.mxu0 0
    %3913 = vmatpush1.bf16.msra.mxu0 0
    %3914 = vmatprep.subr.bf16.mxu0 0
    %3915 = vmatpush1.bf16.msra.mxu0 0
    %3916 = vmatprep.subr.bf16.mxu0 0
    %3917 = vmatpush1.bf16.msra.mxu0 0
    %3918 = vmatprep.subr.bf16.mxu0 0
    %3919 = vmatpush1.bf16.msra.mxu0 0
    %3920 = vmatprep.subr.bf16.mxu0 0
    %3921 = vmatpush1.bf16.msra.mxu0 0
    %3922 = vmatprep.subr.bf16.mxu0 0
    %3923 = vmatpush1.bf16.msra.mxu0 0
    %3924 = vmatprep.subr.bf16.mxu0 0
    %3925 = vmatpush1.bf16.msra.mxu0 0
    %3926 = vmatprep.mubr.bf16.mxu0 0
    %3927 = vmatmul.mubr.bf16.gmra.mrb[0].mxu0 %v3633
    %v3928 = vpop.f32.mrb[0].mxu0
    %v3929 = vadd.f32 %v3644, %v3928
    %v3930 = vpop.f32.mrb[0].mxu0
    %v3931 = vpop.f32.mrb[0].mxu0
    %v3932 = vpop.f32.mrb[0].mxu0
    %3933 = vdwg.mxu0
    %3934 = vmatprep.subr.bf16.mxu0 0
    %3935 = vmatpush1.bf16.msra.mxu0 %v3678
    %3936 = vmatprep.subr.bf16.mxu0 0
    %3937 = vmatpush1.bf16.msra.mxu0 %v3679
    %3938 = vmatprep.subr.bf16.mxu0 0
    %3939 = vmatpush1.bf16.msra.mxu0 %v3680
    %3940 = vmatprep.subr.bf16.mxu0 0
    %3941 = vmatpush1.bf16.msra.mxu0 %v3681
    %3942 = vmatprep.subr.bf16.mxu0 0
    %3943 = vmatpush1.bf16.msra.mxu0 %v3682
    %3944 = vmatprep.subr.bf16.mxu0 0
    %3945 = vmatpush1.bf16.msra.mxu0 %v3683
    %3946 = vmatprep.subr.bf16.mxu0 0
    %3947 = vmatpush1.bf16.msra.mxu0 %v3684
    %3948 = vmatprep.subr.bf16.mxu0 0
    %3949 = vmatpush1.bf16.msra.mxu0 %v3685
    %3950 = vmatprep.subr.bf16.mxu0 0
    %3951 = vmatpush1.bf16.msra.mxu0 0
    %3952 = vmatprep.subr.bf16.mxu0 0
    %3953 = vmatpush1.bf16.msra.mxu0 0
    %3954 = vmatprep.subr.bf16.mxu0 0
    %3955 = vmatpush1.bf16.msra.mxu0 0
    %3956 = vmatprep.subr.bf16.mxu0 0
    %3957 = vmatpush1.bf16.msra.mxu0 0
    %3958 = vmatprep.subr.bf16.mxu0 0
    %3959 = vmatpush1.bf16.msra.mxu0 0
    %3960 = vmatprep.subr.bf16.mxu0 0
    %3961 = vmatpush1.bf16.msra.mxu0 0
    %3962 = vmatprep.subr.bf16.mxu0 0
    %3963 = vmatpush1.bf16.msra.mxu0 0
    %3964 = vmatprep.subr.bf16.mxu0 0
    %3965 = vmatpush1.bf16.msra.mxu0 0
    %3966 = vmatprep.mubr.bf16.mxu0 0
    %3967 = vmatmul.mubr.bf16.gmra.mrb[0].mxu0 %v3636
    %v3968 = vpop.f32.mrb[0].mxu0
    %v3969 = vadd.f32 %v3644, %v3968
    %v3970 = vpop.f32.mrb[0].mxu0
    %v3971 = vpop.f32.mrb[0].mxu0
    %v3972 = vpop.f32.mrb[0].mxu0
    %3973 = vdwg.mxu0
    %3974 = vmatprep.subr.bf16.mxu0 0
    %3975 = vmatpush1.bf16.msra.mxu0 %v3678
    %3976 = vmatprep.subr.bf16.mxu0 0
    %3977 = vmatpush1.bf16.msra.mxu0 %v3679
    %3978 = vmatprep.subr.bf16.mxu0 0
    %3979 = vmatpush1.bf16.msra.mxu0 %v3680
    %3980 = vmatprep.subr.bf16.mxu0 0
    %3981 = vmatpush1.bf16.msra.mxu0 %v3681
    %3982 = vmatprep.subr.bf16.mxu0 0
    %3983 = vmatpush1.bf16.msra.mxu0 %v3682
    %3984 = vmatprep.subr.bf16.mxu0 0
    %3985 = vmatpush1.bf16.msra.mxu0 %v3683
    %3986 = vmatprep.subr.bf16.mxu0 0
    %3987 = vmatpush1.bf16.msra.mxu0 %v3684
    %3988 = vmatprep.subr.bf16.mxu0 0
    %3989 = vmatpush1.bf16.msra.mxu0 %v3685
    %3990 = vmatprep.subr.bf16.mxu0 0
    %3991 = vmatpush1.bf16.msra.mxu0 0
    %3992 = vmatprep.subr.bf16.mxu0 0
    %3993 = vmatpush1.bf16.msra.mxu0 0
    %3994 = vmatprep.subr.bf16.mxu0 0
    %3995 = vmatpush1.bf16.msra.mxu0 0
    %3996 = vmatprep.subr.bf16.mxu0 0
    %3997 = vmatpush1.bf16.msra.mxu0 0
    %3998 = vmatprep.subr.bf16.mxu0 0
    %3999 = vmatpush1.bf16.msra.mxu0 0
    %4000 = vmatprep.subr.bf16.mxu0 0
    %4001 = vmatpush1.bf16.msra.mxu0 0
    %4002 = vmatprep.subr.bf16.mxu0 0
    %4003 = vmatpush1.bf16.msra.mxu0 0
    %4004 = vmatprep.subr.bf16.mxu0 0
    %4005 = vmatpush1.bf16.msra.mxu0 0
    %4006 = vmatprep.mubr.bf16.mxu0 0
    %4007 = vmatmul.mubr.bf16.gmra.mrb[0].mxu0 %v3638
    %v4008 = vpop.f32.mrb[0].mxu0
    %v4009 = vadd.f32 %v3644, %v4008
    %v4010 = vpop.f32.mrb[0].mxu0
    %v4011 = vpop.f32.mrb[0].mxu0
    %v4012 = vpop.f32.mrb[0].mxu0
    %4013 = vdwg.mxu0
    %vm4014 = vcmp.ge.f32.partialorder %v3729, 0.0
    %vm4015 = vcmp.ge.f32.partialorder %v3769, 0.0
    %vm4016 = vcmp.ge.f32.partialorder %v3809, 0.0
    %vm4017 = vcmp.ge.f32.partialorder %v3849, 0.0
    %vm4018 = vcmp.ge.f32.partialorder %v3889, 0.0
    %vm4019 = vcmp.ge.f32.partialorder %v3929, 0.0
    %vm4020 = vcmp.ge.f32.partialorder %v3969, 0.0
    %vm4021 = vcmp.ge.f32.partialorder %v4009, 0.0
    %v4022 = vmul.f32 %v3729, 0.01
    %v4023 = vmul.f32 %v3769, 0.01
    %v4024 = vmul.f32 %v3809, 0.01
    %v4025 = vmul.f32 %v3849, 0.01
    %v4026 = vmul.f32 %v3889, 0.01
    %v4027 = vmul.f32 %v3929, 0.01
    %v4028 = vmul.f32 %v3969, 0.01
    %v4029 = vmul.f32 %v4009, 0.01
    %v4030 = vsel %vm4014, %v3729, %v4022
    %v4031 = vsel %vm4015, %v3769, %v4023
    %v4032 = vsel %vm4016, %v3809, %v4024
    %v4033 = vsel %vm4017, %v3849, %v4025
    %v4034 = vsel %vm4018, %v3889, %v4026
    %v4035 = vsel %vm4019, %v3929, %v4027
    %v4036 = vsel %vm4020, %v3969, %v4028
    %v4037 = vsel %vm4021, %v4009, %v4029
    %v4038 = vpack.c.bf16 %v4030, %v4030
    %v4039 = vpack.c.bf16 %v4031, %v4031
    %v4040 = vpack.c.bf16 %v4032, %v4032
    %v4041 = vpack.c.bf16 %v4033, %v4033
    %v4042 = vpack.c.bf16 %v4034, %v4034
    %v4043 = vpack.c.bf16 %v4035, %v4035
    %v4044 = vpack.c.bf16 %v4036, %v4036
    %v4045 = vpack.c.bf16 %v4037, %v4037
    %v4046 = vld [vmem:[%s9] sm:$0x3]
    %v4047 = vld [vmem:[%s10] sm:$0x3]
    %vm4048 = vcmask 31744
    %v4050 = vsel %vm4048, %v4046, 0
    %vm4052 = vcmask 1041408
    %v4054 = vsel %vm4052, %v4038, 0
    %4056 = vmatprep.subr.bf16.mxu0 0
    %4057 = vmatpush1.bf16.msra.mxu0 %v4054
    %4058 = vmatprep.subr.bf16.mxu0 0
    %4059 = vmatpush1.bf16.msra.mxu0 0
    %4060 = vmatprep.subr.bf16.mxu0 0
    %4061 = vmatpush1.bf16.msra.mxu0 0
    %4062 = vmatprep.subr.bf16.mxu0 0
    %4063 = vmatpush1.bf16.msra.mxu0 0
    %4064 = vmatprep.subr.bf16.mxu0 0
    %4065 = vmatpush1.bf16.msra.mxu0 0
    %4066 = vmatprep.subr.bf16.mxu0 0
    %4067 = vmatpush1.bf16.msra.mxu0 0
    %4068 = vmatprep.subr.bf16.mxu0 0
    %4069 = vmatpush1.bf16.msra.mxu0 0
    %4070 = vmatprep.subr.bf16.mxu0 0
    %4071 = vmatpush1.bf16.msra.mxu0 0
    %4072 = vmatprep.subr.bf16.mxu0 0
    %4073 = vmatpush1.bf16.msra.mxu0 0
    %4074 = vmatprep.subr.bf16.mxu0 0
    %4075 = vmatpush1.bf16.msra.mxu0 0
    %4076 = vmatprep.subr.bf16.mxu0 0
    %4077 = vmatpush1.bf16.msra.mxu0 0
    %4078 = vmatprep.subr.bf16.mxu0 0
    %4079 = vmatpush1.bf16.msra.mxu0 0
    %4080 = vmatprep.subr.bf16.mxu0 0
    %4081 = vmatpush1.bf16.msra.mxu0 0
    %4082 = vmatprep.subr.bf16.mxu0 0
    %4083 = vmatpush1.bf16.msra.mxu0 0
    %4084 = vmatprep.subr.bf16.mxu0 0
    %4085 = vmatpush1.bf16.msra.mxu0 0
    %4086 = vmatprep.subr.bf16.mxu0 0
    %4087 = vmatpush1.bf16.msra.mxu0 0
    %4088 = vmatprep.mubr.bf16.mxu0 0
    %4089 = vmatmul.mubr.bf16.gmra.mrb[0].mxu0 %v4050
    %v4090 = vpop.f32.mrb[0].mxu0
    %v4091 = vadd.f32 0.0, %v4090
    %v4092 = vpop.f32.mrb[0].mxu0
    %v4093 = vpop.f32.mrb[0].mxu0
    %v4094 = vpop.f32.mrb[0].mxu0
    %4095 = vdwg.mxu0
    %v4097 = vsel %vm4052, %v4039, 0
    %4099 = vmatprep.subr.bf16.mxu0 0
    %4100 = vmatpush1.bf16.msra.mxu0 %v4097
    %4101 = vmatprep.subr.bf16.mxu0 0
    %4102 = vmatpush1.bf16.msra.mxu0 0
    %4103 = vmatprep.subr.bf16.mxu0 0
    %4104 = vmatpush1.bf16.msra.mxu0 0
    %4105 = vmatprep.subr.bf16.mxu0 0
    %4106 = vmatpush1.bf16.msra.mxu0 0
    %4107 = vmatprep.subr.bf16.mxu0 0
    %4108 = vmatpush1.bf16.msra.mxu0 0
    %4109 = vmatprep.subr.bf16.mxu0 0
    %4110 = vmatpush1.bf16.msra.mxu0 0
    %4111 = vmatprep.subr.bf16.mxu0 0
    %4112 = vmatpush1.bf16.msra.mxu0 0
    %4113 = vmatprep.subr.bf16.mxu0 0
    %4114 = vmatpush1.bf16.msra.mxu0 0
    %4115 = vmatprep.subr.bf16.mxu0 0
    %4116 = vmatpush1.bf16.msra.mxu0 0
    %4117 = vmatprep.subr.bf16.mxu0 0
    %4118 = vmatpush1.bf16.msra.mxu0 0
    %4119 = vmatprep.subr.bf16.mxu0 0
    %4120 = vmatpush1.bf16.msra.mxu0 0
    %4121 = vmatprep.subr.bf16.mxu0 0
    %4122 = vmatpush1.bf16.msra.mxu0 0
    %4123 = vmatprep.subr.bf16.mxu0 0
    %4124 = vmatpush1.bf16.msra.mxu0 0
    %4125 = vmatprep.subr.bf16.mxu0 0
    %4126 = vmatpush1.bf16.msra.mxu0 0
    %4127 = vmatprep.subr.bf16.mxu0 0
    %4128 = vmatpush1.bf16.msra.mxu0 0
    %4129 = vmatprep.subr.bf16.mxu0 0
    %4130 = vmatpush1.bf16.msra.mxu0 0
    %4131 = vmatprep.mubr.bf16.mxu0 0
    %4132 = vmatmul.mubr.bf16.gmra.mrb[0].mxu0 %v4050
    %v4133 = vpop.f32.mrb[0].mxu0
    %v4134 = vadd.f32 0.0, %v4133
    %v4135 = vpop.f32.mrb[0].mxu0
    %v4136 = vpop.f32.mrb[0].mxu0
    %v4137 = vpop.f32.mrb[0].mxu0
    %4138 = vdwg.mxu0
    %v4140 = vsel %vm4052, %v4040, 0
    %4142 = vmatprep.subr.bf16.mxu0 0
    %4143 = vmatpush1.bf16.msra.mxu0 %v4140
    %4144 = vmatprep.subr.bf16.mxu0 0
    %4145 = vmatpush1.bf16.msra.mxu0 0
    %4146 = vmatprep.subr.bf16.mxu0 0
    %4147 = vmatpush1.bf16.msra.mxu0 0
    %4148 = vmatprep.subr.bf16.mxu0 0
    %4149 = vmatpush1.bf16.msra.mxu0 0
    %4150 = vmatprep.subr.bf16.mxu0 0
    %4151 = vmatpush1.bf16.msra.mxu0 0
    %4152 = vmatprep.subr.bf16.mxu0 0
    %4153 = vmatpush1.bf16.msra.mxu0 0
    %4154 = vmatprep.subr.bf16.mxu0 0
    %4155 = vmatpush1.bf16.msra.mxu0 0
    %4156 = vmatprep.subr.bf16.mxu0 0
    %4157 = vmatpush1.bf16.msra.mxu0 0
    %4158 = vmatprep.subr.bf16.mxu0 0
    %4159 = vmatpush1.bf16.msra.mxu0 0
    %4160 = vmatprep.subr.bf16.mxu0 0
    %4161 = vmatpush1.bf16.msra.mxu0 0
    %4162 = vmatprep.subr.bf16.mxu0 0
    %4163 = vmatpush1.bf16.msra.mxu0 0
    %4164 = vmatprep.subr.bf16.mxu0 0
    %4165 = vmatpush1.bf16.msra.mxu0 0
    %4166 = vmatprep.subr.bf16.mxu0 0
    %4167 = vmatpush1.bf16.msra.mxu0 0
    %4168 = vmatprep.subr.bf16.mxu0 0
    %4169 = vmatpush1.bf16.msra.mxu0 0
    %4170 = vmatprep.subr.bf16.mxu0 0
    %4171 = vmatpush1.bf16.msra.mxu0 0
    %4172 = vmatprep.subr.bf16.mxu0 0
    %4173 = vmatpush1.bf16.msra.mxu0 0
    %4174 = vmatprep.mubr.bf16.mxu0 0
    %4175 = vmatmul.mubr.bf16.gmra.mrb[0].mxu0 %v4050
    %v4176 = vpop.f32.mrb[0].mxu0
    %v4177 = vadd.f32 0.0, %v4176
    %v4178 = vpop.f32.mrb[0].mxu0
    %v4179 = vpop.f32.mrb[0].mxu0
    %v4180 = vpop.f32.mrb[0].mxu0
    %4181 = vdwg.mxu0
    %v4183 = vsel %vm4052, %v4041, 0
    %4185 = vmatprep.subr.bf16.mxu0 0
    %4186 = vmatpush1.bf16.msra.mxu0 %v4183
    %4187 = vmatprep.subr.bf16.mxu0 0
    %4188 = vmatpush1.bf16.msra.mxu0 0
    %4189 = vmatprep.subr.bf16.mxu0 0
    %4190 = vmatpush1.bf16.msra.mxu0 0
    %4191 = vmatprep.subr.bf16.mxu0 0
    %4192 = vmatpush1.bf16.msra.mxu0 0
    %4193 = vmatprep.subr.bf16.mxu0 0
    %4194 = vmatpush1.bf16.msra.mxu0 0
    %4195 = vmatprep.subr.bf16.mxu0 0
    %4196 = vmatpush1.bf16.msra.mxu0 0
    %4197 = vmatprep.subr.bf16.mxu0 0
    %4198 = vmatpush1.bf16.msra.mxu0 0
    %4199 = vmatprep.subr.bf16.mxu0 0
    %4200 = vmatpush1.bf16.msra.mxu0 0
    %4201 = vmatprep.subr.bf16.mxu0 0
    %4202 = vmatpush1.bf16.msra.mxu0 0
    %4203 = vmatprep.subr.bf16.mxu0 0
    %4204 = vmatpush1.bf16.msra.mxu0 0
    %4205 = vmatprep.subr.bf16.mxu0 0
    %4206 = vmatpush1.bf16.msra.mxu0 0
    %4207 = vmatprep.subr.bf16.mxu0 0
    %4208 = vmatpush1.bf16.msra.mxu0 0
    %4209 = vmatprep.subr.bf16.mxu0 0
    %4210 = vmatpush1.bf16.msra.mxu0 0
    %4211 = vmatprep.subr.bf16.mxu0 0
    %4212 = vmatpush1.bf16.msra.mxu0 0
    %4213 = vmatprep.subr.bf16.mxu0 0
    %4214 = vmatpush1.bf16.msra.mxu0 0
    %4215 = vmatprep.subr.bf16.mxu0 0
    %4216 = vmatpush1.bf16.msra.mxu0 0
    %4217 = vmatprep.mubr.bf16.mxu0 0
    %4218 = vmatmul.mubr.bf16.gmra.mrb[0].mxu0 %v4050
    %v4219 = vpop.f32.mrb[0].mxu0
    %v4220 = vadd.f32 0.0, %v4219
    %v4221 = vpop.f32.mrb[0].mxu0
    %v4222 = vpop.f32.mrb[0].mxu0
    %v4223 = vpop.f32.mrb[0].mxu0
    %4224 = vdwg.mxu0
    %v4226 = vsel %vm4052, %v4042, 0
    %4228 = vmatprep.subr.bf16.mxu0 0
    %4229 = vmatpush1.bf16.msra.mxu0 %v4226
    %4230 = vmatprep.subr.bf16.mxu0 0
    %4231 = vmatpush1.bf16.msra.mxu0 0
    %4232 = vmatprep.subr.bf16.mxu0 0
    %4233 = vmatpush1.bf16.msra.mxu0 0
    %4234 = vmatprep.subr.bf16.mxu0 0
    %4235 = vmatpush1.bf16.msra.mxu0 0
    %4236 = vmatprep.subr.bf16.mxu0 0
    %4237 = vmatpush1.bf16.msra.mxu0 0
    %4238 = vmatprep.subr.bf16.mxu0 0
    %4239 = vmatpush1.bf16.msra.mxu0 0
    %4240 = vmatprep.subr.bf16.mxu0 0
    %4241 = vmatpush1.bf16.msra.mxu0 0
    %4242 = vmatprep.subr.bf16.mxu0 0
    %4243 = vmatpush1.bf16.msra.mxu0 0
    %4244 = vmatprep.subr.bf16.mxu0 0
    %4245 = vmatpush1.bf16.msra.mxu0 0
    %4246 = vmatprep.subr.bf16.mxu0 0
    %4247 = vmatpush1.bf16.msra.mxu0 0
    %4248 = vmatprep.subr.bf16.mxu0 0
    %4249 = vmatpush1.bf16.msra.mxu0 0
    %4250 = vmatprep.subr.bf16.mxu0 0
    %4251 = vmatpush1.bf16.msra.mxu0 0
    %4252 = vmatprep.subr.bf16.mxu0 0
    %4253 = vmatpush1.bf16.msra.mxu0 0
    %4254 = vmatprep.subr.bf16.mxu0 0
    %4255 = vmatpush1.bf16.msra.mxu0 0
    %4256 = vmatprep.subr.bf16.mxu0 0
    %4257 = vmatpush1.bf16.msra.mxu0 0
    %4258 = vmatprep.subr.bf16.mxu0 0
    %4259 = vmatpush1.bf16.msra.mxu0 0
    %4260 = vmatprep.mubr.bf16.mxu0 0
    %4261 = vmatmul.mubr.bf16.gmra.mrb[0].mxu0 %v4050
    %v4262 = vpop.f32.mrb[0].mxu0
    %v4263 = vadd.f32 0.0, %v4262
    %v4264 = vpop.f32.mrb[0].mxu0
    %v4265 = vpop.f32.mrb[0].mxu0
    %v4266 = vpop.f32.mrb[0].mxu0
    %4267 = vdwg.mxu0
    %v4269 = vsel %vm4052, %v4043, 0
    %4271 = vmatprep.subr.bf16.mxu0 0
    %4272 = vmatpush1.bf16.msra.mxu0 %v4269
    %4273 = vmatprep.subr.bf16.mxu0 0
    %4274 = vmatpush1.bf16.msra.mxu0 0
    %4275 = vmatprep.subr.bf16.mxu0 0
    %4276 = vmatpush1.bf16.msra.mxu0 0
    %4277 = vmatprep.subr.bf16.mxu0 0
    %4278 = vmatpush1.bf16.msra.mxu0 0
    %4279 = vmatprep.subr.bf16.mxu0 0
    %4280 = vmatpush1.bf16.msra.mxu0 0
    %4281 = vmatprep.subr.bf16.mxu0 0
    %4282 = vmatpush1.bf16.msra.mxu0 0
    %4283 = vmatprep.subr.bf16.mxu0 0
    %4284 = vmatpush1.bf16.msra.mxu0 0
    %4285 = vmatprep.subr.bf16.mxu0 0
    %4286 = vmatpush1.bf16.msra.mxu0 0
    %4287 = vmatprep.subr.bf16.mxu0 0
    %4288 = vmatpush1.bf16.msra.mxu0 0
    %4289 = vmatprep.subr.bf16.mxu0 0
    %4290 = vmatpush1.bf16.msra.mxu0 0
    %4291 = vmatprep.subr.bf16.mxu0 0
    %4292 = vmatpush1.bf16.msra.mxu0 0
    %4293 = vmatprep.subr.bf16.mxu0 0
    %4294 = vmatpush1.bf16.msra.mxu0 0
    %4295 = vmatprep.subr.bf16.mxu0 0
    %4296 = vmatpush1.bf16.msra.mxu0 0
    %4297 = vmatprep.subr.bf16.mxu0 0
    %4298 = vmatpush1.bf16.msra.mxu0 0
    %4299 = vmatprep.subr.bf16.mxu0 0
    %4300 = vmatpush1.bf16.msra.mxu0 0
    %4301 = vmatprep.subr.bf16.mxu0 0
    %4302 = vmatpush1.bf16.msra.mxu0 0
    %4303 = vmatprep.mubr.bf16.mxu0 0
    %4304 = vmatmul.mubr.bf16.gmra.mrb[0].mxu0 %v4050
    %v4305 = vpop.f32.mrb[0].mxu0
    %v4306 = vadd.f32 0.0, %v4305
    %v4307 = vpop.f32.mrb[0].mxu0
    %v4308 = vpop.f32.mrb[0].mxu0
    %v4309 = vpop.f32.mrb[0].mxu0
    %4310 = vdwg.mxu0
    %v4312 = vsel %vm4052, %v4044, 0
    %4314 = vmatprep.subr.bf16.mxu0 0
    %4315 = vmatpush1.bf16.msra.mxu0 %v4312
    %4316 = vmatprep.subr.bf16.mxu0 0
    %4317 = vmatpush1.bf16.msra.mxu0 0
    %4318 = vmatprep.subr.bf16.mxu0 0
    %4319 = vmatpush1.bf16.msra.mxu0 0
    %4320 = vmatprep.subr.bf16.mxu0 0
    %4321 = vmatpush1.bf16.msra.mxu0 0
    %4322 = vmatprep.subr.bf16.mxu0 0
    %4323 = vmatpush1.bf16.msra.mxu0 0
    %4324 = vmatprep.subr.bf16.mxu0 0
    %4325 = vmatpush1.bf16.msra.mxu0 0
    %4326 = vmatprep.subr.bf16.mxu0 0
    %4327 = vmatpush1.bf16.msra.mxu0 0
    %4328 = vmatprep.subr.bf16.mxu0 0
    %4329 = vmatpush1.bf16.msra.mxu0 0
    %4330 = vmatprep.subr.bf16.mxu0 0
    %4331 = vmatpush1.bf16.msra.mxu0 0
    %4332 = vmatprep.subr.bf16.mxu0 0
    %4333 = vmatpush1.bf16.msra.mxu0 0
    %4334 = vmatprep.subr.bf16.mxu0 0
    %4335 = vmatpush1.bf16.msra.mxu0 0
    %4336 = vmatprep.subr.bf16.mxu0 0
    %4337 = vmatpush1.bf16.msra.mxu0 0
    %4338 = vmatprep.subr.bf16.mxu0 0
    %4339 = vmatpush1.bf16.msra.mxu0 0
    %4340 = vmatprep.subr.bf16.mxu0 0
    %4341 = vmatpush1.bf16.msra.mxu0 0
    %4342 = vmatprep.subr.bf16.mxu0 0
    %4343 = vmatpush1.bf16.msra.mxu0 0
    %4344 = vmatprep.subr.bf16.mxu0 0
    %4345 = vmatpush1.bf16.msra.mxu0 0
    %4346 = vmatprep.mubr.bf16.mxu0 0
    %4347 = vmatmul.mubr.bf16.gmra.mrb[0].mxu0 %v4050
    %v4348 = vpop.f32.mrb[0].mxu0
    %v4349 = vadd.f32 0.0, %v4348
    %v4350 = vpop.f32.mrb[0].mxu0
    %v4351 = vpop.f32.mrb[0].mxu0
    %v4352 = vpop.f32.mrb[0].mxu0
    %4353 = vdwg.mxu0
    %v4355 = vsel %vm4052, %v4045, 0
    %4357 = vmatprep.subr.bf16.mxu0 0
    %4358 = vmatpush1.bf16.msra.mxu0 %v4355
    %4359 = vmatprep.subr.bf16.mxu0 0
    %4360 = vmatpush1.bf16.msra.mxu0 0
    %4361 = vmatprep.subr.bf16.mxu0 0
    %4362 = vmatpush1.bf16.msra.mxu0 0
    %4363 = vmatprep.subr.bf16.mxu0 0
    %4364 = vmatpush1.bf16.msra.mxu0 0
    %4365 = vmatprep.subr.bf16.mxu0 0
    %4366 = vmatpush1.bf16.msra.mxu0 0
    %4367 = vmatprep.subr.bf16.mxu0 0
    %4368 = vmatpush1.bf16.msra.mxu0 0
    %4369 = vmatprep.subr.bf16.mxu0 0
    %4370 = vmatpush1.bf16.msra.mxu0 0
    %4371 = vmatprep.subr.bf16.mxu0 0
    %4372 = vmatpush1.bf16.msra.mxu0 0
    %4373 = vmatprep.subr.bf16.mxu0 0
    %4374 = vmatpush1.bf16.msra.mxu0 0
    %4375 = vmatprep.subr.bf16.mxu0 0
    %4376 = vmatpush1.bf16.msra.mxu0 0
    %4377 = vmatprep.subr.bf16.mxu0 0
    %4378 = vmatpush1.bf16.msra.mxu0 0
    %4379 = vmatprep.subr.bf16.mxu0 0
    %4380 = vmatpush1.bf16.msra.mxu0 0
    %4381 = vmatprep.subr.bf16.mxu0 0
    %4382 = vmatpush1.bf16.msra.mxu0 0
    %4383 = vmatprep.subr.bf16.mxu0 0
    %4384 = vmatpush1.bf16.msra.mxu0 0
    %4385 = vmatprep.subr.bf16.mxu0 0
    %4386 = vmatpush1.bf16.msra.mxu0 0
    %4387 = vmatprep.subr.bf16.mxu0 0
    %4388 = vmatpush1.bf16.msra.mxu0 0
    %4389 = vmatprep.mubr.bf16.mxu0 0
    %4390 = vmatmul.mubr.bf16.gmra.mrb[0].mxu0 %v4050
    %v4391 = vpop.f32.mrb[0].mxu0
    %v4392 = vadd.f32 0.0, %v4391
    %v4393 = vpop.f32.mrb[0].mxu0
    %v4394 = vpop.f32.mrb[0].mxu0
    %v4395 = vpop.f32.mrb[0].mxu0
    %4396 = vdwg.mxu0
    %v4398 = vsel %vm4048, %v4047, 0
    %4400 = vmatprep.subr.bf16.mxu0 0
    %4401 = vmatpush1.bf16.msra.mxu0 %v4054
    %4402 = vmatprep.subr.bf16.mxu0 0
    %4403 = vmatpush1.bf16.msra.mxu0 0
    %4404 = vmatprep.subr.bf16.mxu0 0
    %4405 = vmatpush1.bf16.msra.mxu0 0
    %4406 = vmatprep.subr.bf16.mxu0 0
    %4407 = vmatpush1.bf16.msra.mxu0 0
    %4408 = vmatprep.subr.bf16.mxu0 0
    %4409 = vmatpush1.bf16.msra.mxu0 0
    %4410 = vmatprep.subr.bf16.mxu0 0
    %4411 = vmatpush1.bf16.msra.mxu0 0
    %4412 = vmatprep.subr.bf16.mxu0 0
    %4413 = vmatpush1.bf16.msra.mxu0 0
    %4414 = vmatprep.subr.bf16.mxu0 0
    %4415 = vmatpush1.bf16.msra.mxu0 0
    %4416 = vmatprep.subr.bf16.mxu0 0
    %4417 = vmatpush1.bf16.msra.mxu0 0
    %4418 = vmatprep.subr.bf16.mxu0 0
    %4419 = vmatpush1.bf16.msra.mxu0 0
    %4420 = vmatprep.subr.bf16.mxu0 0
    %4421 = vmatpush1.bf16.msra.mxu0 0
    %4422 = vmatprep.subr.bf16.mxu0 0
    %4423 = vmatpush1.bf16.msra.mxu0 0
    %4424 = vmatprep.subr.bf16.mxu0 0
    %4425 = vmatpush1.bf16.msra.mxu0 0
    %4426 = vmatprep.subr.bf16.mxu0 0
    %4427 = vmatpush1.bf16.msra.mxu0 0
    %4428 = vmatprep.subr.bf16.mxu0 0
    %4429 = vmatpush1.bf16.msra.mxu0 0
    %4430 = vmatprep.subr.bf16.mxu0 0
    %4431 = vmatpush1.bf16.msra.mxu0 0
    %4432 = vmatprep.mubr.bf16.mxu0 0
    %4433 = vmatmul.mubr.bf16.gmra.mrb[0].mxu0 %v4398
    %v4434 = vpop.f32.mrb[0].mxu0
    %v4435 = vadd.f32 0.0, %v4434
    %v4436 = vpop.f32.mrb[0].mxu0
    %v4437 = vpop.f32.mrb[0].mxu0
    %v4438 = vpop.f32.mrb[0].mxu0
    %4439 = vdwg.mxu0
    %4440 = vmatprep.subr.bf16.mxu0 0
    %4441 = vmatpush1.bf16.msra.mxu0 %v4097
    %4442 = vmatprep.subr.bf16.mxu0 0
    %4443 = vmatpush1.bf16.msra.mxu0 0
    %4444 = vmatprep.subr.bf16.mxu0 0
    %4445 = vmatpush1.bf16.msra.mxu0 0
    %4446 = vmatprep.subr.bf16.mxu0 0
    %4447 = vmatpush1.bf16.msra.mxu0 0
    %4448 = vmatprep.subr.bf16.mxu0 0
    %4449 = vmatpush1.bf16.msra.mxu0 0
    %4450 = vmatprep.subr.bf16.mxu0 0
    %4451 = vmatpush1.bf16.msra.mxu0 0
    %4452 = vmatprep.subr.bf16.mxu0 0
    %4453 = vmatpush1.bf16.msra.mxu0 0
    %4454 = vmatprep.subr.bf16.mxu0 0
    %4455 = vmatpush1.bf16.msra.mxu0 0
    %4456 = vmatprep.subr.bf16.mxu0 0
    %4457 = vmatpush1.bf16.msra.mxu0 0
    %4458 = vmatprep.subr.bf16.mxu0 0
    %4459 = vmatpush1.bf16.msra.mxu0 0
    %4460 = vmatprep.subr.bf16.mxu0 0
    %4461 = vmatpush1.bf16.msra.mxu0 0
    %4462 = vmatprep.subr.bf16.mxu0 0
    %4463 = vmatpush1.bf16.msra.mxu0 0
    %4464 = vmatprep.subr.bf16.mxu0 0
    %4465 = vmatpush1.bf16.msra.mxu0 0
    %4466 = vmatprep.subr.bf16.mxu0 0
    %4467 = vmatpush1.bf16.msra.mxu0 0
    %4468 = vmatprep.subr.bf16.mxu0 0
    %4469 = vmatpush1.bf16.msra.mxu0 0
    %4470 = vmatprep.subr.bf16.mxu0 0
    %4471 = vmatpush1.bf16.msra.mxu0 0
    %4472 = vmatprep.mubr.bf16.mxu0 0
    %4473 = vmatmul.mubr.bf16.gmra.mrb[0].mxu0 %v4398
    %v4474 = vpop.f32.mrb[0].mxu0
    %v4475 = vadd.f32 0.0, %v4474
    %v4476 = vpop.f32.mrb[0].mxu0
    %v4477 = vpop.f32.mrb[0].mxu0
    %v4478 = vpop.f32.mrb[0].mxu0
    %4479 = vdwg.mxu0
    %4480 = vmatprep.subr.bf16.mxu0 0
    %4481 = vmatpush1.bf16.msra.mxu0 %v4140
    %4482 = vmatprep.subr.bf16.mxu0 0
    %4483 = vmatpush1.bf16.msra.mxu0 0
    %4484 = vmatprep.subr.bf16.mxu0 0
    %4485 = vmatpush1.bf16.msra.mxu0 0
    %4486 = vmatprep.subr.bf16.mxu0 0
    %4487 = vmatpush1.bf16.msra.mxu0 0
    %4488 = vmatprep.subr.bf16.mxu0 0
    %4489 = vmatpush1.bf16.msra.mxu0 0
    %4490 = vmatprep.subr.bf16.mxu0 0
    %4491 = vmatpush1.bf16.msra.mxu0 0
    %4492 = vmatprep.subr.bf16.mxu0 0
    %4493 = vmatpush1.bf16.msra.mxu0 0
    %4494 = vmatprep.subr.bf16.mxu0 0
    %4495 = vmatpush1.bf16.msra.mxu0 0
    %4496 = vmatprep.subr.bf16.mxu0 0
    %4497 = vmatpush1.bf16.msra.mxu0 0
    %4498 = vmatprep.subr.bf16.mxu0 0
    %4499 = vmatpush1.bf16.msra.mxu0 0
    %4500 = vmatprep.subr.bf16.mxu0 0
    %4501 = vmatpush1.bf16.msra.mxu0 0
    %4502 = vmatprep.subr.bf16.mxu0 0
    %4503 = vmatpush1.bf16.msra.mxu0 0
    %4504 = vmatprep.subr.bf16.mxu0 0
    %4505 = vmatpush1.bf16.msra.mxu0 0
    %4506 = vmatprep.subr.bf16.mxu0 0
    %4507 = vmatpush1.bf16.msra.mxu0 0
    %4508 = vmatprep.subr.bf16.mxu0 0
    %4509 = vmatpush1.bf16.msra.mxu0 0
    %4510 = vmatprep.subr.bf16.mxu0 0
    %4511 = vmatpush1.bf16.msra.mxu0 0
    %4512 = vmatprep.mubr.bf16.mxu0 0
    %4513 = vmatmul.mubr.bf16.gmra.mrb[0].mxu0 %v4398
    %v4514 = vpop.f32.mrb[0].mxu0
    %v4515 = vadd.f32 0.0, %v4514
    %v4516 = vpop.f32.mrb[0].mxu0
    %v4517 = vpop.f32.mrb[0].mxu0
    %v4518 = vpop.f32.mrb[0].mxu0
    %4519 = vdwg.mxu0
    %4520 = vmatprep.subr.bf16.mxu0 0
    %4521 = vmatpush1.bf16.msra.mxu0 %v4183
    %4522 = vmatprep.subr.bf16.mxu0 0
    %4523 = vmatpush1.bf16.msra.mxu0 0
    %4524 = vmatprep.subr.bf16.mxu0 0
    %4525 = vmatpush1.bf16.msra.mxu0 0
    %4526 = vmatprep.subr.bf16.mxu0 0
    %4527 = vmatpush1.bf16.msra.mxu0 0
    %4528 = vmatprep.subr.bf16.mxu0 0
    %4529 = vmatpush1.bf16.msra.mxu0 0
    %4530 = vmatprep.subr.bf16.mxu0 0
    %4531 = vmatpush1.bf16.msra.mxu0 0
    %4532 = vmatprep.subr.bf16.mxu0 0
    %4533 = vmatpush1.bf16.msra.mxu0 0
    %4534 = vmatprep.subr.bf16.mxu0 0
    %4535 = vmatpush1.bf16.msra.mxu0 0
    %4536 = vmatprep.subr.bf16.mxu0 0
    %4537 = vmatpush1.bf16.msra.mxu0 0
    %4538 = vmatprep.subr.bf16.mxu0 0
    %4539 = vmatpush1.bf16.msra.mxu0 0
    %4540 = vmatprep.subr.bf16.mxu0 0
    %4541 = vmatpush1.bf16.msra.mxu0 0
    %4542 = vmatprep.subr.bf16.mxu0 0
    %4543 = vmatpush1.bf16.msra.mxu0 0
    %4544 = vmatprep.subr.bf16.mxu0 0
    %4545 = vmatpush1.bf16.msra.mxu0 0
    %4546 = vmatprep.subr.bf16.mxu0 0
    %4547 = vmatpush1.bf16.msra.mxu0 0
    %4548 = vmatprep.subr.bf16.mxu0 0
    %4549 = vmatpush1.bf16.msra.mxu0 0
    %4550 = vmatprep.subr.bf16.mxu0 0
    %4551 = vmatpush1.bf16.msra.mxu0 0
    %4552 = vmatprep.mubr.bf16.mxu0 0
    %4553 = vmatmul.mubr.bf16.gmra.mrb[0].mxu0 %v4398
    %v4554 = vpop.f32.mrb[0].mxu0
    %v4555 = vadd.f32 0.0, %v4554
    %v4556 = vpop.f32.mrb[0].mxu0
    %v4557 = vpop.f32.mrb[0].mxu0
    %v4558 = vpop.f32.mrb[0].mxu0
    %4559 = vdwg.mxu0
    %4560 = vmatprep.subr.bf16.mxu0 0
    %4561 = vmatpush1.bf16.msra.mxu0 %v4226
    %4562 = vmatprep.subr.bf16.mxu0 0
    %4563 = vmatpush1.bf16.msra.mxu0 0
    %4564 = vmatprep.subr.bf16.mxu0 0
    %4565 = vmatpush1.bf16.msra.mxu0 0
    %4566 = vmatprep.subr.bf16.mxu0 0
    %4567 = vmatpush1.bf16.msra.mxu0 0
    %4568 = vmatprep.subr.bf16.mxu0 0
    %4569 = vmatpush1.bf16.msra.mxu0 0
    %4570 = vmatprep.subr.bf16.mxu0 0
    %4571 = vmatpush1.bf16.msra.mxu0 0
    %4572 = vmatprep.subr.bf16.mxu0 0
    %4573 = vmatpush1.bf16.msra.mxu0 0
    %4574 = vmatprep.subr.bf16.mxu0 0
    %4575 = vmatpush1.bf16.msra.mxu0 0
    %4576 = vmatprep.subr.bf16.mxu0 0
    %4577 = vmatpush1.bf16.msra.mxu0 0
    %4578 = vmatprep.subr.bf16.mxu0 0
    %4579 = vmatpush1.bf16.msra.mxu0 0
    %4580 = vmatprep.subr.bf16.mxu0 0
    %4581 = vmatpush1.bf16.msra.mxu0 0
    %4582 = vmatprep.subr.bf16.mxu0 0
    %4583 = vmatpush1.bf16.msra.mxu0 0
    %4584 = vmatprep.subr.bf16.mxu0 0
    %4585 = vmatpush1.bf16.msra.mxu0 0
    %4586 = vmatprep.subr.bf16.mxu0 0
    %4587 = vmatpush1.bf16.msra.mxu0 0
    %4588 = vmatprep.subr.bf16.mxu0 0
    %4589 = vmatpush1.bf16.msra.mxu0 0
    %4590 = vmatprep.subr.bf16.mxu0 0
    %4591 = vmatpush1.bf16.msra.mxu0 0
    %4592 = vmatprep.mubr.bf16.mxu0 0
    %4593 = vmatmul.mubr.bf16.gmra.mrb[0].mxu0 %v4398
    %v4594 = vpop.f32.mrb[0].mxu0
    %v4595 = vadd.f32 0.0, %v4594
    %v4596 = vpop.f32.mrb[0].mxu0
    %v4597 = vpop.f32.mrb[0].mxu0
    %v4598 = vpop.f32.mrb[0].mxu0
    %4599 = vdwg.mxu0
    %4600 = vmatprep.subr.bf16.mxu0 0
    %4601 = vmatpush1.bf16.msra.mxu0 %v4269
    %4602 = vmatprep.subr.bf16.mxu0 0
    %4603 = vmatpush1.bf16.msra.mxu0 0
    %4604 = vmatprep.subr.bf16.mxu0 0
    %4605 = vmatpush1.bf16.msra.mxu0 0
    %4606 = vmatprep.subr.bf16.mxu0 0
    %4607 = vmatpush1.bf16.msra.mxu0 0
    %4608 = vmatprep.subr.bf16.mxu0 0
    %4609 = vmatpush1.bf16.msra.mxu0 0
    %4610 = vmatprep.subr.bf16.mxu0 0
    %4611 = vmatpush1.bf16.msra.mxu0 0
    %4612 = vmatprep.subr.bf16.mxu0 0
    %4613 = vmatpush1.bf16.msra.mxu0 0
    %4614 = vmatprep.subr.bf16.mxu0 0
    %4615 = vmatpush1.bf16.msra.mxu0 0
    %4616 = vmatprep.subr.bf16.mxu0 0
    %4617 = vmatpush1.bf16.msra.mxu0 0
    %4618 = vmatprep.subr.bf16.mxu0 0
    %4619 = vmatpush1.bf16.msra.mxu0 0
    %4620 = vmatprep.subr.bf16.mxu0 0
    %4621 = vmatpush1.bf16.msra.mxu0 0
    %4622 = vmatprep.subr.bf16.mxu0 0
    %4623 = vmatpush1.bf16.msra.mxu0 0
    %4624 = vmatprep.subr.bf16.mxu0 0
    %4625 = vmatpush1.bf16.msra.mxu0 0
    %4626 = vmatprep.subr.bf16.mxu0 0
    %4627 = vmatpush1.bf16.msra.mxu0 0
    %4628 = vmatprep.subr.bf16.mxu0 0
    %4629 = vmatpush1.bf16.msra.mxu0 0
    %4630 = vmatprep.subr.bf16.mxu0 0
    %4631 = vmatpush1.bf16.msra.mxu0 0
    %4632 = vmatprep.mubr.bf16.mxu0 0
    %4633 = vmatmul.mubr.bf16.gmra.mrb[0].mxu0 %v4398
    %v4634 = vpop.f32.mrb[0].mxu0
    %v4635 = vadd.f32 0.0, %v4634
    %v4636 = vpop.f32.mrb[0].mxu0
    %v4637 = vpop.f32.mrb[0].mxu0
    %v4638 = vpop.f32.mrb[0].mxu0
    %4639 = vdwg.mxu0
    %4640 = vmatprep.subr.bf16.mxu0 0
    %4641 = vmatpush1.bf16.msra.mxu0 %v4312
    %4642 = vmatprep.subr.bf16.mxu0 0
    %4643 = vmatpush1.bf16.msra.mxu0 0
    %4644 = vmatprep.subr.bf16.mxu0 0
    %4645 = vmatpush1.bf16.msra.mxu0 0
    %4646 = vmatprep.subr.bf16.mxu0 0
    %4647 = vmatpush1.bf16.msra.mxu0 0
    %4648 = vmatprep.subr.bf16.mxu0 0
    %4649 = vmatpush1.bf16.msra.mxu0 0
    %4650 = vmatprep.subr.bf16.mxu0 0
    %4651 = vmatpush1.bf16.msra.mxu0 0
    %4652 = vmatprep.subr.bf16.mxu0 0
    %4653 = vmatpush1.bf16.msra.mxu0 0
    %4654 = vmatprep.subr.bf16.mxu0 0
    %4655 = vmatpush1.bf16.msra.mxu0 0
    %4656 = vmatprep.subr.bf16.mxu0 0
    %4657 = vmatpush1.bf16.msra.mxu0 0
    %4658 = vmatprep.subr.bf16.mxu0 0
    %4659 = vmatpush1.bf16.msra.mxu0 0
    %4660 = vmatprep.subr.bf16.mxu0 0
    %4661 = vmatpush1.bf16.msra.mxu0 0
    %4662 = vmatprep.subr.bf16.mxu0 0
    %4663 = vmatpush1.bf16.msra.mxu0 0
    %4664 = vmatprep.subr.bf16.mxu0 0
    %4665 = vmatpush1.bf16.msra.mxu0 0
    %4666 = vmatprep.subr.bf16.mxu0 0
    %4667 = vmatpush1.bf16.msra.mxu0 0
    %4668 = vmatprep.subr.bf16.mxu0 0
    %4669 = vmatpush1.bf16.msra.mxu0 0
    %4670 = vmatprep.subr.bf16.mxu0 0
    %4671 = vmatpush1.bf16.msra.mxu0 0
    %4672 = vmatprep.mubr.bf16.mxu0 0
    %4673 = vmatmul.mubr.bf16.gmra.mrb[0].mxu0 %v4398
    %v4674 = vpop.f32.mrb[0].mxu0
    %v4675 = vadd.f32 0.0, %v4674
    %v4676 = vpop.f32.mrb[0].mxu0
    %v4677 = vpop.f32.mrb[0].mxu0
    %v4678 = vpop.f32.mrb[0].mxu0
    %4679 = vdwg.mxu0
    %4680 = vmatprep.subr.bf16.mxu0 0
    %4681 = vmatpush1.bf16.msra.mxu0 %v4355
    %4682 = vmatprep.subr.bf16.mxu0 0
    %4683 = vmatpush1.bf16.msra.mxu0 0
    %4684 = vmatprep.subr.bf16.mxu0 0
    %4685 = vmatpush1.bf16.msra.mxu0 0
    %4686 = vmatprep.subr.bf16.mxu0 0
    %4687 = vmatpush1.bf16.msra.mxu0 0
    %4688 = vmatprep.subr.bf16.mxu0 0
    %4689 = vmatpush1.bf16.msra.mxu0 0
    %4690 = vmatprep.subr.bf16.mxu0 0
    %4691 = vmatpush1.bf16.msra.mxu0 0
    %4692 = vmatprep.subr.bf16.mxu0 0
    %4693 = vmatpush1.bf16.msra.mxu0 0
    %4694 = vmatprep.subr.bf16.mxu0 0
    %4695 = vmatpush1.bf16.msra.mxu0 0
    %4696 = vmatprep.subr.bf16.mxu0 0
    %4697 = vmatpush1.bf16.msra.mxu0 0
    %4698 = vmatprep.subr.bf16.mxu0 0
    %4699 = vmatpush1.bf16.msra.mxu0 0
    %4700 = vmatprep.subr.bf16.mxu0 0
    %4701 = vmatpush1.bf16.msra.mxu0 0
    %4702 = vmatprep.subr.bf16.mxu0 0
    %4703 = vmatpush1.bf16.msra.mxu0 0
    %4704 = vmatprep.subr.bf16.mxu0 0
    %4705 = vmatpush1.bf16.msra.mxu0 0
    %4706 = vmatprep.subr.bf16.mxu0 0
    %4707 = vmatpush1.bf16.msra.mxu0 0
    %4708 = vmatprep.subr.bf16.mxu0 0
    %4709 = vmatpush1.bf16.msra.mxu0 0
    %4710 = vmatprep.subr.bf16.mxu0 0
    %4711 = vmatpush1.bf16.msra.mxu0 0
    %4712 = vmatprep.mubr.bf16.mxu0 0
    %4713 = vmatmul.mubr.bf16.gmra.mrb[0].mxu0 %v4398
    %v4714 = vpop.f32.mrb[0].mxu0
    %v4715 = vadd.f32 0.0, %v4714
    %v4716 = vpop.f32.mrb[0].mxu0
    %v4717 = vpop.f32.mrb[0].mxu0
    %v4718 = vpop.f32.mrb[0].mxu0
    %4719 = vdwg.mxu0
    %4728 = vrot.lane.b32.xlu0 %v4435, 16
    %v4729 = vpop.permute.xlu0 %4728
    %4730 = vrot.lane.b32.xlu0 %v4475, 16
    %v4731 = vpop.permute.xlu0 %4730
    %4732 = vrot.lane.b32.xlu0 %v4515, 16
    %v4733 = vpop.permute.xlu0 %4732
    %4734 = vrot.lane.b32.xlu0 %v4555, 16
    %v4735 = vpop.permute.xlu0 %4734
    %4736 = vrot.lane.b32.xlu0 %v4595, 16
    %v4737 = vpop.permute.xlu0 %4736
    %4738 = vrot.lane.b32.xlu0 %v4635, 16
    %v4739 = vpop.permute.xlu0 %4738
    %4740 = vrot.lane.b32.xlu0 %v4675, 16
    %v4741 = vpop.permute.xlu0 %4740
    %4742 = vrot.lane.b32.xlu0 %v4715, 16
    %v4743 = vpop.permute.xlu0 %4742
    %v4752 = vsel %vm3518, %v4091, %v4729
    %v4753 = vsel %vm3518, %v4134, %v4731
    %v4754 = vsel %vm3518, %v4177, %v4733
    %v4755 = vsel %vm3518, %v4220, %v4735
    %v4756 = vsel %vm3518, %v4263, %v4737
    %v4757 = vsel %vm3518, %v4306, %v4739
    %v4758 = vsel %vm3518, %v4349, %v4741
    %v4759 = vsel %vm3518, %v4392, %v4743
    %v4760 = vpack.c.bf16 %v4752, %v4752
    %v4761 = vpack.c.bf16 %v4753, %v4753
    %v4762 = vpack.c.bf16 %v4754, %v4754
    %v4763 = vpack.c.bf16 %v4755, %v4755
    %v4764 = vpack.c.bf16 %v4756, %v4756
    %v4765 = vpack.c.bf16 %v4757, %v4757
    %v4766 = vpack.c.bf16 %v4758, %v4758
    %v4767 = vpack.c.bf16 %v4759, %v4759
    %v4768 = vld [vmem:[%s5] sm:$0xf]
    %v4769 = vld [vmem:[%s5 + $0x4] sm:$0xf]
    %v4770 = vld [vmem:[%s5 + $0x8] sm:$0xf]
    %v4771 = vld [vmem:[%s5 + $0xc] sm:$0xf]
    %v4772 = vld [vmem:[%s5 + $0x10] sm:$0xf]
    %v4773 = vld [vmem:[%s5 + $0x14] sm:$0xf]
    %v4774 = vld [vmem:[%s5 + $0x18] sm:$0xf]
    %v4775 = vld [vmem:[%s5 + $0x1c] sm:$0xf]
    %v4776 = vld [vmem:[%s5 + $0x20] sm:$0xf]
    %v4777 = vld [vmem:[%s5 + $0x24] sm:$0xf]
    %v4778 = vld [vmem:[%s5 + $0x28] sm:$0xf]
    %v4779 = vld [vmem:[%s5 + $0x2c] sm:$0xf]
    %v4780 = vld [vmem:[%s5 + $0x30] sm:$0xf]
    %v4781 = vld [vmem:[%s5 + $0x34] sm:$0xf]
    %v4782 = vld [vmem:[%s5 + $0x38] sm:$0xf]
    %v4783 = vld [vmem:[%s5 + $0x3c] sm:$0xf]
    %v4784 = vld [vmem:[%s5 + $0x40] sm:$0xf]
    %v4785 = vld [vmem:[%s5 + $0x44] sm:$0xf]
    %v4786 = vld [vmem:[%s5 + $0x48] sm:$0xf]
    %v4787 = vld [vmem:[%s5 + $0x4c] sm:$0xf]
    %v4788 = vld [vmem:[%s5 + $0x50] sm:$0xf]
    %v4789 = vld [vmem:[%s5 + $0x54] sm:$0xf]
    %v4790 = vld [vmem:[%s5 + $0x58] sm:$0xf]
    %v4791 = vld [vmem:[%s5 + $0x5c] sm:$0xf]
    %v4792 = vld [vmem:[%s5 + $0x60] sm:$0xf]
    %v4793 = vld [vmem:[%s5 + $0x64] sm:$0xf]
    %v4794 = vld [vmem:[%s5 + $0x68] sm:$0xf]
    %v4795 = vld [vmem:[%s5 + $0x6c] sm:$0xf]
    %v4796 = vld [vmem:[%s5 + $0x70] sm:$0xf]
    %v4797 = vld [vmem:[%s5 + $0x74] sm:$0xf]
    %v4798 = vld [vmem:[%s5 + $0x78] sm:$0xf]
    %v4799 = vld [vmem:[%s5 + $0x7c] sm:$0xf]
    %v4800 = vld [vmem:[%s6] sm:$0x1]
    %v4802 = vshrl.u32 %v4761, 16
    %v4804 = vshll.u32 %v4761, 16
    %v4806 = vrot.slane %v4804, 1
    %v4807 = vor.u32 %v4802, %v4806
    %v4809 = vshrl.u32 %v4765, 16
    %v4811 = vshll.u32 %v4765, 16
    %v4813 = vrot.slane %v4811, 1
    %v4814 = vor.u32 %v4809, %v4813
    %4815 = vrot.lane.b32.xlu0 %v3282, 32
    %v4816 = vpop.permute.xlu0 %4815
    %4817 = vrot.lane.b32.xlu0 %v4807, 32
    %v4818 = vpop.permute.xlu0 %4817
    %4819 = vrot.lane.b32.xlu0 %v4814, 32
    %v4820 = vpop.permute.xlu0 %4819
    %4825 = vrot.lane.b32.xlu0 %v4760, 64
    %v4826 = vpop.permute.xlu0 %4825
    %4827 = vrot.lane.b32.xlu0 %v4762, 64
    %v4828 = vpop.permute.xlu0 %4827
    %4829 = vrot.lane.b32.xlu0 %v4764, 64
    %v4830 = vpop.permute.xlu0 %4829
    %4831 = vrot.lane.b32.xlu0 %v4766, 64
    %v4832 = vpop.permute.xlu0 %4831
    %v4834 = vshrl.u32 %v4760, 16
    %v4836 = vshll.u32 %v4760, 16
    %v4838 = vrot.slane %v4836, 1
    %v4839 = vor.u32 %v4834, %v4838
    %v4841 = vshrl.u32 %v4762, 16
    %v4843 = vshll.u32 %v4762, 16
    %v4845 = vrot.slane %v4843, 1
    %v4846 = vor.u32 %v4841, %v4845
    %v4848 = vshrl.u32 %v4764, 16
    %v4850 = vshll.u32 %v4764, 16
    %v4852 = vrot.slane %v4850, 1
    %v4853 = vor.u32 %v4848, %v4852
    %v4855 = vshrl.u32 %v4766, 16
    %v4857 = vshll.u32 %v4766, 16
    %v4859 = vrot.slane %v4857, 1
    %v4860 = vor.u32 %v4855, %v4859
    %4861 = vrot.lane.b32.xlu0 %v4839, 96
    %v4862 = vpop.permute.xlu0 %4861
    %4863 = vrot.lane.b32.xlu0 %v4846, 96
    %v4864 = vpop.permute.xlu0 %4863
    %4865 = vrot.lane.b32.xlu0 %v4853, 96
    %v4866 = vpop.permute.xlu0 %4865
    %4867 = vrot.lane.b32.xlu0 %v4860, 96
    %v4868 = vpop.permute.xlu0 %4867
    %v4870 = vshrl.u32 %v4763, 16
    %v4872 = vshll.u32 %v4763, 16
    %v4874 = vrot.slane %v4872, 1
    %v4875 = vor.u32 %v4870, %v4874
    %v4877 = vshrl.u32 %v4767, 16
    %v4879 = vshll.u32 %v4767, 16
    %v4881 = vrot.slane %v4879, 1
    %v4882 = vor.u32 %v4877, %v4881
    %4883 = vrot.lane.b32.xlu0 %v4875, 32
    %v4884 = vpop.permute.xlu0 %4883
    %4885 = vrot.lane.b32.xlu0 %v4882, 32
    %v4886 = vpop.permute.xlu0 %4885
    %4887 = vrot.lane.b32.xlu0 0, 64
    %v4888 = vpop.permute.xlu0 %4887
    %4889 = vrot.lane.b32.xlu0 %v3282, 96
    %v4890 = vpop.permute.xlu0 %4889
    %v4892 = vsel %vm3533, 0, %v4816
    %v4894 = vsel %vm3533, %v4761, %v4818
    %v4896 = vsel %vm3533, %v4765, %v4820
    %v4898 = vsel %vm3566, %v4892, %v4826
    %v4900 = vsel %vm3566, %v4894, %v4828
    %v4902 = vsel %vm3566, %v4892, %v4830
    %v4904 = vsel %vm3566, %v4896, %v4832
    %v4906 = vsel %vm3600, %v4898, %v4862
    %v4909 = vsel %vm3600, %v4900, %v4864
    %v4912 = vsel %vm3600, %v4902, %v4866
    %v4915 = vsel %vm3600, %v4904, %v4868
    %v4918 = vsel %vm3533, %v4763, %v4884
    %v4920 = vsel %vm3533, %v4767, %v4886
    %v4922 = vsel %vm3566, %v4918, %v4888
    %v4923 = vsel %vm3566, %v4920, %v4888
    %v4925 = vsel %vm3600, %v4922, %v4890
    %v4927 = vsel %vm3600, %v4923, %v4890
    %v4930 = vlaneseq
    %v4931 = vshrl.u32 %v4930, 7
    %v4932 = vsub.s32 0, %v4931
    %v4933 = vrot.slane %v4800, %v4932
    %v4967 = vunpack.c.l.b16 %v4768
    %v4968 = vunpack.c.l.b16 %v4769
    %v4969 = vunpack.c.l.b16 %v4770
    %v4970 = vunpack.c.l.b16 %v4771
    %v4971 = vunpack.c.l.b16 %v4772
    %v4972 = vunpack.c.l.b16 %v4773
    %v4973 = vunpack.c.l.b16 %v4774
    %v4974 = vunpack.c.l.b16 %v4775
    %v4975 = vunpack.c.l.b16 %v4776
    %v4976 = vunpack.c.l.b16 %v4777
    %v4977 = vunpack.c.l.b16 %v4778
    %v4978 = vunpack.c.l.b16 %v4779
    %v4979 = vunpack.c.l.b16 %v4780
    %v4980 = vunpack.c.l.b16 %v4781
    %v4981 = vunpack.c.l.b16 %v4782
    %v4982 = vunpack.c.l.b16 %v4783
    %v4983 = vunpack.c.l.b16 %v4784
    %v4984 = vunpack.c.l.b16 %v4785
    %v4985 = vunpack.c.l.b16 %v4786
    %v4986 = vunpack.c.l.b16 %v4787
    %v4987 = vunpack.c.l.b16 %v4788
    %v4988 = vunpack.c.l.b16 %v4789
    %v4989 = vunpack.c.l.b16 %v4790
    %v4990 = vunpack.c.l.b16 %v4791
    %v4991 = vunpack.c.l.b16 %v4792
    %v4992 = vunpack.c.l.b16 %v4793
    %v4993 = vunpack.c.l.b16 %v4794
    %v4994 = vunpack.c.l.b16 %v4795
    %v4995 = vunpack.c.l.b16 %v4796
    %v4996 = vunpack.c.l.b16 %v4797
    %v4997 = vunpack.c.l.b16 %v4798
    %v4998 = vunpack.c.l.b16 %v4799
    %v4999 = vpack.c.b16 %v4968, %v4967
    %v5000 = vpack.c.b16 %v4970, %v4969
    %v5001 = vpack.c.b16 %v4972, %v4971
    %v5002 = vpack.c.b16 %v4974, %v4973
    %v5003 = vpack.c.b16 %v4976, %v4975
    %v5004 = vpack.c.b16 %v4978, %v4977
    %v5005 = vpack.c.b16 %v4980, %v4979
    %v5006 = vpack.c.b16 %v4982, %v4981
    %v5007 = vpack.c.b16 %v4984, %v4983
    %v5008 = vpack.c.b16 %v4986, %v4985
    %v5009 = vpack.c.b16 %v4988, %v4987
    %v5010 = vpack.c.b16 %v4990, %v4989
    %v5011 = vpack.c.b16 %v4992, %v4991
    %v5012 = vpack.c.b16 %v4994, %v4993
    %v5013 = vpack.c.b16 %v4996, %v4995
    %v5014 = vpack.c.b16 %v4998, %v4997
    %5031 = vmatprep.subr.bf16.mxu0 0
    %5032 = vmatpush1.bf16.msra.mxu0 %v4999
    %5033 = vmatprep.subr.bf16.mxu0 0
    %5034 = vmatpush1.bf16.msra.mxu0 %v5000
    %5035 = vmatprep.subr.bf16.mxu0 0
    %5036 = vmatpush1.bf16.msra.mxu0 %v5001
    %5037 = vmatprep.subr.bf16.mxu0 0
    %5038 = vmatpush1.bf16.msra.mxu0 %v5002
    %5039 = vmatprep.subr.bf16.mxu0 0
    %5040 = vmatpush1.bf16.msra.mxu0 %v5003
    %5041 = vmatprep.subr.bf16.mxu0 0
    %5042 = vmatpush1.bf16.msra.mxu0 %v5004
    %5043 = vmatprep.subr.bf16.mxu0 0
    %5044 = vmatpush1.bf16.msra.mxu0 %v5005
    %5045 = vmatprep.subr.bf16.mxu0 0
    %5046 = vmatpush1.bf16.msra.mxu0 %v5006
    %5047 = vmatprep.subr.bf16.mxu0 0
    %5048 = vmatpush1.bf16.msra.mxu0 %v5007
    %5049 = vmatprep.subr.bf16.mxu0 0
    %5050 = vmatpush1.bf16.msra.mxu0 %v5008
    %5051 = vmatprep.subr.bf16.mxu0 0
    %5052 = vmatpush1.bf16.msra.mxu0 %v5009
    %5053 = vmatprep.subr.bf16.mxu0 0
    %5054 = vmatpush1.bf16.msra.mxu0 %v5010
    %5055 = vmatprep.subr.bf16.mxu0 0
    %5056 = vmatpush1.bf16.msra.mxu0 %v5011
    %5057 = vmatprep.subr.bf16.mxu0 0
    %5058 = vmatpush1.bf16.msra.mxu0 %v5012
    %5059 = vmatprep.subr.bf16.mxu0 0
    %5060 = vmatpush1.bf16.msra.mxu0 %v5013
    %5061 = vmatprep.subr.bf16.mxu0 0
    %5062 = vmatpush1.bf16.msra.mxu0 %v5014
    %5063 = vmatprep.mubr.bf16.mxu0 %v4909
    %5064 = vmatmul.mubr.bf16.gmra.mrb[0].mxu0 %v4906
    %v5065 = vpop.f32.mrb[0].mxu0
    %v5066 = vadd.f32 %v4933, %v5065
    %v5067 = vpop.f32.mrb[0].mxu0
    %v5068 = vpop.f32.mrb[0].mxu0
    %v5069 = vpop.f32.mrb[0].mxu0
    %5070 = vdwg.mxu0
    %5071 = vmatprep.subr.bf16.mxu0 0
    %5072 = vmatpush1.bf16.msra.mxu0 %v4999
    %5073 = vmatprep.subr.bf16.mxu0 0
    %5074 = vmatpush1.bf16.msra.mxu0 %v5000
    %5075 = vmatprep.subr.bf16.mxu0 0
    %5076 = vmatpush1.bf16.msra.mxu0 %v5001
    %5077 = vmatprep.subr.bf16.mxu0 0
    %5078 = vmatpush1.bf16.msra.mxu0 %v5002
    %5079 = vmatprep.subr.bf16.mxu0 0
    %5080 = vmatpush1.bf16.msra.mxu0 %v5003
    %5081 = vmatprep.subr.bf16.mxu0 0
    %5082 = vmatpush1.bf16.msra.mxu0 %v5004
    %5083 = vmatprep.subr.bf16.mxu0 0
    %5084 = vmatpush1.bf16.msra.mxu0 %v5005
    %5085 = vmatprep.subr.bf16.mxu0 0
    %5086 = vmatpush1.bf16.msra.mxu0 %v5006
    %5087 = vmatprep.subr.bf16.mxu0 0
    %5088 = vmatpush1.bf16.msra.mxu0 %v5007
    %5089 = vmatprep.subr.bf16.mxu0 0
    %5090 = vmatpush1.bf16.msra.mxu0 %v5008
    %5091 = vmatprep.subr.bf16.mxu0 0
    %5092 = vmatpush1.bf16.msra.mxu0 %v5009
    %5093 = vmatprep.subr.bf16.mxu0 0
    %5094 = vmatpush1.bf16.msra.mxu0 %v5010
    %5095 = vmatprep.subr.bf16.mxu0 0
    %5096 = vmatpush1.bf16.msra.mxu0 %v5011
    %5097 = vmatprep.subr.bf16.mxu0 0
    %5098 = vmatpush1.bf16.msra.mxu0 %v5012
    %5099 = vmatprep.subr.bf16.mxu0 0
    %5100 = vmatpush1.bf16.msra.mxu0 %v5013
    %5101 = vmatprep.subr.bf16.mxu0 0
    %5102 = vmatpush1.bf16.msra.mxu0 %v5014
    %5103 = vmatprep.mubr.bf16.mxu0 %v4925
    %5104 = vmatmul.mubr.bf16.gmra.mrb[0].mxu0 %v4909
    %v5105 = vpop.f32.mrb[0].mxu0
    %v5106 = vadd.f32 %v4933, %v5105
    %v5107 = vpop.f32.mrb[0].mxu0
    %v5108 = vpop.f32.mrb[0].mxu0
    %v5109 = vpop.f32.mrb[0].mxu0
    %5110 = vdwg.mxu0
    %5111 = vmatprep.subr.bf16.mxu0 0
    %5112 = vmatpush1.bf16.msra.mxu0 %v4999
    %5113 = vmatprep.subr.bf16.mxu0 0
    %5114 = vmatpush1.bf16.msra.mxu0 %v5000
    %5115 = vmatprep.subr.bf16.mxu0 0
    %5116 = vmatpush1.bf16.msra.mxu0 %v5001
    %5117 = vmatprep.subr.bf16.mxu0 0
    %5118 = vmatpush1.bf16.msra.mxu0 %v5002
    %5119 = vmatprep.subr.bf16.mxu0 0
    %5120 = vmatpush1.bf16.msra.mxu0 %v5003
    %5121 = vmatprep.subr.bf16.mxu0 0
    %5122 = vmatpush1.bf16.msra.mxu0 %v5004
    %5123 = vmatprep.subr.bf16.mxu0 0
    %5124 = vmatpush1.bf16.msra.mxu0 %v5005
    %5125 = vmatprep.subr.bf16.mxu0 0
    %5126 = vmatpush1.bf16.msra.mxu0 %v5006
    %5127 = vmatprep.subr.bf16.mxu0 0
    %5128 = vmatpush1.bf16.msra.mxu0 %v5007
    %5129 = vmatprep.subr.bf16.mxu0 0
    %5130 = vmatpush1.bf16.msra.mxu0 %v5008
    %5131 = vmatprep.subr.bf16.mxu0 0
    %5132 = vmatpush1.bf16.msra.mxu0 %v5009
    %5133 = vmatprep.subr.bf16.mxu0 0
    %5134 = vmatpush1.bf16.msra.mxu0 %v5010
    %5135 = vmatprep.subr.bf16.mxu0 0
    %5136 = vmatpush1.bf16.msra.mxu0 %v5011
    %5137 = vmatprep.subr.bf16.mxu0 0
    %5138 = vmatpush1.bf16.msra.mxu0 %v5012
    %5139 = vmatprep.subr.bf16.mxu0 0
    %5140 = vmatpush1.bf16.msra.mxu0 %v5013
    %5141 = vmatprep.subr.bf16.mxu0 0
    %5142 = vmatpush1.bf16.msra.mxu0 %v5014
    %5143 = vmatprep.mubr.bf16.mxu0 %v4915
    %5144 = vmatmul.mubr.bf16.gmra.mrb[0].mxu0 %v4912
    %v5145 = vpop.f32.mrb[0].mxu0
    %v5146 = vadd.f32 %v4933, %v5145
    %v5147 = vpop.f32.mrb[0].mxu0
    %v5148 = vpop.f32.mrb[0].mxu0
    %v5149 = vpop.f32.mrb[0].mxu0
    %5150 = vdwg.mxu0
    %5151 = vmatprep.subr.bf16.mxu0 0
    %5152 = vmatpush1.bf16.msra.mxu0 %v4999
    %5153 = vmatprep.subr.bf16.mxu0 0
    %5154 = vmatpush1.bf16.msra.mxu0 %v5000
    %5155 = vmatprep.subr.bf16.mxu0 0
    %5156 = vmatpush1.bf16.msra.mxu0 %v5001
    %5157 = vmatprep.subr.bf16.mxu0 0
    %5158 = vmatpush1.bf16.msra.mxu0 %v5002
    %5159 = vmatprep.subr.bf16.mxu0 0
    %5160 = vmatpush1.bf16.msra.mxu0 %v5003
    %5161 = vmatprep.subr.bf16.mxu0 0
    %5162 = vmatpush1.bf16.msra.mxu0 %v5004
    %5163 = vmatprep.subr.bf16.mxu0 0
    %5164 = vmatpush1.bf16.msra.mxu0 %v5005
    %5165 = vmatprep.subr.bf16.mxu0 0
    %5166 = vmatpush1.bf16.msra.mxu0 %v5006
    %5167 = vmatprep.subr.bf16.mxu0 0
    %5168 = vmatpush1.bf16.msra.mxu0 %v5007
    %5169 = vmatprep.subr.bf16.mxu0 0
    %5170 = vmatpush1.bf16.msra.mxu0 %v5008
    %5171 = vmatprep.subr.bf16.mxu0 0
    %5172 = vmatpush1.bf16.msra.mxu0 %v5009
    %5173 = vmatprep.subr.bf16.mxu0 0
    %5174 = vmatpush1.bf16.msra.mxu0 %v5010
    %5175 = vmatprep.subr.bf16.mxu0 0
    %5176 = vmatpush1.bf16.msra.mxu0 %v5011
    %5177 = vmatprep.subr.bf16.mxu0 0
    %5178 = vmatpush1.bf16.msra.mxu0 %v5012
    %5179 = vmatprep.subr.bf16.mxu0 0
    %5180 = vmatpush1.bf16.msra.mxu0 %v5013
    %5181 = vmatprep.subr.bf16.mxu0 0
    %5182 = vmatpush1.bf16.msra.mxu0 %v5014
    %5183 = vmatprep.mubr.bf16.mxu0 %v4927
    %5184 = vmatmul.mubr.bf16.gmra.mrb[0].mxu0 %v4915
    %v5185 = vpop.f32.mrb[0].mxu0
    %v5186 = vadd.f32 %v4933, %v5185
    %v5187 = vpop.f32.mrb[0].mxu0
    %v5188 = vpop.f32.mrb[0].mxu0
    %v5189 = vpop.f32.mrb[0].mxu0
    %5190 = vdwg.mxu0
    %vm5191 = vcmp.ge.f32.partialorder %v5066, 0.0
    %vm5192 = vcmp.ge.f32.partialorder %v5106, 0.0
    %vm5193 = vcmp.ge.f32.partialorder %v5146, 0.0
    %vm5194 = vcmp.ge.f32.partialorder %v5186, 0.0
    %v5195 = vmul.f32 %v5066, 0.01
    %v5196 = vmul.f32 %v5106, 0.01
    %v5197 = vmul.f32 %v5146, 0.01
    %v5198 = vmul.f32 %v5186, 0.01
    %v5199 = vsel %vm5191, %v5066, %v5195
    %v5200 = vsel %vm5192, %v5106, %v5196
    %v5201 = vsel %vm5193, %v5146, %v5197
    %v5202 = vsel %vm5194, %v5186, %v5198
    %v5203 = vpack.c.bf16 %v5199, %v5199
    %v5204 = vpack.c.bf16 %v5200, %v5200
    %v5205 = vpack.c.bf16 %v5201, %v5201
    %v5206 = vpack.c.bf16 %v5202, %v5202
    %v5208 = vshrl.u32 %v5203, 16
    %v5210 = vrot.slane %v5208, 7
    %v5211 = vshll.u32 %v5203, 16
    %v5213 = vor.u32 %v5210, %v5211
    %v5215 = vshrl.u32 %v5204, 16
    %v5217 = vrot.slane %v5215, 7
    %v5218 = vshll.u32 %v5204, 16
    %v5220 = vor.u32 %v5217, %v5218
    %v5222 = vshrl.u32 %v5205, 16
    %v5224 = vrot.slane %v5222, 7
    %v5225 = vshll.u32 %v5205, 16
    %v5227 = vor.u32 %v5224, %v5225
    %v5229 = vshrl.u32 %v5206, 16
    %v5231 = vrot.slane %v5229, 7
    %v5232 = vshll.u32 %v5206, 16
    %v5234 = vor.u32 %v5231, %v5232
    %vm5239 = vcmask 1040384
    %vm5240 = vsmask.f32 256
    %vm5241 = vmand %vm5239, %vm5240
    %v5242 = vsel %vm5241, 0, %v5213
    %v5243 = vsel %vm5241, 0, %v5220
    %v5244 = vsel %vm5241, 0, %v5227
    %v5245 = vsel %vm5241, 0, %v5234
    %vm5246 = vcmask 1041408
    %vm5247 = vsmask.f32 1280
    %vm5248 = vmand %vm5246, %vm5247
    %v5249 = vsel %vm5248, %v5242, 0
    %v5250 = vsel %vm5248, %v5243, 0
    %v5251 = vsel %vm5248, %v5244, 0
    %v5252 = vsel %vm5248, %v5245, 0
    %v5254 = vshrl.u32 %v5249, 16
    %v5256 = vshll.u32 %v5249, 16
    %v5258 = vrot.slane %v5256, 1
    %v5259 = vor.u32 %v5254, %v5258
    %v5261 = vshrl.u32 %v5251, 16
    %v5263 = vshll.u32 %v5251, 16
    %v5265 = vrot.slane %v5263, 1
    %v5266 = vor.u32 %v5261, %v5265
    %5267 = vrot.lane.b32.xlu0 %v5259, 32
    %v5268 = vpop.permute.xlu0 %5267
    %5269 = vrot.lane.b32.xlu0 %v5266, 32
    %v5270 = vpop.permute.xlu0 %5269
    %v5273 = vrot.slane 0, 1
    %v5274 = vrot.slane %v5249, 1
    %v5275 = vrot.slane %v5251, 1
    %5276 = vrot.lane.b32.xlu0 %v5273, 64
    %v5277 = vpop.permute.xlu0 %5276
    %5278 = vrot.lane.b32.xlu0 %v5274, 64
    %v5279 = vpop.permute.xlu0 %5278
    %5280 = vrot.lane.b32.xlu0 %v5275, 64
    %v5281 = vpop.permute.xlu0 %5280
    %5284 = vrot.lane.b32.xlu0 %v5249, 96
    %v5285 = vpop.permute.xlu0 %5284
    %5286 = vrot.lane.b32.xlu0 %v5250, 96
    %v5287 = vpop.permute.xlu0 %5286
    %5288 = vrot.lane.b32.xlu0 %v5251, 96
    %v5289 = vpop.permute.xlu0 %5288
    %5290 = vrot.lane.b32.xlu0 %v5252, 96
    %v5291 = vpop.permute.xlu0 %5290
    %v5293 = vshrl.u32 %v5250, 16
    %v5295 = vshll.u32 %v5250, 16
    %v5297 = vrot.slane %v5295, 1
    %v5298 = vor.u32 %v5293, %v5297
    %v5300 = vshrl.u32 %v5252, 16
    %v5302 = vshll.u32 %v5252, 16
    %v5304 = vrot.slane %v5302, 1
    %v5305 = vor.u32 %v5300, %v5304
    %v5306 = vrot.slane %v5250, 1
    %v5307 = vrot.slane %v5252, 1
    %5308 = vrot.lane.b32.xlu0 %v5274, 32
    %v5309 = vpop.permute.xlu0 %5308
    %5310 = vrot.lane.b32.xlu0 %v5306, 32
    %v5311 = vpop.permute.xlu0 %5310
    %5312 = vrot.lane.b32.xlu0 %v5275, 32
    %v5313 = vpop.permute.xlu0 %5312
    %5314 = vrot.lane.b32.xlu0 %v5307, 32
    %v5315 = vpop.permute.xlu0 %5314
    %5316 = vrot.lane.b32.xlu0 %v5250, 64
    %v5317 = vpop.permute.xlu0 %5316
    %5318 = vrot.lane.b32.xlu0 %v5252, 64
    %v5319 = vpop.permute.xlu0 %5318
    %5320 = vrot.lane.b32.xlu0 %v5298, 96
    %v5321 = vpop.permute.xlu0 %5320
    %5322 = vrot.lane.b32.xlu0 %v5305, 96
    %v5323 = vpop.permute.xlu0 %5322
    %v5325 = vsel %vm3533, %v5249, %v5268
    %v5327 = vsel %vm3533, %v5251, %v5270
    %v5329 = vsel %vm3566, %v4892, %v5277
    %v5331 = vsel %vm3566, %v5325, %v5279
    %v5333 = vsel %vm3566, %v5327, %v5281
    %v5335 = vsel %vm3600, %v5329, %v5285
    %v5338 = vsel %vm3600, %v5331, %v5287
    %v5341 = vsel %vm3600, %v5329, %v5289
    %v5344 = vsel %vm3600, %v5333, %v5291
    %v5348 = vsel %vm3533, %v5259, %v5309
    %v5351 = vsel %vm3533, %v5298, %v5311
    %v5354 = vsel %vm3533, %v5266, %v5313
    %v5357 = vsel %vm3533, %v5305, %v5315
    %v5359 = vsel %vm3566, %v5348, %v5317
    %v5360 = vsel %vm3566, %v5351, %v4888
    %v5362 = vsel %vm3566, %v5354, %v5319
    %v5363 = vsel %vm3566, %v5357, %v4888
    %v5365 = vsel %vm3600, %v5359, %v5321
    %v5367 = vsel %vm3600, %v5360, %v4890
    %v5370 = vsel %vm3600, %v5362, %v5323
    %v5372 = vsel %vm3600, %v5363, %v4890
    %v5374 = vld [vmem:[%s11] sm:$0xf]
    %v5375 = vld [vmem:[%s11 + $0x4] sm:$0xf]
    %v5376 = vld [vmem:[%s11 + $0x8] sm:$0xf]
    %v5377 = vld [vmem:[%s11 + $0xc] sm:$0xf]
    %v5378 = vld [vmem:[%s11 + $0x10] sm:$0xf]
    %v5379 = vld [vmem:[%s11 + $0x14] sm:$0xf]
    %v5380 = vld [vmem:[%s11 + $0x18] sm:$0xf]
    %v5381 = vld [vmem:[%s11 + $0x1c] sm:$0xf]
    %v5382 = vld [vmem:[%s11 + $0x20] sm:$0xf]
    %v5383 = vld [vmem:[%s11 + $0x24] sm:$0xf]
    %v5384 = vld [vmem:[%s11 + $0x28] sm:$0xf]
    %v5385 = vld [vmem:[%s11 + $0x2c] sm:$0xf]
    %v5386 = vld [vmem:[%s11 + $0x30] sm:$0xf]
    %v5387 = vld [vmem:[%s11 + $0x34] sm:$0xf]
    %v5388 = vld [vmem:[%s11 + $0x38] sm:$0xf]
    %v5389 = vld [vmem:[%s11 + $0x3c] sm:$0xf]
    %v5390 = vld [vmem:[%s11 + $0x40] sm:$0xf]
    %v5391 = vld [vmem:[%s11 + $0x44] sm:$0xf]
    %v5392 = vld [vmem:[%s11 + $0x48] sm:$0xf]
    %v5393 = vld [vmem:[%s11 + $0x4c] sm:$0xf]
    %v5394 = vld [vmem:[%s11 + $0x50] sm:$0xf]
    %v5395 = vld [vmem:[%s11 + $0x54] sm:$0xf]
    %v5396 = vld [vmem:[%s11 + $0x58] sm:$0xf]
    %v5397 = vld [vmem:[%s11 + $0x5c] sm:$0xf]
    %v5398 = vld [vmem:[%s11 + $0x60] sm:$0xf]
    %v5399 = vld [vmem:[%s11 + $0x64] sm:$0xf]
    %v5400 = vld [vmem:[%s11 + $0x68] sm:$0xf]
    %v5401 = vld [vmem:[%s11 + $0x6c] sm:$0xf]
    %v5402 = vld [vmem:[%s11 + $0x70] sm:$0xf]
    %v5403 = vld [vmem:[%s11 + $0x74] sm:$0xf]
    %v5404 = vld [vmem:[%s11 + $0x78] sm:$0xf]
    %v5405 = vld [vmem:[%s11 + $0x7c] sm:$0xf]
    %v5406 = vld [vmem:[%s11 + $0x80] sm:$0xf]
    %v5407 = vld [vmem:[%s11 + $0x84] sm:$0xf]
    %v5408 = vld [vmem:[%s11 + $0x88] sm:$0xf]
    %v5409 = vld [vmem:[%s11 + $0x8c] sm:$0xf]
    %v5446 = vunpack.c.l.b16 %v5374
    %v5447 = vunpack.c.l.b16 %v5375
    %v5448 = vunpack.c.l.b16 %v5376
    %v5449 = vunpack.c.l.b16 %v5377
    %v5450 = vunpack.c.l.b16 %v5378
    %v5451 = vunpack.c.l.b16 %v5379
    %v5452 = vunpack.c.l.b16 %v5380
    %v5453 = vunpack.c.l.b16 %v5381
    %v5454 = vunpack.c.l.b16 %v5382
    %v5455 = vunpack.c.l.b16 %v5383
    %v5456 = vunpack.c.l.b16 %v5384
    %v5457 = vunpack.c.l.b16 %v5385
    %v5458 = vunpack.c.l.b16 %v5386
    %v5459 = vunpack.c.l.b16 %v5387
    %v5460 = vunpack.c.l.b16 %v5388
    %v5461 = vunpack.c.l.b16 %v5389
    %v5462 = vunpack.c.l.b16 %v5390
    %v5463 = vunpack.c.l.b16 %v5391
    %v5464 = vunpack.c.l.b16 %v5392
    %v5465 = vunpack.c.l.b16 %v5393
    %v5466 = vunpack.c.l.b16 %v5394
    %v5467 = vunpack.c.l.b16 %v5395
    %v5468 = vunpack.c.l.b16 %v5396
    %v5469 = vunpack.c.l.b16 %v5397
    %v5470 = vunpack.c.l.b16 %v5398
    %v5471 = vunpack.c.l.b16 %v5399
    %v5472 = vunpack.c.l.b16 %v5400
    %v5473 = vunpack.c.l.b16 %v5401
    %v5474 = vunpack.c.l.b16 %v5402
    %v5475 = vunpack.c.l.b16 %v5403
    %v5476 = vunpack.c.l.b16 %v5404
    %v5477 = vunpack.c.l.b16 %v5405
    %v5478 = vunpack.c.l.b16 %v5406
    %v5479 = vunpack.c.l.b16 %v5407
    %v5480 = vunpack.c.l.b16 %v5408
    %v5481 = vunpack.c.l.b16 %v5409
    %v5482 = vpack.c.b16 %v5447, %v5446
    %v5483 = vpack.c.b16 %v5449, %v5448
    %v5484 = vpack.c.b16 %v5451, %v5450
    %v5485 = vpack.c.b16 %v5453, %v5452
    %v5486 = vpack.c.b16 %v5455, %v5454
    %v5487 = vpack.c.b16 %v5457, %v5456
    %v5488 = vpack.c.b16 %v5459, %v5458
    %v5489 = vpack.c.b16 %v5461, %v5460
    %v5490 = vpack.c.b16 %v5463, %v5462
    %v5491 = vpack.c.b16 %v5465, %v5464
    %v5492 = vpack.c.b16 %v5467, %v5466
    %v5493 = vpack.c.b16 %v5469, %v5468
    %v5494 = vpack.c.b16 %v5471, %v5470
    %v5495 = vpack.c.b16 %v5473, %v5472
    %v5496 = vpack.c.b16 %v5475, %v5474
    %v5497 = vpack.c.b16 %v5477, %v5476
    %v5498 = vpack.c.b16 %v5479, %v5478
    %v5499 = vpack.c.b16 %v5481, %v5480
    %v5519 = vsel %vm3533, %v5306, 0
    %5521 = vmatprep.subr.bf16.mxu0 0
    %5522 = vmatpush1.bf16.msra.mxu0 %v5482
    %5523 = vmatprep.subr.bf16.mxu0 0
    %5524 = vmatpush1.bf16.msra.mxu0 %v5483
    %5525 = vmatprep.subr.bf16.mxu0 0
    %5526 = vmatpush1.bf16.msra.mxu0 %v5484
    %5527 = vmatprep.subr.bf16.mxu0 0
    %5528 = vmatpush1.bf16.msra.mxu0 %v5485
    %5529 = vmatprep.subr.bf16.mxu0 0
    %5530 = vmatpush1.bf16.msra.mxu0 %v5486
    %5531 = vmatprep.subr.bf16.mxu0 0
    %5532 = vmatpush1.bf16.msra.mxu0 %v5487
    %5533 = vmatprep.subr.bf16.mxu0 0
    %5534 = vmatpush1.bf16.msra.mxu0 %v5488
    %5535 = vmatprep.subr.bf16.mxu0 0
    %5536 = vmatpush1.bf16.msra.mxu0 %v5489
    %5537 = vmatprep.subr.bf16.mxu0 0
    %5538 = vmatpush1.bf16.msra.mxu0 %v5490
    %5539 = vmatprep.subr.bf16.mxu0 0
    %5540 = vmatpush1.bf16.msra.mxu0 %v5491
    %5541 = vmatprep.subr.bf16.mxu0 0
    %5542 = vmatpush1.bf16.msra.mxu0 %v5492
    %5543 = vmatprep.subr.bf16.mxu0 0
    %5544 = vmatpush1.bf16.msra.mxu0 %v5493
    %5545 = vmatprep.subr.bf16.mxu0 0
    %5546 = vmatpush1.bf16.msra.mxu0 %v5494
    %5547 = vmatprep.subr.bf16.mxu0 0
    %5548 = vmatpush1.bf16.msra.mxu0 %v5495
    %5549 = vmatprep.subr.bf16.mxu0 0
    %5550 = vmatpush1.bf16.msra.mxu0 %v5496
    %5551 = vmatprep.subr.bf16.mxu0 0
    %5552 = vmatpush1.bf16.msra.mxu0 %v5497
    %5553 = vmatprep.mubr.bf16.mxu0 %v5365
    %5554 = vmatmul.mubr.bf16.gmra.mrb[0].mxu0 %v5335
    %v5555 = vpop.f32.mrb[0].mxu0
    %v5556 = vadd.f32 0.0, %v5555
    %v5557 = vpop.f32.mrb[0].mxu0
    %v5558 = vpop.f32.mrb[0].mxu0
    %v5559 = vpop.f32.mrb[0].mxu0
    %5560 = vdwg.mxu0
    %5561 = vmatprep.subr.bf16.mxu0 0
    %5562 = vmatpush1.bf16.msra.mxu0 %v5498
    %5563 = vmatprep.subr.bf16.mxu0 0
    %5564 = vmatpush1.bf16.msra.mxu0 %v5499
    %5565 = vmatprep.subr.bf16.mxu0 0
    %5566 = vmatpush1.bf16.msra.mxu0 0
    %5567 = vmatprep.subr.bf16.mxu0 0
    %5568 = vmatpush1.bf16.msra.mxu0 0
    %5569 = vmatprep.subr.bf16.mxu0 0
    %5570 = vmatpush1.bf16.msra.mxu0 0
    %5571 = vmatprep.subr.bf16.mxu0 0
    %5572 = vmatpush1.bf16.msra.mxu0 0
    %5573 = vmatprep.subr.bf16.mxu0 0
    %5574 = vmatpush1.bf16.msra.mxu0 0
    %5575 = vmatprep.subr.bf16.mxu0 0
    %5576 = vmatpush1.bf16.msra.mxu0 0
    %5577 = vmatprep.subr.bf16.mxu0 0
    %5578 = vmatpush1.bf16.msra.mxu0 0
    %5579 = vmatprep.subr.bf16.mxu0 0
    %5580 = vmatpush1.bf16.msra.mxu0 0
    %5581 = vmatprep.subr.bf16.mxu0 0
    %5582 = vmatpush1.bf16.msra.mxu0 0
    %5583 = vmatprep.subr.bf16.mxu0 0
    %5584 = vmatpush1.bf16.msra.mxu0 0
    %5585 = vmatprep.subr.bf16.mxu0 0
    %5586 = vmatpush1.bf16.msra.mxu0 0
    %5587 = vmatprep.subr.bf16.mxu0 0
    %5588 = vmatpush1.bf16.msra.mxu0 0
    %5589 = vmatprep.subr.bf16.mxu0 0
    %5590 = vmatpush1.bf16.msra.mxu0 0
    %5591 = vmatprep.subr.bf16.mxu0 0
    %5592 = vmatpush1.bf16.msra.mxu0 0
    %5593 = vmatprep.mubr.bf16.mxu0 0
    %5594 = vmatmul.mubr.bf16.gmra.mrb[0].mxu0 %v5519
    %v5595 = vpop.f32.mrb[0].mxu0
    %v5596 = vadd.f32 %v5556, %v5595
    %v5597 = vpop.f32.mrb[0].mxu0
    %v5598 = vpop.f32.mrb[0].mxu0
    %v5599 = vpop.f32.mrb[0].mxu0
    %5600 = vdwg.mxu0
    %v5602 = vsel %vm3533, %v5273, 0
    %5604 = vmatprep.subr.bf16.mxu0 0
    %5605 = vmatpush1.bf16.msra.mxu0 %v5482
    %5606 = vmatprep.subr.bf16.mxu0 0
    %5607 = vmatpush1.bf16.msra.mxu0 %v5483
    %5608 = vmatprep.subr.bf16.mxu0 0
    %5609 = vmatpush1.bf16.msra.mxu0 %v5484
    %5610 = vmatprep.subr.bf16.mxu0 0
    %5611 = vmatpush1.bf16.msra.mxu0 %v5485
    %5612 = vmatprep.subr.bf16.mxu0 0
    %5613 = vmatpush1.bf16.msra.mxu0 %v5486
    %5614 = vmatprep.subr.bf16.mxu0 0
    %5615 = vmatpush1.bf16.msra.mxu0 %v5487
    %5616 = vmatprep.subr.bf16.mxu0 0
    %5617 = vmatpush1.bf16.msra.mxu0 %v5488
    %5618 = vmatprep.subr.bf16.mxu0 0
    %5619 = vmatpush1.bf16.msra.mxu0 %v5489
    %5620 = vmatprep.subr.bf16.mxu0 0
    %5621 = vmatpush1.bf16.msra.mxu0 %v5490
    %5622 = vmatprep.subr.bf16.mxu0 0
    %5623 = vmatpush1.bf16.msra.mxu0 %v5491
    %5624 = vmatprep.subr.bf16.mxu0 0
    %5625 = vmatpush1.bf16.msra.mxu0 %v5492
    %5626 = vmatprep.subr.bf16.mxu0 0
    %5627 = vmatpush1.bf16.msra.mxu0 %v5493
    %5628 = vmatprep.subr.bf16.mxu0 0
    %5629 = vmatpush1.bf16.msra.mxu0 %v5494
    %5630 = vmatprep.subr.bf16.mxu0 0
    %5631 = vmatpush1.bf16.msra.mxu0 %v5495
    %5632 = vmatprep.subr.bf16.mxu0 0
    %5633 = vmatpush1.bf16.msra.mxu0 %v5496
    %5634 = vmatprep.subr.bf16.mxu0 0
    %5635 = vmatpush1.bf16.msra.mxu0 %v5497
    %5636 = vmatprep.mubr.bf16.mxu0 %v5367
    %5637 = vmatmul.mubr.bf16.gmra.mrb[0].mxu0 %v5338
    %v5638 = vpop.f32.mrb[0].mxu0
    %v5639 = vadd.f32 0.0, %v5638
    %v5640 = vpop.f32.mrb[0].mxu0
    %v5641 = vpop.f32.mrb[0].mxu0
    %v5642 = vpop.f32.mrb[0].mxu0
    %5643 = vdwg.mxu0
    %5644 = vmatprep.subr.bf16.mxu0 0
    %5645 = vmatpush1.bf16.msra.mxu0 %v5498
    %5646 = vmatprep.subr.bf16.mxu0 0
    %5647 = vmatpush1.bf16.msra.mxu0 %v5499
    %5648 = vmatprep.subr.bf16.mxu0 0
    %5649 = vmatpush1.bf16.msra.mxu0 0
    %5650 = vmatprep.subr.bf16.mxu0 0
    %5651 = vmatpush1.bf16.msra.mxu0 0
    %5652 = vmatprep.subr.bf16.mxu0 0
    %5653 = vmatpush1.bf16.msra.mxu0 0
    %5654 = vmatprep.subr.bf16.mxu0 0
    %5655 = vmatpush1.bf16.msra.mxu0 0
    %5656 = vmatprep.subr.bf16.mxu0 0
    %5657 = vmatpush1.bf16.msra.mxu0 0
    %5658 = vmatprep.subr.bf16.mxu0 0
    %5659 = vmatpush1.bf16.msra.mxu0 0
    %5660 = vmatprep.subr.bf16.mxu0 0
    %5661 = vmatpush1.bf16.msra.mxu0 0
    %5662 = vmatprep.subr.bf16.mxu0 0
    %5663 = vmatpush1.bf16.msra.mxu0 0
    %5664 = vmatprep.subr.bf16.mxu0 0
    %5665 = vmatpush1.bf16.msra.mxu0 0
    %5666 = vmatprep.subr.bf16.mxu0 0
    %5667 = vmatpush1.bf16.msra.mxu0 0
    %5668 = vmatprep.subr.bf16.mxu0 0
    %5669 = vmatpush1.bf16.msra.mxu0 0
    %5670 = vmatprep.subr.bf16.mxu0 0
    %5671 = vmatpush1.bf16.msra.mxu0 0
    %5672 = vmatprep.subr.bf16.mxu0 0
    %5673 = vmatpush1.bf16.msra.mxu0 0
    %5674 = vmatprep.subr.bf16.mxu0 0
    %5675 = vmatpush1.bf16.msra.mxu0 0
    %5676 = vmatprep.mubr.bf16.mxu0 0
    %5677 = vmatmul.mubr.bf16.gmra.mrb[0].mxu0 %v5602
    %v5678 = vpop.f32.mrb[0].mxu0
    %v5679 = vadd.f32 %v5639, %v5678
    %v5680 = vpop.f32.mrb[0].mxu0
    %v5681 = vpop.f32.mrb[0].mxu0
    %v5682 = vpop.f32.mrb[0].mxu0
    %5683 = vdwg.mxu0
    %v5685 = vsel %vm3533, %v5307, 0
    %5687 = vmatprep.subr.bf16.mxu0 0
    %5688 = vmatpush1.bf16.msra.mxu0 %v5482
    %5689 = vmatprep.subr.bf16.mxu0 0
    %5690 = vmatpush1.bf16.msra.mxu0 %v5483
    %5691 = vmatprep.subr.bf16.mxu0 0
    %5692 = vmatpush1.bf16.msra.mxu0 %v5484
    %5693 = vmatprep.subr.bf16.mxu0 0
    %5694 = vmatpush1.bf16.msra.mxu0 %v5485
    %5695 = vmatprep.subr.bf16.mxu0 0
    %5696 = vmatpush1.bf16.msra.mxu0 %v5486
    %5697 = vmatprep.subr.bf16.mxu0 0
    %5698 = vmatpush1.bf16.msra.mxu0 %v5487
    %5699 = vmatprep.subr.bf16.mxu0 0
    %5700 = vmatpush1.bf16.msra.mxu0 %v5488
    %5701 = vmatprep.subr.bf16.mxu0 0
    %5702 = vmatpush1.bf16.msra.mxu0 %v5489
    %5703 = vmatprep.subr.bf16.mxu0 0
    %5704 = vmatpush1.bf16.msra.mxu0 %v5490
    %5705 = vmatprep.subr.bf16.mxu0 0
    %5706 = vmatpush1.bf16.msra.mxu0 %v5491
    %5707 = vmatprep.subr.bf16.mxu0 0
    %5708 = vmatpush1.bf16.msra.mxu0 %v5492
    %5709 = vmatprep.subr.bf16.mxu0 0
    %5710 = vmatpush1.bf16.msra.mxu0 %v5493
    %5711 = vmatprep.subr.bf16.mxu0 0
    %5712 = vmatpush1.bf16.msra.mxu0 %v5494
    %5713 = vmatprep.subr.bf16.mxu0 0
    %5714 = vmatpush1.bf16.msra.mxu0 %v5495
    %5715 = vmatprep.subr.bf16.mxu0 0
    %5716 = vmatpush1.bf16.msra.mxu0 %v5496
    %5717 = vmatprep.subr.bf16.mxu0 0
    %5718 = vmatpush1.bf16.msra.mxu0 %v5497
    %5719 = vmatprep.mubr.bf16.mxu0 %v5370
    %5720 = vmatmul.mubr.bf16.gmra.mrb[0].mxu0 %v5341
    %v5721 = vpop.f32.mrb[0].mxu0
    %v5722 = vadd.f32 0.0, %v5721
    %v5723 = vpop.f32.mrb[0].mxu0
    %v5724 = vpop.f32.mrb[0].mxu0
    %v5725 = vpop.f32.mrb[0].mxu0
    %5726 = vdwg.mxu0
    %5727 = vmatprep.subr.bf16.mxu0 0
    %5728 = vmatpush1.bf16.msra.mxu0 %v5498
    %5729 = vmatprep.subr.bf16.mxu0 0
    %5730 = vmatpush1.bf16.msra.mxu0 %v5499
    %5731 = vmatprep.subr.bf16.mxu0 0
    %5732 = vmatpush1.bf16.msra.mxu0 0
    %5733 = vmatprep.subr.bf16.mxu0 0
    %5734 = vmatpush1.bf16.msra.mxu0 0
    %5735 = vmatprep.subr.bf16.mxu0 0
    %5736 = vmatpush1.bf16.msra.mxu0 0
    %5737 = vmatprep.subr.bf16.mxu0 0
    %5738 = vmatpush1.bf16.msra.mxu0 0
    %5739 = vmatprep.subr.bf16.mxu0 0
    %5740 = vmatpush1.bf16.msra.mxu0 0
    %5741 = vmatprep.subr.bf16.mxu0 0
    %5742 = vmatpush1.bf16.msra.mxu0 0
    %5743 = vmatprep.subr.bf16.mxu0 0
    %5744 = vmatpush1.bf16.msra.mxu0 0
    %5745 = vmatprep.subr.bf16.mxu0 0
    %5746 = vmatpush1.bf16.msra.mxu0 0
    %5747 = vmatprep.subr.bf16.mxu0 0
    %5748 = vmatpush1.bf16.msra.mxu0 0
    %5749 = vmatprep.subr.bf16.mxu0 0
    %5750 = vmatpush1.bf16.msra.mxu0 0
    %5751 = vmatprep.subr.bf16.mxu0 0
    %5752 = vmatpush1.bf16.msra.mxu0 0
    %5753 = vmatprep.subr.bf16.mxu0 0
    %5754 = vmatpush1.bf16.msra.mxu0 0
    %5755 = vmatprep.subr.bf16.mxu0 0
    %5756 = vmatpush1.bf16.msra.mxu0 0
    %5757 = vmatprep.subr.bf16.mxu0 0
    %5758 = vmatpush1.bf16.msra.mxu0 0
    %5759 = vmatprep.mubr.bf16.mxu0 0
    %5760 = vmatmul.mubr.bf16.gmra.mrb[0].mxu0 %v5685
    %v5761 = vpop.f32.mrb[0].mxu0
    %v5762 = vadd.f32 %v5722, %v5761
    %v5763 = vpop.f32.mrb[0].mxu0
    %v5764 = vpop.f32.mrb[0].mxu0
    %v5765 = vpop.f32.mrb[0].mxu0
    %5766 = vdwg.mxu0
    %5767 = vmatprep.subr.bf16.mxu0 0
    %5768 = vmatpush1.bf16.msra.mxu0 %v5482
    %5769 = vmatprep.subr.bf16.mxu0 0
    %5770 = vmatpush1.bf16.msra.mxu0 %v5483
    %5771 = vmatprep.subr.bf16.mxu0 0
    %5772 = vmatpush1.bf16.msra.mxu0 %v5484
    %5773 = vmatprep.subr.bf16.mxu0 0
    %5774 = vmatpush1.bf16.msra.mxu0 %v5485
    %5775 = vmatprep.subr.bf16.mxu0 0
    %5776 = vmatpush1.bf16.msra.mxu0 %v5486
    %5777 = vmatprep.subr.bf16.mxu0 0
    %5778 = vmatpush1.bf16.msra.mxu0 %v5487
    %5779 = vmatprep.subr.bf16.mxu0 0
    %5780 = vmatpush1.bf16.msra.mxu0 %v5488
    %5781 = vmatprep.subr.bf16.mxu0 0
    %5782 = vmatpush1.bf16.msra.mxu0 %v5489
    %5783 = vmatprep.subr.bf16.mxu0 0
    %5784 = vmatpush1.bf16.msra.mxu0 %v5490
    %5785 = vmatprep.subr.bf16.mxu0 0
    %5786 = vmatpush1.bf16.msra.mxu0 %v5491
    %5787 = vmatprep.subr.bf16.mxu0 0
    %5788 = vmatpush1.bf16.msra.mxu0 %v5492
    %5789 = vmatprep.subr.bf16.mxu0 0
    %5790 = vmatpush1.bf16.msra.mxu0 %v5493
    %5791 = vmatprep.subr.bf16.mxu0 0
    %5792 = vmatpush1.bf16.msra.mxu0 %v5494
    %5793 = vmatprep.subr.bf16.mxu0 0
    %5794 = vmatpush1.bf16.msra.mxu0 %v5495
    %5795 = vmatprep.subr.bf16.mxu0 0
    %5796 = vmatpush1.bf16.msra.mxu0 %v5496
    %5797 = vmatprep.subr.bf16.mxu0 0
    %5798 = vmatpush1.bf16.msra.mxu0 %v5497
    %5799 = vmatprep.mubr.bf16.mxu0 %v5372
    %5800 = vmatmul.mubr.bf16.gmra.mrb[0].mxu0 %v5344
    %v5801 = vpop.f32.mrb[0].mxu0
    %v5802 = vadd.f32 0.0, %v5801
    %v5803 = vpop.f32.mrb[0].mxu0
    %v5804 = vpop.f32.mrb[0].mxu0
    %v5805 = vpop.f32.mrb[0].mxu0
    %5806 = vdwg.mxu0
    %5807 = vmatprep.subr.bf16.mxu0 0
    %5808 = vmatpush1.bf16.msra.mxu0 %v5498
    %5809 = vmatprep.subr.bf16.mxu0 0
    %5810 = vmatpush1.bf16.msra.mxu0 %v5499
    %5811 = vmatprep.subr.bf16.mxu0 0
    %5812 = vmatpush1.bf16.msra.mxu0 0
    %5813 = vmatprep.subr.bf16.mxu0 0
    %5814 = vmatpush1.bf16.msra.mxu0 0
    %5815 = vmatprep.subr.bf16.mxu0 0
    %5816 = vmatpush1.bf16.msra.mxu0 0
    %5817 = vmatprep.subr.bf16.mxu0 0
    %5818 = vmatpush1.bf16.msra.mxu0 0
    %5819 = vmatprep.subr.bf16.mxu0 0
    %5820 = vmatpush1.bf16.msra.mxu0 0
    %5821 = vmatprep.subr.bf16.mxu0 0
    %5822 = vmatpush1.bf16.msra.mxu0 0
    %5823 = vmatprep.subr.bf16.mxu0 0
    %5824 = vmatpush1.bf16.msra.mxu0 0
    %5825 = vmatprep.subr.bf16.mxu0 0
    %5826 = vmatpush1.bf16.msra.mxu0 0
    %5827 = vmatprep.subr.bf16.mxu0 0
    %5828 = vmatpush1.bf16.msra.mxu0 0
    %5829 = vmatprep.subr.bf16.mxu0 0
    %5830 = vmatpush1.bf16.msra.mxu0 0
    %5831 = vmatprep.subr.bf16.mxu0 0
    %5832 = vmatpush1.bf16.msra.mxu0 0
    %5833 = vmatprep.subr.bf16.mxu0 0
    %5834 = vmatpush1.bf16.msra.mxu0 0
    %5835 = vmatprep.subr.bf16.mxu0 0
    %5836 = vmatpush1.bf16.msra.mxu0 0
    %5837 = vmatprep.subr.bf16.mxu0 0
    %5838 = vmatpush1.bf16.msra.mxu0 0
    %5839 = vmatprep.mubr.bf16.mxu0 0
    %5840 = vmatmul.mubr.bf16.gmra.mrb[0].mxu0 %v5602
    %v5841 = vpop.f32.mrb[0].mxu0
    %v5842 = vadd.f32 %v5802, %v5841
    %v5843 = vpop.f32.mrb[0].mxu0
    %v5844 = vpop.f32.mrb[0].mxu0
    %v5845 = vpop.f32.mrb[0].mxu0
    %5846 = vdwg.mxu0
    %vm5847 = vcmask 1024
    %5848 = vst.msk [vmem:[%s13] sm:$0x3] %vm5847, %v5596
    %5849 = vst.msk [vmem:[%s13 + $0x2] sm:$0x3] %vm5847, %v5679
    %5850 = vst.msk [vmem:[%s13 + $0x4] sm:$0x3] %vm5847, %v5762
    %5851 = vst.msk [vmem:[%s13 + $0x6] sm:$0x3] %vm5847, %v5842
    %v5854 = vunpack.c.l.b16 %v5203
    %v5855 = vunpack.c.l.b16 %v5205
    %v5856 = vrot.slane %v5855, 7
    %vm5857 = vcmask 1041409
    %v5858 = vsel %vm5857, %v5856, %v5854
    %v5859 = vpack.c.b16 %v5858, %v5858
    %v5860 = vrot.slane %v5854, 1
    %v5861 = vsel %vm5857, %v5855, %v5860
    %v5862 = vpack.c.b16 %v5861, %v5861
    %5863 = vrot.lane.b32.xlu0 %v5862, 32
    %v5864 = vpop.permute.xlu0 %5863
    %v5867 = vunpack.c.l.b16 %v5204
    %v5868 = vunpack.c.l.b16 %v5206
    %v5869 = vrot.slane %v5868, 7
    %v5870 = vsel %vm5857, %v5869, %v5867
    %v5871 = vpack.c.b16 %v5870, %v5870
    %5872 = vrot.lane.b32.xlu0 %v5871, 64
    %v5873 = vpop.permute.xlu0 %5872
    %v5874 = vrot.slane %v5867, 1
    %v5875 = vsel %vm5857, %v5868, %v5874
    %v5876 = vpack.c.b16 %v5875, %v5875
    %5877 = vrot.lane.b32.xlu0 %v5876, 96
    %v5878 = vpop.permute.xlu0 %5877
    %v5881 = vsel %vm3533, %v5859, %v5864
    %v5883 = vsel %vm3566, %v5881, %v5873
    %v5885 = vsel %vm3600, %v5883, %v5878
    %v5887 = vld [vmem:[%s12] sm:$0xf]
    %v5888 = vld [vmem:[%s12 + $0x4] sm:$0xf]
    %v5889 = vld [vmem:[%s12 + $0x8] sm:$0xf]
    %v5890 = vld [vmem:[%s12 + $0xc] sm:$0xf]
    %v5891 = vld [vmem:[%s12 + $0x10] sm:$0xf]
    %v5892 = vld [vmem:[%s12 + $0x14] sm:$0xf]
    %v5893 = vld [vmem:[%s12 + $0x18] sm:$0xf]
    %v5894 = vld [vmem:[%s12 + $0x1c] sm:$0xf]
    %v5895 = vld [vmem:[%s12 + $0x20] sm:$0xf]
    %v5896 = vld [vmem:[%s12 + $0x24] sm:$0xf]
    %v5897 = vld [vmem:[%s12 + $0x28] sm:$0xf]
    %v5898 = vld [vmem:[%s12 + $0x2c] sm:$0xf]
    %v5899 = vld [vmem:[%s12 + $0x30] sm:$0xf]
    %v5900 = vld [vmem:[%s12 + $0x34] sm:$0xf]
    %v5901 = vld [vmem:[%s12 + $0x38] sm:$0xf]
    %v5902 = vld [vmem:[%s12 + $0x3c] sm:$0xf]
    %v5919 = vunpack.c.l.b16 %v5887
    %v5920 = vunpack.c.l.b16 %v5888
    %v5921 = vunpack.c.l.b16 %v5889
    %v5922 = vunpack.c.l.b16 %v5890
    %v5923 = vunpack.c.l.b16 %v5891
    %v5924 = vunpack.c.l.b16 %v5892
    %v5925 = vunpack.c.l.b16 %v5893
    %v5926 = vunpack.c.l.b16 %v5894
    %v5927 = vunpack.c.l.b16 %v5895
    %v5928 = vunpack.c.l.b16 %v5896
    %v5929 = vunpack.c.l.b16 %v5897
    %v5930 = vunpack.c.l.b16 %v5898
    %v5931 = vunpack.c.l.b16 %v5899
    %v5932 = vunpack.c.l.b16 %v5900
    %v5933 = vunpack.c.l.b16 %v5901
    %v5934 = vunpack.c.l.b16 %v5902
    %v5935 = vpack.c.b16 %v5920, %v5919
    %v5936 = vpack.c.b16 %v5922, %v5921
    %v5937 = vpack.c.b16 %v5924, %v5923
    %v5938 = vpack.c.b16 %v5926, %v5925
    %v5939 = vpack.c.b16 %v5928, %v5927
    %v5940 = vpack.c.b16 %v5930, %v5929
    %v5941 = vpack.c.b16 %v5932, %v5931
    %v5942 = vpack.c.b16 %v5934, %v5933
    %5951 = vmatprep.subr.bf16.mxu0 0
    %5952 = vmatpush1.bf16.msra.mxu0 %v5935
    %5953 = vmatprep.subr.bf16.mxu0 0
    %5954 = vmatpush1.bf16.msra.mxu0 %v5936
    %5955 = vmatprep.subr.bf16.mxu0 0
    %5956 = vmatpush1.bf16.msra.mxu0 %v5937
    %5957 = vmatprep.subr.bf16.mxu0 0
    %5958 = vmatpush1.bf16.msra.mxu0 %v5938
    %5959 = vmatprep.subr.bf16.mxu0 0
    %5960 = vmatpush1.bf16.msra.mxu0 %v5939
    %5961 = vmatprep.subr.bf16.mxu0 0
    %5962 = vmatpush1.bf16.msra.mxu0 %v5940
    %5963 = vmatprep.subr.bf16.mxu0 0
    %5964 = vmatpush1.bf16.msra.mxu0 %v5941
    %5965 = vmatprep.subr.bf16.mxu0 0
    %5966 = vmatpush1.bf16.msra.mxu0 %v5942
    %5967 = vmatprep.subr.bf16.mxu0 0
    %5968 = vmatpush1.bf16.msra.mxu0 0
    %5969 = vmatprep.subr.bf16.mxu0 0
    %5970 = vmatpush1.bf16.msra.mxu0 0
    %5971 = vmatprep.subr.bf16.mxu0 0
    %5972 = vmatpush1.bf16.msra.mxu0 0
    %5973 = vmatprep.subr.bf16.mxu0 0
    %5974 = vmatpush1.bf16.msra.mxu0 0
    %5975 = vmatprep.subr.bf16.mxu0 0
    %5976 = vmatpush1.bf16.msra.mxu0 0
    %5977 = vmatprep.subr.bf16.mxu0 0
    %5978 = vmatpush1.bf16.msra.mxu0 0
    %5979 = vmatprep.subr.bf16.mxu0 0
    %5980 = vmatpush1.bf16.msra.mxu0 0
    %5981 = vmatprep.subr.bf16.mxu0 0
    %5982 = vmatpush1.bf16.msra.mxu0 0
    %5983 = vmatprep.mubr.bf16.mxu0 0
    %5984 = vmatmul.mubr.bf16.gmra.mrb[0].mxu0 %v5885
    %v5985 = vpop.f32.mrb[0].mxu0
    %v5986 = vadd.f32 0.0, %v5985
    %v5987 = vpop.f32.mrb[0].mxu0
    %v5988 = vpop.f32.mrb[0].mxu0
    %v5989 = vpop.f32.mrb[0].mxu0
    %5990 = vdwg.mxu0
    %vm5991 = vcmask 33792
    %5992 = vst.msk [vmem:[#allocation2] sm:$0x3] %vm5991, %v5986
    // Predicated region
    $region54: #{discriminator_y_forward.1} parent=1 // pred_check
      _
    $region55: #{discriminator_y_forward.1} parent=1 // pred_check_branch
      %5994 = sbr.rel (0) target = $region57
    $region56: #{discriminator_y_forward.1} parent=1 // pred_region
      _
    $region57: #{discriminator_y_forward.1} parent=1 // pred_fallthru
      _
    // Predicated region
    $region58: #{discriminator_y_forward.1} parent=1 // pred_check
      _
    $region59: #{discriminator_y_forward.1} parent=1 // pred_check_branch
      %5996 = sbr.rel (0) target = $region61
    $region60: #{discriminator_y_forward.1} parent=1 // pred_region
      %s5998 = ssub.s32 32, 32
      %5999 = vsyncadd [#allocation3], %s5998
      %s6001 = sshll.u32 [#allocation2], 4
      %s6002 = int_to_ptr.vmem [resolvable:$true] %s6001
      %6004 = dma.vmem_to_hbm [thread:$0]  %s6002, 32, %s14, [#allocation3]
    $region61: #{discriminator_y_forward.1} parent=1 // pred_fallthru
      _
    // Predicated region
    $region62: #{discriminator_y_forward.1} parent=1 // pred_check
      _
    $region63: #{discriminator_y_forward.1} parent=1 // pred_check_branch
      %6006 = sbr.rel (0) target = $region65
    $region64: #{discriminator_y_forward.1} parent=1 // pred_region
      _
    $region65: #{discriminator_y_forward.1} parent=1 // pred_fallthru
      _
    // Predicated region
    $region66: #{discriminator_y_forward.1} parent=1 // pred_check
      _
    $region67: #{discriminator_y_forward.1} parent=1 // pred_check_branch
      %6008 = sbr.rel (0) target = $region69
    $region68: #{discriminator_y_forward.1} parent=1 // pred_region
      %6009 = dma.done [#allocation3], 32
    $region69: #{discriminator_y_forward.1} parent=1 // pred_fallthru
      _
    %6010 = vsyncpa [#allocation3], 1

</llo_original>
